<compile_context>
chip_gen: v7x
topology: tpu7x:2x2x1
jax: 0.10.0
libtpu: 0.0.40
codegen_flags: <defaults>
</compile_context>

<pallas_src>
import functools
import numpy as np
import jax
import jax.numpy as jnp
from jax.experimental import pallas as pl
from jax.experimental.pallas import tpu as pltpu

EMB_DIM = 64      # w2v embedding_dim (multiple of 8, as the module's MHA requires)
BERT_DIM = 768    # DeBERTa hidden size consumed by bert_encoder
VOCAB = 512
LN_EPS = 1e-5

# Row layout of the packed (VEC_ROWS, 768) f32 bias/gamma/beta block.
ROW_POOL_B = 0
ROW_W2V_B, ROW_W2V_G, ROW_W2V_BETA = 1, 2, 3
ROW_BERT_B, ROW_BERT_G, ROW_BERT_BETA = 4, 5, 6
ROW_C1_B, ROW_C1_G, ROW_C1_BETA = 7, 8, 9
ROW_C2_B, ROW_C2_G, ROW_C2_BETA = 10, 11, 12
ROW_C3_B = 13
VEC_ROWS = 16     # padded to a sublane multiple


def _round_up(x, m):
    return (x + m - 1) // m * m


def _cdiv(a, b):
    return (a + b - 1) // b


def _bf16_transcendental_ok():
    # bf16 EUP/VPU path exists on v6e/v7x; v5e and older have no bf16 transcendental path.
    # Default to the always-correct f32 path when the device kind can't be identified.
    try:
        kind = jax.devices()[0].device_kind.lower()
    except Exception:
        return False
    return ("v6" in kind) or ("v7" in kind)


# ------------------------------- kernel ------------------------------------

def _hybrid_kernel(pooled_ref, emb_ref, vecs_ref,
                   pool_w_ref, w2v_w_ref, bert_w_ref,
                   c1_wa_ref, c1_wb_ref, c2_w_ref, c3_w_ref,
                   out_ref, *, bf16_eup):
    def vec(row, width):
        # static slice of the packed bias/gamma/beta block -> (1, width) f32
        return vecs_ref[row:row + 1, :width]

    def mm(x, w_ref):
        # bf16 MXU matmul, f32 accumulation
        return jnp.dot(x.astype(jnp.bfloat16), w_ref[...],
                       preferred_element_type=jnp.float32)

    def tanh(x):
        # bf16 tanh on v6e/v7x (bf16 EUP ~2x f32); f32 elsewhere.
        if bf16_eup:
            return jnp.tanh(x.astype(jnp.bfloat16)).astype(jnp.float32)
        return jnp.tanh(x)

    def layer_norm(x, g_row, b_row, width):
        mu = jnp.mean(x, axis=-1, keepdims=True)
        xc = x - mu                                     # centered value computed once
        var = jnp.mean(xc * xc, axis=-1, keepdims=True)
        return xc * jax.lax.rsqrt(var + LN_EPS) * vec(g_row, width) + vec(b_row, width)

    def gelu(x):
        # tanh-form GELU (EUP slot); matches nn.GELU() well within test tolerance
        c = 0.7978845608028654  # sqrt(2/pi)
        return 0.5 * x * (1.0 + tanh(c * (x + 0.044715 * x * x * x)))

    # --- synthetic DeBERTa pooler fused in: bert_cls = tanh(pooled @ pool_w + pool_b)
    bert_cls = tanh(mm(pooled_ref[...], pool_w_ref) + vec(ROW_POOL_B, BERT_DIM))

    # --- bert branch: Linear(768,256) + LayerNorm + GELU (dropout = identity)
    bert_enc = gelu(layer_norm(mm(bert_cls, bert_w_ref) + vec(ROW_BERT_B, 256),
                               ROW_BERT_G, ROW_BERT_BETA, 256))

    # --- w2v branch: length-1 MHA (softmax == 1) + out_proj + encoder Linear,
    #     all pre-folded into one (64,256) matmul + bias, then LayerNorm + GELU.
    w2v_enc = gelu(layer_norm(mm(emb_ref[...], w2v_w_ref) + vec(ROW_W2V_B, 256),
                              ROW_W2V_G, ROW_W2V_BETA, 256))

    # --- classifier: concat([bert_enc, w2v_enc]) @ W1 computed as a split matmul
    h = mm(bert_enc, c1_wa_ref) + mm(w2v_enc, c1_wb_ref) + vec(ROW_C1_B, 256)
    h = gelu(layer_norm(h, ROW_C1_G, ROW_C1_BETA, 256))
    h = gelu(layer_norm(mm(h, c2_w_ref) + vec(ROW_C2_B, 128),
                        ROW_C2_G, ROW_C2_BETA, 128))

    # --- final Linear(128,1), zero-padded to 128 output lanes for an unmasked,
    #     lane-dense bf16 store; the wrapper slices column 0.
    out_ref[...] = (mm(h, c3_w_ref) + vec(ROW_C3_B, 128)).astype(out_ref.dtype)


# ------------------------------- wrapper ------------------------------------

def _choose_bb(B, block_b):
    """Batch-tile policy (perf feedback):
      * multiple of 16 (bf16 sublane pack / minimum bf16 tile),
      * tiny batches (<=32 rows) run as one step,
      * otherwise round_up(cdiv(B,2),16) so the "parallel" axis yields >=2 grid steps
        (v7x dual TensorCore) without padding B up to a full default tile,
      * capped at block_b (default 512) for large B to amortize per-step overhead
        while keeping the MXU M-dim at/above its height."""
    b16 = _round_up(max(B, 1), 16)
    cap = max(16, _round_up(min(block_b, 1024), 16))
    if b16 <= 32:
        return min(b16, cap) if cap >= b16 else b16
    return max(16, min(cap, _round_up(_cdiv(b16, 2), 16)))


def hybrid_forward_pallas(pooled, embeddings, kp, *, block_b=512):
    """pooled: (B, 768) f32 stand-in backbone feature; embeddings: (B, 64) f32."""
    B = pooled.shape[0]
    bb = _choose_bb(B, block_b)
    b_pad = _round_up(B, bb)

    def pad_rows(x):
        return jnp.pad(x, ((0, b_pad - B), (0, 0))) if b_pad != B else x

    pooled_b = pad_rows(pooled).astype(jnp.bfloat16)
    emb_b = pad_rows(embeddings).astype(jnp.bfloat16)

    weights = [kp["pool_w"], kp["w2v_w"], kp["bert_w"],
               kp["c1_wa"], kp["c1_wb"], kp["c2_w"], kp["c3_w"]]

    row_map = lambda i: (i, 0)       # activation tiles march over the batch
    const_map = lambda i: (0, 0)     # weights stay VMEM-resident across the grid

    in_specs = ([pl.BlockSpec((bb, BERT_DIM), row_map),
                 pl.BlockSpec((bb, EMB_DIM), row_map),
                 pl.BlockSpec(kp["vecs"].shape, const_map)]
                + [pl.BlockSpec(w.shape, const_map) for w in weights])

    kernel = functools.partial(_hybrid_kernel, bf16_eup=_bf16_transcendental_ok())

    out = pl.pallas_call(
        kernel,
        out_shape=jax.ShapeDtypeStruct((b_pad, 128), jnp.bfloat16),
        grid=(b_pad // bb,),
        in_specs=in_specs,
        out_specs=pl.BlockSpec((bb, 128), row_map),
        compiler_params=pltpu.CompilerParams(
            # batch axis is independent -> shards across v7x's two TensorCores;
            # resident weights + double-buffered activation tiles stay in the single-digit
            # MB range even at bb=1024, far under every generation's VMEM budget.
            dimension_semantics=("parallel",)),
    )(pooled_b, emb_b, kp["vecs"], *weights)

    return out[:B, :1].astype(jnp.float32)


# ----------------------------- parameters ---------------------------------

def init_params(key):
    raw = {}
    key_box = [key]

    def take():
        key_box[0], sub = jax.random.split(key_box[0])
        return sub

    def dense(fan_in, fan_out):
        lim = 1.0 / np.sqrt(fan_in)
        w = jax.random.uniform(take(), (fan_in, fan_out), jnp.float32, -lim, lim)
        b = jax.random.uniform(take(), (1, fan_out), jnp.float32, -lim, lim)
        return w, b

    # MultiheadAttention(embed_dim=64, 8 heads): with a length-1 sequence only the
    # V projection and out_proj affect the output.
    raw["wv"], raw["bv"] = dense(EMB_DIM, EMB_DIM)
    raw["wo"], raw["bo"] = dense(EMB_DIM, EMB_DIM)
    # w2v_encoder: Linear(64, 256) + LayerNorm(256)
    raw["w2v_w"], raw["w2v_b"] = dense(EMB_DIM, 256)
    raw["w2v_g"], raw["w2v_beta"] = jnp.ones((1, 256), jnp.float32), jnp.zeros((1, 256), jnp.float32)
    # bert_encoder: Linear(768, 256) + LayerNorm(256)
    raw["bert_w"], raw["bert_b"] = dense(BERT_DIM, 256)
    raw["bert_g"], raw["bert_beta"] = jnp.ones((1, 256), jnp.float32), jnp.zeros((1, 256), jnp.float32)
    # classifier
    raw["c1_w"], raw["c1_b"] = dense(512, 256)
    raw["c1_g"], raw["c1_beta"] = jnp.ones((1, 256), jnp.float32), jnp.zeros((1, 256), jnp.float32)
    raw["c2_w"], raw["c2_b"] = dense(256, 128)
    raw["c2_g"], raw["c2_beta"] = jnp.ones((1, 128), jnp.float32), jnp.zeros((1, 128), jnp.float32)
    raw["c3_w"], raw["c3_b"] = dense(128, 1)
    # synthetic DeBERTa stand-in parameters
    raw["tok_emb"] = 0.02 * jax.random.normal(take(), (VOCAB, BERT_DIM), jnp.float32)
    raw["pool_w"], raw["pool_b"] = dense(BERT_DIM, BERT_DIM)
    return raw


def _pack_vecs(entries):
    vecs = jnp.zeros((VEC_ROWS, BERT_DIM), jnp.float32)
    for row, v in entries:
        v = jnp.asarray(v, jnp.float32).reshape(-1)
        vecs = vecs.at[row, : v.shape[0]].set(v)
    return vecs


def prepare_kernel_params(raw):
    """Fold, pad, pack and cast the raw f32 params into kernel operands."""
    # Fold length-1 attention (v_proj -> out_proj) + w2v_encoder Linear into one matmul:
    #   x @ Wf + bf  ==  ((x @ wv + bv) @ wo + bo) @ w2v_w + w2v_b
    w_fused = raw["wv"] @ raw["wo"] @ raw["w2v_w"]                                   # (64, 256)
    b_fused = (raw["bv"] @ raw["wo"] + raw["bo"]) @ raw["w2v_w"] + raw["w2v_b"]      # (1, 256)

    # Zero-pad the final Linear(128,1) to a lane-dense (128,128) projection.
    c3_w_pad = jnp.zeros((128, 128), jnp.float32).at[:, :1].set(raw["c3_w"])
    c3_b_pad = jnp.zeros((1, 128), jnp.float32).at[:, :1].set(raw["c3_b"])

    bf16 = lambda x: x.astype(jnp.bfloat16)
    kp = {
        "pool_w": bf16(raw["pool_w"]),
        "w2v_w": bf16(w_fused),
        "bert_w": bf16(raw["bert_w"]),
        "c1_wa": bf16(raw["c1_w"][:256]),   # multiplies bert_enc (first half of concat)
        "c1_wb": bf16(raw["c1_w"][256:]),   # multiplies w2v_enc (second half of concat)
        "c2_w": bf16(raw["c2_w"]),
        "c3_w": bf16(c3_w_pad),
        "vecs": _pack_vecs([
            (ROW_POOL_B, raw["pool_b"]),
            (ROW_W2V_B, b_fused), (ROW_W2V_G, raw["w2v_g"]), (ROW_W2V_BETA, raw["w2v_beta"]),
            (ROW_BERT_B, raw["bert_b"]), (ROW_BERT_G, raw["bert_g"]), (ROW_BERT_BETA, raw["bert_beta"]),
            (ROW_C1_B, raw["c1_b"]), (ROW_C1_G, raw["c1_g"]), (ROW_C1_BETA, raw["c1_beta"]),
            (ROW_C2_B, raw["c2_b"]), (ROW_C2_G, raw["c2_g"]), (ROW_C2_BETA, raw["c2_beta"]),
            (ROW_C3_B, c3_b_pad),
        ]),
    }
    return kp


# --------------------------- reference / glue ------------------------------

def synthetic_pooled(input_ids, attention_mask, raw):
    # TODO(synk): the pretrained DeBERTa-v3 backbone (self.bert) cannot be reproduced
    # in-script; this deterministic stand-in (token-embedding lookup + masked mean pool)
    # produces the (B, 768) feature whose pooler projection + tanh IS fused into the kernel.
    x = raw["tok_emb"][input_ids]                              # (B, S, 768)
    m = attention_mask[..., None].astype(jnp.float32)          # (B, S, 1)
    return (x * m).sum(axis=1) / jnp.maximum(m.sum(axis=1), 1.0)


def reference_forward(pooled, embeddings, raw):
    # pure-JAX f32 reference of the same math (exact erf-based GELU)
    def gelu(x):
        return jax.nn.gelu(x, approximate=False)

    def ln(x, g, b):
        mu = x.mean(-1, keepdims=True)
        var = ((x - mu) ** 2).mean(-1, keepdims=True)
        return (x - mu) / jnp.sqrt(var + LN_EPS) * g + b

    bert_cls = jnp.tanh(pooled @ raw["pool_w"] + raw["pool_b"])
    bert_enc = gelu(ln(bert_cls @ raw["bert_w"] + raw["bert_b"], raw["bert_g"], raw["bert_beta"]))
    v = embeddings @ raw["wv"] + raw["bv"]
    att = v @ raw["wo"] + raw["bo"]
    w2v_enc = gelu(ln(att @ raw["w2v_w"] + raw["w2v_b"], raw["w2v_g"], raw["w2v_beta"]))
    combined = jnp.concatenate([bert_enc, w2v_enc], axis=-1)
    h = gelu(ln(combined @ raw["c1_w"] + raw["c1_b"], raw["c1_g"], raw["c1_beta"]))
    h = gelu(ln(h @ raw["c2_w"] + raw["c2_b"], raw["c2_g"], raw["c2_beta"]))
    return h @ raw["c3_w"] + raw["c3_b"]


if __name__ == "__main__":
    B, S = 48, 16
    key = jax.random.PRNGKey(0)
    k_ids, k_mask, k_emb, k_params = jax.random.split(key, 4)
    raw = init_params(k_params)
    kp = prepare_kernel_params(raw)

    input_ids = jax.random.randint(k_ids, (B, S), 0, VOCAB, dtype=jnp.int32)
    lengths = jax.random.randint(k_mask, (B,), 4, S + 1)
    attention_mask = (jnp.arange(S)[None, :] < lengths[:, None]).astype(jnp.int32)
    embeddings = jax.random.normal(k_emb, (B, EMB_DIM), jnp.float32)

    pooled = synthetic_pooled(input_ids, attention_mask, raw)     # (B, 768) glue
    # default tile policy: B=48 -> bb=32, 2 grid steps (exercises the multi-step
    # "parallel" batch grid, i.e. both TensorCores on v7x)
    logits = hybrid_forward_pallas(pooled, embeddings, kp)        # Pallas kernel
    logits = jax.block_until_ready(logits)

    ref = reference_forward(pooled, embeddings, raw)
    # tolerance covers bf16 matmul weights/activations, bf16 output store,
    # and tanh-form GELU vs exact erf GELU
    np.testing.assert_allclose(np.asarray(logits), np.asarray(ref), rtol=3e-2, atol=3e-2)
    assert logits.shape == (B, 1)
    print("KERNEL_OK")
</pallas_src>

<mosaic_0001>
module attributes {stable_mosaic.version = 11 : i64} {
  func.func @_hybrid_kernel(%arg0: i32, %arg1: memref<32x768xbf16, #tpu.memory_space<vmem>>, %arg2: memref<32x64xbf16, #tpu.memory_space<vmem>>, %arg3: memref<16x768xf32, #tpu.memory_space<vmem>>, %arg4: memref<768x768xbf16, #tpu.memory_space<vmem>>, %arg5: memref<64x256xbf16, #tpu.memory_space<vmem>>, %arg6: memref<768x256xbf16, #tpu.memory_space<vmem>>, %arg7: memref<256x256xbf16, #tpu.memory_space<vmem>>, %arg8: memref<256x256xbf16, #tpu.memory_space<vmem>>, %arg9: memref<256x128xbf16, #tpu.memory_space<vmem>>, %arg10: memref<128x128xbf16, #tpu.memory_space<vmem>>, %arg11: memref<32x128xbf16, #tpu.memory_space<vmem>>) attributes {dimension_semantics = [#tpu.dimension_semantics<parallel>], iteration_bounds = array<i64: 2>, scalar_prefetch = 0 : i64, scratch_operands = 0 : i64, tpu.core_type = #tpu.core_type<tc>, window_params = [{transform_indices = @transform_0, window_bounds = array<i64: 32, 768>}, {transform_indices = @transform_1, window_bounds = array<i64: 32, 64>}, {pipeline_mode = #tpu.pipeline_mode<synchronous>, transform_indices = @transform_2, window_bounds = array<i64: 16, 768>}, {pipeline_mode = #tpu.pipeline_mode<synchronous>, transform_indices = @transform_3, window_bounds = array<i64: 768, 768>}, {pipeline_mode = #tpu.pipeline_mode<synchronous>, transform_indices = @transform_4, window_bounds = array<i64: 64, 256>}, {pipeline_mode = #tpu.pipeline_mode<synchronous>, transform_indices = @transform_5, window_bounds = array<i64: 768, 256>}, {pipeline_mode = #tpu.pipeline_mode<synchronous>, transform_indices = @transform_6, window_bounds = array<i64: 256, 256>}, {pipeline_mode = #tpu.pipeline_mode<synchronous>, transform_indices = @transform_7, window_bounds = array<i64: 256, 256>}, {pipeline_mode = #tpu.pipeline_mode<synchronous>, transform_indices = @transform_8, window_bounds = array<i64: 256, 128>}, {pipeline_mode = #tpu.pipeline_mode<synchronous>, transform_indices = @transform_9, window_bounds = array<i64: 128, 128>}, {transform_indices = @transform_10, window_bounds = array<i64: 32, 128>}]} {
    %c0 = arith.constant 0 : index
    %c0_0 = arith.constant 0 : index
    %0 = vector.load %arg1[%c0, %c0_0] : memref<32x768xbf16, #tpu.memory_space<vmem>>, vector<32x768xbf16>
    %c0_1 = arith.constant 0 : index
    %c0_2 = arith.constant 0 : index
    %1 = vector.load %arg4[%c0_1, %c0_2] : memref<768x768xbf16, #tpu.memory_space<vmem>>, vector<768x768xbf16>
    %cst = arith.constant dense<0.000000e+00> : vector<32x768xf32>
    %2 = tpu.matmul %0, %1, %cst {dimension_numbers = #tpu.dot_dimension_numbers<[1], [0], [0], [1], [0, 0, 1, 1], [], []>} : vector<32x768xbf16>, vector<768x768xbf16>, vector<32x768xf32> -> vector<32x768xf32>
    %c0_3 = arith.constant 0 : index
    %c0_4 = arith.constant 0 : index
    %3 = vector.load %arg3[%c0_3, %c0_4] : memref<16x768xf32, #tpu.memory_space<vmem>>, vector<1x768xf32>
    %4 = vector.broadcast %3 : vector<1x768xf32> to vector<32x768xf32>
    %5 = arith.addf %2, %4 : vector<32x768xf32>
    %6 = math.tanh %5 : vector<32x768xf32>
    %7 = arith.truncf %6 : vector<32x768xf32> to vector<32x768xbf16>
    %c0_5 = arith.constant 0 : index
    %c0_6 = arith.constant 0 : index
    %8 = vector.load %arg6[%c0_5, %c0_6] : memref<768x256xbf16, #tpu.memory_space<vmem>>, vector<768x256xbf16>
    %cst_7 = arith.constant dense<0.000000e+00> : vector<32x256xf32>
    %9 = tpu.matmul %7, %8, %cst_7 {dimension_numbers = #tpu.dot_dimension_numbers<[1], [0], [0], [1], [0, 0, 1, 1], [], []>} : vector<32x768xbf16>, vector<768x256xbf16>, vector<32x256xf32> -> vector<32x256xf32>
    %c4 = arith.constant 4 : index
    %c0_8 = arith.constant 0 : index
    %10 = vector.load %arg3[%c4, %c0_8] : memref<16x768xf32, #tpu.memory_space<vmem>>, vector<1x256xf32>
    %11 = vector.broadcast %10 : vector<1x256xf32> to vector<32x256xf32>
    %12 = arith.addf %9, %11 : vector<32x256xf32>
    %cst_9 = arith.constant dense<0.000000e+00> : vector<32xf32>
    %13 = vector.multi_reduction <add>, %12, %cst_9 [1] : vector<32x256xf32> to vector<32xf32>
    %14 = vector.shape_cast %13 : vector<32xf32> to vector<32x1xf32>
    %cst_10 = arith.constant 2.560000e+02 : f32
    %15 = vector.broadcast %cst_10 : f32 to vector<32x1xf32>
    %16 = arith.divf %14, %15 : vector<32x1xf32>
    %17 = vector.broadcast %16 : vector<32x1xf32> to vector<32x256xf32>
    %18 = arith.subf %12, %17 : vector<32x256xf32>
    %19 = arith.mulf %18, %18 : vector<32x256xf32>
    %cst_11 = arith.constant dense<0.000000e+00> : vector<32xf32>
    %20 = vector.multi_reduction <add>, %19, %cst_11 [1] : vector<32x256xf32> to vector<32xf32>
    %21 = vector.shape_cast %20 : vector<32xf32> to vector<32x1xf32>
    %cst_12 = arith.constant 2.560000e+02 : f32
    %22 = vector.broadcast %cst_12 : f32 to vector<32x1xf32>
    %23 = arith.divf %21, %22 : vector<32x1xf32>
    %cst_13 = arith.constant 9.99999974E-6 : f32
    %24 = vector.broadcast %cst_13 : f32 to vector<32x1xf32>
    %25 = arith.addf %23, %24 : vector<32x1xf32>
    %26 = math.rsqrt %25 : vector<32x1xf32>
    %27 = vector.broadcast %26 : vector<32x1xf32> to vector<32x256xf32>
    %28 = arith.mulf %18, %27 : vector<32x256xf32>
    %c5 = arith.constant 5 : index
    %c0_14 = arith.constant 0 : index
    %29 = vector.load %arg3[%c5, %c0_14] : memref<16x768xf32, #tpu.memory_space<vmem>>, vector<1x256xf32>
    %30 = vector.broadcast %29 : vector<1x256xf32> to vector<32x256xf32>
    %31 = arith.mulf %28, %30 : vector<32x256xf32>
    %c6 = arith.constant 6 : index
    %c0_15 = arith.constant 0 : index
    %32 = vector.load %arg3[%c6, %c0_15] : memref<16x768xf32, #tpu.memory_space<vmem>>, vector<1x256xf32>
    %33 = vector.broadcast %32 : vector<1x256xf32> to vector<32x256xf32>
    %34 = arith.addf %31, %33 : vector<32x256xf32>
    %cst_16 = arith.constant 5.000000e-01 : f32
    %35 = vector.broadcast %cst_16 : f32 to vector<32x256xf32>
    %36 = arith.mulf %35, %34 : vector<32x256xf32>
    %cst_17 = arith.constant 4.471500e-02 : f32
    %37 = vector.broadcast %cst_17 : f32 to vector<32x256xf32>
    %38 = arith.mulf %37, %34 : vector<32x256xf32>
    %39 = arith.mulf %38, %34 : vector<32x256xf32>
    %40 = arith.mulf %39, %34 : vector<32x256xf32>
    %41 = arith.addf %34, %40 : vector<32x256xf32>
    %cst_18 = arith.constant 0.797884583 : f32
    %42 = vector.broadcast %cst_18 : f32 to vector<32x256xf32>
    %43 = arith.mulf %42, %41 : vector<32x256xf32>
    %44 = math.tanh %43 : vector<32x256xf32>
    %cst_19 = arith.constant 1.000000e+00 : f32
    %45 = vector.broadcast %cst_19 : f32 to vector<32x256xf32>
    %46 = arith.addf %45, %44 : vector<32x256xf32>
    %47 = arith.mulf %36, %46 : vector<32x256xf32>
    %c0_20 = arith.constant 0 : index
    %c0_21 = arith.constant 0 : index
    %48 = vector.load %arg2[%c0_20, %c0_21] : memref<32x64xbf16, #tpu.memory_space<vmem>>, vector<32x64xbf16>
    %c0_22 = arith.constant 0 : index
    %c0_23 = arith.constant 0 : index
    %49 = vector.load %arg5[%c0_22, %c0_23] : memref<64x256xbf16, #tpu.memory_space<vmem>>, vector<64x256xbf16>
    %cst_24 = arith.constant dense<0.000000e+00> : vector<32x256xf32>
    %50 = tpu.matmul %48, %49, %cst_24 {dimension_numbers = #tpu.dot_dimension_numbers<[1], [0], [0], [1], [0, 0, 1, 1], [], []>} : vector<32x64xbf16>, vector<64x256xbf16>, vector<32x256xf32> -> vector<32x256xf32>
    %c1 = arith.constant 1 : index
    %c0_25 = arith.constant 0 : index
    %51 = vector.load %arg3[%c1, %c0_25] : memref<16x768xf32, #tpu.memory_space<vmem>>, vector<1x256xf32>
    %52 = vector.broadcast %51 : vector<1x256xf32> to vector<32x256xf32>
    %53 = arith.addf %50, %52 : vector<32x256xf32>
    %cst_26 = arith.constant dense<0.000000e+00> : vector<32xf32>
    %54 = vector.multi_reduction <add>, %53, %cst_26 [1] : vector<32x256xf32> to vector<32xf32>
    %55 = vector.shape_cast %54 : vector<32xf32> to vector<32x1xf32>
    %cst_27 = arith.constant 2.560000e+02 : f32
    %56 = vector.broadcast %cst_27 : f32 to vector<32x1xf32>
    %57 = arith.divf %55, %56 : vector<32x1xf32>
    %58 = vector.broadcast %57 : vector<32x1xf32> to vector<32x256xf32>
    %59 = arith.subf %53, %58 : vector<32x256xf32>
    %60 = arith.mulf %59, %59 : vector<32x256xf32>
    %cst_28 = arith.constant dense<0.000000e+00> : vector<32xf32>
    %61 = vector.multi_reduction <add>, %60, %cst_28 [1] : vector<32x256xf32> to vector<32xf32>
    %62 = vector.shape_cast %61 : vector<32xf32> to vector<32x1xf32>
    %cst_29 = arith.constant 2.560000e+02 : f32
    %63 = vector.broadcast %cst_29 : f32 to vector<32x1xf32>
    %64 = arith.divf %62, %63 : vector<32x1xf32>
    %cst_30 = arith.constant 9.99999974E-6 : f32
    %65 = vector.broadcast %cst_30 : f32 to vector<32x1xf32>
    %66 = arith.addf %64, %65 : vector<32x1xf32>
    %67 = math.rsqrt %66 : vector<32x1xf32>
    %68 = vector.broadcast %67 : vector<32x1xf32> to vector<32x256xf32>
    %69 = arith.mulf %59, %68 : vector<32x256xf32>
    %c2 = arith.constant 2 : index
    %c0_31 = arith.constant 0 : index
    %70 = vector.load %arg3[%c2, %c0_31] : memref<16x768xf32, #tpu.memory_space<vmem>>, vector<1x256xf32>
    %71 = vector.broadcast %70 : vector<1x256xf32> to vector<32x256xf32>
    %72 = arith.mulf %69, %71 : vector<32x256xf32>
    %c3 = arith.constant 3 : index
    %c0_32 = arith.constant 0 : index
    %73 = vector.load %arg3[%c3, %c0_32] : memref<16x768xf32, #tpu.memory_space<vmem>>, vector<1x256xf32>
    %74 = vector.broadcast %73 : vector<1x256xf32> to vector<32x256xf32>
    %75 = arith.addf %72, %74 : vector<32x256xf32>
    %cst_33 = arith.constant 5.000000e-01 : f32
    %76 = vector.broadcast %cst_33 : f32 to vector<32x256xf32>
    %77 = arith.mulf %76, %75 : vector<32x256xf32>
    %cst_34 = arith.constant 4.471500e-02 : f32
    %78 = vector.broadcast %cst_34 : f32 to vector<32x256xf32>
    %79 = arith.mulf %78, %75 : vector<32x256xf32>
    %80 = arith.mulf %79, %75 : vector<32x256xf32>
    %81 = arith.mulf %80, %75 : vector<32x256xf32>
    %82 = arith.addf %75, %81 : vector<32x256xf32>
    %cst_35 = arith.constant 0.797884583 : f32
    %83 = vector.broadcast %cst_35 : f32 to vector<32x256xf32>
    %84 = arith.mulf %83, %82 : vector<32x256xf32>
    %85 = math.tanh %84 : vector<32x256xf32>
    %cst_36 = arith.constant 1.000000e+00 : f32
    %86 = vector.broadcast %cst_36 : f32 to vector<32x256xf32>
    %87 = arith.addf %86, %85 : vector<32x256xf32>
    %88 = arith.mulf %77, %87 : vector<32x256xf32>
    %89 = arith.truncf %47 : vector<32x256xf32> to vector<32x256xbf16>
    %c0_37 = arith.constant 0 : index
    %c0_38 = arith.constant 0 : index
    %90 = vector.load %arg7[%c0_37, %c0_38] : memref<256x256xbf16, #tpu.memory_space<vmem>>, vector<256x256xbf16>
    %cst_39 = arith.constant dense<0.000000e+00> : vector<32x256xf32>
    %91 = tpu.matmul %89, %90, %cst_39 {dimension_numbers = #tpu.dot_dimension_numbers<[1], [0], [0], [1], [0, 0, 1, 1], [], []>} : vector<32x256xbf16>, vector<256x256xbf16>, vector<32x256xf32> -> vector<32x256xf32>
    %92 = arith.truncf %88 : vector<32x256xf32> to vector<32x256xbf16>
    %c0_40 = arith.constant 0 : index
    %c0_41 = arith.constant 0 : index
    %93 = vector.load %arg8[%c0_40, %c0_41] : memref<256x256xbf16, #tpu.memory_space<vmem>>, vector<256x256xbf16>
    %cst_42 = arith.constant dense<0.000000e+00> : vector<32x256xf32>
    %94 = tpu.matmul %92, %93, %cst_42 {dimension_numbers = #tpu.dot_dimension_numbers<[1], [0], [0], [1], [0, 0, 1, 1], [], []>} : vector<32x256xbf16>, vector<256x256xbf16>, vector<32x256xf32> -> vector<32x256xf32>
    %95 = arith.addf %91, %94 : vector<32x256xf32>
    %c7 = arith.constant 7 : index
    %c0_43 = arith.constant 0 : index
    %96 = vector.load %arg3[%c7, %c0_43] : memref<16x768xf32, #tpu.memory_space<vmem>>, vector<1x256xf32>
    %97 = vector.broadcast %96 : vector<1x256xf32> to vector<32x256xf32>
    %98 = arith.addf %95, %97 : vector<32x256xf32>
    %cst_44 = arith.constant dense<0.000000e+00> : vector<32xf32>
    %99 = vector.multi_reduction <add>, %98, %cst_44 [1] : vector<32x256xf32> to vector<32xf32>
    %100 = vector.shape_cast %99 : vector<32xf32> to vector<32x1xf32>
    %cst_45 = arith.constant 2.560000e+02 : f32
    %101 = vector.broadcast %cst_45 : f32 to vector<32x1xf32>
    %102 = arith.divf %100, %101 : vector<32x1xf32>
    %103 = vector.broadcast %102 : vector<32x1xf32> to vector<32x256xf32>
    %104 = arith.subf %98, %103 : vector<32x256xf32>
    %105 = arith.mulf %104, %104 : vector<32x256xf32>
    %cst_46 = arith.constant dense<0.000000e+00> : vector<32xf32>
    %106 = vector.multi_reduction <add>, %105, %cst_46 [1] : vector<32x256xf32> to vector<32xf32>
    %107 = vector.shape_cast %106 : vector<32xf32> to vector<32x1xf32>
    %cst_47 = arith.constant 2.560000e+02 : f32
    %108 = vector.broadcast %cst_47 : f32 to vector<32x1xf32>
    %109 = arith.divf %107, %108 : vector<32x1xf32>
    %cst_48 = arith.constant 9.99999974E-6 : f32
    %110 = vector.broadcast %cst_48 : f32 to vector<32x1xf32>
    %111 = arith.addf %109, %110 : vector<32x1xf32>
    %112 = math.rsqrt %111 : vector<32x1xf32>
    %113 = vector.broadcast %112 : vector<32x1xf32> to vector<32x256xf32>
    %114 = arith.mulf %104, %113 : vector<32x256xf32>
    %c8 = arith.constant 8 : index
    %c0_49 = arith.constant 0 : index
    %115 = vector.load %arg3[%c8, %c0_49] : memref<16x768xf32, #tpu.memory_space<vmem>>, vector<1x256xf32>
    %116 = vector.broadcast %115 : vector<1x256xf32> to vector<32x256xf32>
    %117 = arith.mulf %114, %116 : vector<32x256xf32>
    %c9 = arith.constant 9 : index
    %c0_50 = arith.constant 0 : index
    %118 = vector.load %arg3[%c9, %c0_50] : memref<16x768xf32, #tpu.memory_space<vmem>>, vector<1x256xf32>
    %119 = vector.broadcast %118 : vector<1x256xf32> to vector<32x256xf32>
    %120 = arith.addf %117, %119 : vector<32x256xf32>
    %cst_51 = arith.constant 5.000000e-01 : f32
    %121 = vector.broadcast %cst_51 : f32 to vector<32x256xf32>
    %122 = arith.mulf %121, %120 : vector<32x256xf32>
    %cst_52 = arith.constant 4.471500e-02 : f32
    %123 = vector.broadcast %cst_52 : f32 to vector<32x256xf32>
    %124 = arith.mulf %123, %120 : vector<32x256xf32>
    %125 = arith.mulf %124, %120 : vector<32x256xf32>
    %126 = arith.mulf %125, %120 : vector<32x256xf32>
    %127 = arith.addf %120, %126 : vector<32x256xf32>
    %cst_53 = arith.constant 0.797884583 : f32
    %128 = vector.broadcast %cst_53 : f32 to vector<32x256xf32>
    %129 = arith.mulf %128, %127 : vector<32x256xf32>
    %130 = math.tanh %129 : vector<32x256xf32>
    %cst_54 = arith.constant 1.000000e+00 : f32
    %131 = vector.broadcast %cst_54 : f32 to vector<32x256xf32>
    %132 = arith.addf %131, %130 : vector<32x256xf32>
    %133 = arith.mulf %122, %132 : vector<32x256xf32>
    %134 = arith.truncf %133 : vector<32x256xf32> to vector<32x256xbf16>
    %c0_55 = arith.constant 0 : index
    %c0_56 = arith.constant 0 : index
    %135 = vector.load %arg9[%c0_55, %c0_56] : memref<256x128xbf16, #tpu.memory_space<vmem>>, vector<256x128xbf16>
    %cst_57 = arith.constant dense<0.000000e+00> : vector<32x128xf32>
    %136 = tpu.matmul %134, %135, %cst_57 {dimension_numbers = #tpu.dot_dimension_numbers<[1], [0], [0], [1], [0, 0, 1, 1], [], []>} : vector<32x256xbf16>, vector<256x128xbf16>, vector<32x128xf32> -> vector<32x128xf32>
    %c10 = arith.constant 10 : index
    %c0_58 = arith.constant 0 : index
    %137 = vector.load %arg3[%c10, %c0_58] : memref<16x768xf32, #tpu.memory_space<vmem>>, vector<1x128xf32>
    %138 = vector.broadcast %137 : vector<1x128xf32> to vector<32x128xf32>
    %139 = arith.addf %136, %138 : vector<32x128xf32>
    %cst_59 = arith.constant dense<0.000000e+00> : vector<32xf32>
    %140 = vector.multi_reduction <add>, %139, %cst_59 [1] : vector<32x128xf32> to vector<32xf32>
    %141 = vector.shape_cast %140 : vector<32xf32> to vector<32x1xf32>
    %cst_60 = arith.constant 1.280000e+02 : f32
    %142 = vector.broadcast %cst_60 : f32 to vector<32x1xf32>
    %143 = arith.divf %141, %142 : vector<32x1xf32>
    %144 = vector.broadcast %143 : vector<32x1xf32> to vector<32x128xf32>
    %145 = arith.subf %139, %144 : vector<32x128xf32>
    %146 = arith.mulf %145, %145 : vector<32x128xf32>
    %cst_61 = arith.constant dense<0.000000e+00> : vector<32xf32>
    %147 = vector.multi_reduction <add>, %146, %cst_61 [1] : vector<32x128xf32> to vector<32xf32>
    %148 = vector.shape_cast %147 : vector<32xf32> to vector<32x1xf32>
    %cst_62 = arith.constant 1.280000e+02 : f32
    %149 = vector.broadcast %cst_62 : f32 to vector<32x1xf32>
    %150 = arith.divf %148, %149 : vector<32x1xf32>
    %cst_63 = arith.constant 9.99999974E-6 : f32
    %151 = vector.broadcast %cst_63 : f32 to vector<32x1xf32>
    %152 = arith.addf %150, %151 : vector<32x1xf32>
    %153 = math.rsqrt %152 : vector<32x1xf32>
    %154 = vector.broadcast %153 : vector<32x1xf32> to vector<32x128xf32>
    %155 = arith.mulf %145, %154 : vector<32x128xf32>
    %c11 = arith.constant 11 : index
    %c0_64 = arith.constant 0 : index
    %156 = vector.load %arg3[%c11, %c0_64] : memref<16x768xf32, #tpu.memory_space<vmem>>, vector<1x128xf32>
    %157 = vector.broadcast %156 : vector<1x128xf32> to vector<32x128xf32>
    %158 = arith.mulf %155, %157 : vector<32x128xf32>
    %c12 = arith.constant 12 : index
    %c0_65 = arith.constant 0 : index
    %159 = vector.load %arg3[%c12, %c0_65] : memref<16x768xf32, #tpu.memory_space<vmem>>, vector<1x128xf32>
    %160 = vector.broadcast %159 : vector<1x128xf32> to vector<32x128xf32>
    %161 = arith.addf %158, %160 : vector<32x128xf32>
    %cst_66 = arith.constant 5.000000e-01 : f32
    %162 = vector.broadcast %cst_66 : f32 to vector<32x128xf32>
    %163 = arith.mulf %162, %161 : vector<32x128xf32>
    %cst_67 = arith.constant 4.471500e-02 : f32
    %164 = vector.broadcast %cst_67 : f32 to vector<32x128xf32>
    %165 = arith.mulf %164, %161 : vector<32x128xf32>
    %166 = arith.mulf %165, %161 : vector<32x128xf32>
    %167 = arith.mulf %166, %161 : vector<32x128xf32>
    %168 = arith.addf %161, %167 : vector<32x128xf32>
    %cst_68 = arith.constant 0.797884583 : f32
    %169 = vector.broadcast %cst_68 : f32 to vector<32x128xf32>
    %170 = arith.mulf %169, %168 : vector<32x128xf32>
    %171 = math.tanh %170 : vector<32x128xf32>
    %cst_69 = arith.constant 1.000000e+00 : f32
    %172 = vector.broadcast %cst_69 : f32 to vector<32x128xf32>
    %173 = arith.addf %172, %171 : vector<32x128xf32>
    %174 = arith.mulf %163, %173 : vector<32x128xf32>
    %175 = arith.truncf %174 : vector<32x128xf32> to vector<32x128xbf16>
    %c0_70 = arith.constant 0 : index
    %c0_71 = arith.constant 0 : index
    %176 = vector.load %arg10[%c0_70, %c0_71] : memref<128x128xbf16, #tpu.memory_space<vmem>>, vector<128x128xbf16>
    %cst_72 = arith.constant dense<0.000000e+00> : vector<32x128xf32>
    %177 = tpu.matmul %175, %176, %cst_72 {dimension_numbers = #tpu.dot_dimension_numbers<[1], [0], [0], [1], [0, 0, 1, 1], [], []>} : vector<32x128xbf16>, vector<128x128xbf16>, vector<32x128xf32> -> vector<32x128xf32>
    %c13 = arith.constant 13 : index
    %c0_73 = arith.constant 0 : index
    %178 = vector.load %arg3[%c13, %c0_73] : memref<16x768xf32, #tpu.memory_space<vmem>>, vector<1x128xf32>
    %179 = vector.broadcast %178 : vector<1x128xf32> to vector<32x128xf32>
    %180 = arith.addf %177, %179 : vector<32x128xf32>
    %181 = arith.truncf %180 : vector<32x128xf32> to vector<32x128xbf16>
    %c0_74 = arith.constant 0 : index
    %c0_75 = arith.constant 0 : index
    %182 = vector.load %arg11[%c0_74, %c0_75] : memref<32x128xbf16, #tpu.memory_space<vmem>>, vector<32x128xbf16>
    tpu.vector_store %arg11[%c0_74, %c0_75], %181 {strides = array<i32>} : memref<32x128xbf16, #tpu.memory_space<vmem>>, vector<32x128xbf16>,
    return
  }
  func.func @transform_0(%arg0: i32) -> (i32, i32) {
    %c0_i32 = arith.constant 0 : i32
    %c0_i32_0 = arith.constant 0 : i32
    return %arg0, %c0_i32 : i32, i32
  }
  func.func @transform_1(%arg0: i32) -> (i32, i32) {
    %c0_i32 = arith.constant 0 : i32
    %c0_i32_0 = arith.constant 0 : i32
    return %arg0, %c0_i32 : i32, i32
  }
  func.func @transform_2(%arg0: i32) -> (i32, i32) {
    %c0_i32 = arith.constant 0 : i32
    %c0_i32_0 = arith.constant 0 : i32
    %c0_i32_1 = arith.constant 0 : i32
    return %c0_i32, %c0_i32_0 : i32, i32
  }
  func.func @transform_3(%arg0: i32) -> (i32, i32) {
    %c0_i32 = arith.constant 0 : i32
    %c0_i32_0 = arith.constant 0 : i32
    %c0_i32_1 = arith.constant 0 : i32
    return %c0_i32, %c0_i32_0 : i32, i32
  }
  func.func @transform_4(%arg0: i32) -> (i32, i32) {
    %c0_i32 = arith.constant 0 : i32
    %c0_i32_0 = arith.constant 0 : i32
    %c0_i32_1 = arith.constant 0 : i32
    return %c0_i32, %c0_i32_0 : i32, i32
  }
  func.func @transform_5(%arg0: i32) -> (i32, i32) {
    %c0_i32 = arith.constant 0 : i32
    %c0_i32_0 = arith.constant 0 : i32
    %c0_i32_1 = arith.constant 0 : i32
    return %c0_i32, %c0_i32_0 : i32, i32
  }
  func.func @transform_6(%arg0: i32) -> (i32, i32) {
    %c0_i32 = arith.constant 0 : i32
    %c0_i32_0 = arith.constant 0 : i32
    %c0_i32_1 = arith.constant 0 : i32
    return %c0_i32, %c0_i32_0 : i32, i32
  }
  func.func @transform_7(%arg0: i32) -> (i32, i32) {
    %c0_i32 = arith.constant 0 : i32
    %c0_i32_0 = arith.constant 0 : i32
    %c0_i32_1 = arith.constant 0 : i32
    return %c0_i32, %c0_i32_0 : i32, i32
  }
  func.func @transform_8(%arg0: i32) -> (i32, i32) {
    %c0_i32 = arith.constant 0 : i32
    %c0_i32_0 = arith.constant 0 : i32
    %c0_i32_1 = arith.constant 0 : i32
    return %c0_i32, %c0_i32_0 : i32, i32
  }
  func.func @transform_9(%arg0: i32) -> (i32, i32) {
    %c0_i32 = arith.constant 0 : i32
    %c0_i32_0 = arith.constant 0 : i32
    %c0_i32_1 = arith.constant 0 : i32
    return %c0_i32, %c0_i32_0 : i32, i32
  }
  func.func @transform_10(%arg0: i32) -> (i32, i32) {
    %c0_i32 = arith.constant 0 : i32
    %c0_i32_0 = arith.constant 0 : i32
    return %arg0, %c0_i32 : i32, i32
  }
}

</mosaic_0001>

<llo_original>
// kernel: tpu_custom_call.1
$region0: #{tpu_custom_call.1}
  #allocation0 [shape = 'u32[]', space=smem, size = 0x4, offset = 0x4, fixed_abs, tag = 'smem constant byte address 0x4 - core index']
  #allocation1 [shape = 'u32[144,128]{1,0:T(1,128)}', space=vmem, size = 0x12000, scoped, tag = 'internal scratch']
  %s0 = inlined_call_operand.hbm [shape: bf16[64,768], index: 0, kind: input, shape index: {}]
  %s1 = inlined_call_operand.hbm [shape: bf16[64,64], index: 1, kind: input, shape index: {}]
  %s2 = inlined_call_operand.hbm [shape: f32[16,768], index: 2, kind: input, shape index: {}]
  %s3 = inlined_call_operand.hbm [shape: bf16[768,768], index: 3, kind: input, shape index: {}]
  %s4 = inlined_call_operand.hbm [shape: bf16[64,256], index: 4, kind: input, shape index: {}]
  %s5 = inlined_call_operand.hbm [shape: bf16[768,256], index: 5, kind: input, shape index: {}]
  %s6 = inlined_call_operand.hbm [shape: bf16[256,256], index: 6, kind: input, shape index: {}]
  %s7 = inlined_call_operand.hbm [shape: bf16[256,256], index: 7, kind: input, shape index: {}]
  %s8 = inlined_call_operand.hbm [shape: bf16[256,128], index: 8, kind: input, shape index: {}]
  %s9 = inlined_call_operand.hbm [shape: bf16[128,128], index: 9, kind: input, shape index: {}]
  %s10 = inlined_call_operand.hbm [shape: bf16[64,128], index: 10, kind: output, shape index: {}]
  %s11 = sld [smem:[#allocation0]]
  $region113: #{tpu_custom_call.1} parent=0
    _
  %s13 = ssub.s32 1, %s11
  %s14 = scalar_select 0, %s13, %s11
  $region1: #{tpu_custom_call.1} parent=0
    #allocation2 [shape = 'u8[98304]{0}', space=vmem, size = 0x18000, scoped, tag = 'input window, operand 0']
    #allocation3 [shape = 's32[2]{0}', space=sflag, size = 0x8, scoped, tag = 'scoped memory for tpu_custom_call.1']
    #allocation4 [shape = 's32[2]{0}', space=sflag, size = 0x8, scoped, tag = 'scoped memory for tpu_custom_call.1']
    #allocation5 [shape = 'u8[16384]{0}', space=vmem, size = 0x4000, scoped, tag = 'input window, operand 1']
    #allocation6 [shape = 's32[2]{0}', space=sflag, size = 0x8, scoped, tag = 'scoped memory for tpu_custom_call.1']
    #allocation7 [shape = 'u8[49152]{0}', space=vmem, size = 0xc000, scoped, tag = 'input window, operand 2, single buffered']
    #allocation8 [shape = 'u8[1179648]{0}', space=vmem, size = 0x120000, scoped, tag = 'input window, operand 3, single buffered']
    #allocation9 [shape = 's32[1]{0}', space=sflag, size = 0x4, scoped, tag = 'scoped memory for tpu_custom_call.1']
    #allocation10 [shape = 'u8[32768]{0}', space=vmem, size = 0x8000, scoped, tag = 'input window, operand 4, single buffered']
    #allocation11 [shape = 'u8[393216]{0}', space=vmem, size = 0x60000, scoped, tag = 'input window, operand 5, single buffered']
    #allocation12 [shape = 's32[1]{0}', space=sflag, size = 0x4, scoped, tag = 'scoped memory for tpu_custom_call.1']
    #allocation13 [shape = 'u8[131072]{0}', space=vmem, size = 0x20000, scoped, tag = 'input window, operand 6, single buffered']
    #allocation14 [shape = 'u8[131072]{0}', space=vmem, size = 0x20000, scoped, tag = 'input window, operand 7, single buffered']
    #allocation15 [shape = 's32[1]{0}', space=sflag, size = 0x4, scoped, tag = 'scoped memory for tpu_custom_call.1']
    #allocation16 [shape = 'u8[65536]{0}', space=vmem, size = 0x10000, scoped, tag = 'input window, operand 8, single buffered']
    #allocation17 [shape = 'u8[32768]{0}', space=vmem, size = 0x8000, scoped, tag = 'input window, operand 9, single buffered']
    #allocation18 [shape = 's32[1]{0}', space=sflag, size = 0x4, scoped, tag = 'scoped memory for tpu_custom_call.1']
    #allocation19 [shape = 'u8[16384]{0}', space=vmem, size = 0x4000, scoped, tag = 'output window, operand 0']
    %15 = vsyncpa [#allocation3], 0
    %s16 = scalar_lea.sflag [#allocation3], 1
    %17 = vsyncpa %s16, 0
    %18 = vsyncpa [#allocation6], 0
    %s19 = scalar_lea.sflag [#allocation6], 1
    %20 = vsyncpa %s19, 0
    %21 = vsyncpa [#allocation9], 0
    %22 = vsyncpa [#allocation12], 0
    %23 = vsyncpa [#allocation15], 0
    %24 = vsyncpa [#allocation18], 0
    %25 = vsyncpa [#allocation4], 0
    %s26 = scalar_lea.sflag [#allocation4], 1
    %27 = vsyncpa %s26, 0
    loop: start=0, step=1, limit=4
    $region2: #{tpu_custom_call.1} parent=1 // loop_pre_header
      _
    $region3: #{tpu_custom_call.1} parent=1 // loop_header
      %s29 = sphi 0, %s33
      %p30 = scmp.ge.s32.totalorder %s29, 4
      %s39 = sphi 0, %s41
      %s42 = sphi 0, %s39
      %s43 = sphi 0, %s42
      %s59 = sphi 0, %s43
      %s65 = sphi 0, %s67
      %s68 = sphi 0, %s65
      %s69 = sphi 0, %s68
      %s85 = sphi 0, %s69
      %s89 = sphi 0, %s89
      %s91 = sphi 0, %s89
      %s92 = sphi 0, %s91
      %s106 = sphi 0, %s92
      %s110 = sphi 0, %s110
      %s112 = sphi 0, %s110
      %s113 = sphi 0, %s112
      %s127 = sphi 0, %s113
      %s131 = sphi 0, %s131
      %s133 = sphi 0, %s131
      %s134 = sphi 0, %s133
      %s148 = sphi 0, %s134
      %s152 = sphi 0, %s152
      %s154 = sphi 0, %s152
      %s155 = sphi 0, %s154
      %s169 = sphi 0, %s155
      %s173 = sphi 0, %s173
      %s175 = sphi 0, %s173
      %s176 = sphi 0, %s175
      %s190 = sphi 0, %s176
      %s194 = sphi 0, %s194
      %s196 = sphi 0, %s194
      %s197 = sphi 0, %s196
      %s211 = sphi 0, %s197
      %s215 = sphi 0, %s215
      %s217 = sphi 0, %s215
      %s218 = sphi 0, %s217
      %s232 = sphi 0, %s218
      %s236 = sphi 0, %s236
      %s238 = sphi 0, %s236
      %s239 = sphi 0, %s238
      %s253 = sphi 0, %s239
      %s259 = sphi 0, %s261
      %s262 = sphi 0, %s259
      %s263 = sphi 0, %s262
      %s279 = sphi 0, %s263
    $region4: #{tpu_custom_call.1} parent=1 // loop_header_branch
      %32 = sbr.rel (%p30) target = $region8
    $region5: #{tpu_custom_call.1} parent=1 // loop_body
      %s34 = ssub.s32 %s29, 1
      %s35 = ssub.s32 %s29, 2
      %s36 = sadd.s32 %s29, 1
      %s37 = ssub.s32 %s29, %s36
      %p38 = scmp.eq.s32.totalorder %s37, 0
      %s40 = sadd.s32 %s39, 1
      %s41 = scalar_select %p38, %s39, %s40
      %p44 = pneg %p38
      %p45 = scmp.eq.s32.totalorder %s29, 1
      %p46 = por %p44, %p45
      %p47 = scmp.ne.s32.totalorder %s39, %s42
      %p48 = scmp.eq.s32.totalorder %s29, 0
      %p49 = por %p47, %p48
      %p50 = scmp.ne.s32.totalorder %s39, %s42
      %p51 = scmp.eq.s32.totalorder %s34, 1
      %p52 = por %p50, %p51
      %p53 = scmp.ne.s32.totalorder %s42, %s43
      %p54 = scmp.eq.s32.totalorder %s34, 0
      %p55 = por %p53, %p54
      %p56 = scmp.ne.s32.totalorder %s42, %s43
      %p57 = scmp.eq.s32.totalorder %s35, 1
      %p58 = por %p56, %p57
      %p60 = scmp.ne.s32.totalorder %s43, %s59
      %p61 = scmp.eq.s32.totalorder %s35, 0
      %p62 = por %p60, %p61
      %s63 = ssub.s32 %s29, %s36
      %p64 = scmp.eq.s32.totalorder %s63, 0
      %s66 = sadd.s32 %s65, 1
      %s67 = scalar_select %p64, %s65, %s66
      %p70 = pneg %p64
      %p71 = scmp.eq.s32.totalorder %s29, 1
      %p72 = por %p70, %p71
      %p73 = scmp.ne.s32.totalorder %s65, %s68
      %p74 = scmp.eq.s32.totalorder %s29, 0
      %p75 = por %p73, %p74
      %p76 = scmp.ne.s32.totalorder %s65, %s68
      %p77 = scmp.eq.s32.totalorder %s34, 1
      %p78 = por %p76, %p77
      %p79 = scmp.ne.s32.totalorder %s68, %s69
      %p80 = scmp.eq.s32.totalorder %s34, 0
      %p81 = por %p79, %p80
      %p82 = scmp.ne.s32.totalorder %s68, %s69
      %p83 = scmp.eq.s32.totalorder %s35, 1
      %p84 = por %p82, %p83
      %p86 = scmp.ne.s32.totalorder %s69, %s85
      %p87 = scmp.eq.s32.totalorder %s35, 0
      %p88 = por %p86, %p87
      %s90 = sadd.s32 %s89, 1
      %p93 = scmp.eq.s32.totalorder %s29, 1
      %p94 = scmp.ne.s32.totalorder %s89, %s91
      %p95 = scmp.eq.s32.totalorder %s29, 0
      %p96 = por %p94, %p95
      %p97 = scmp.ne.s32.totalorder %s89, %s91
      %p98 = scmp.eq.s32.totalorder %s34, 1
      %p99 = por %p97, %p98
      %p100 = scmp.ne.s32.totalorder %s91, %s92
      %p101 = scmp.eq.s32.totalorder %s34, 0
      %p102 = por %p100, %p101
      %p103 = scmp.ne.s32.totalorder %s91, %s92
      %p104 = scmp.eq.s32.totalorder %s35, 1
      %p105 = por %p103, %p104
      %p107 = scmp.ne.s32.totalorder %s92, %s106
      %p108 = scmp.eq.s32.totalorder %s35, 0
      %p109 = por %p107, %p108
      %s111 = sadd.s32 %s110, 1
      %p114 = scmp.eq.s32.totalorder %s29, 1
      %p115 = scmp.ne.s32.totalorder %s110, %s112
      %p116 = scmp.eq.s32.totalorder %s29, 0
      %p117 = por %p115, %p116
      %p118 = scmp.ne.s32.totalorder %s110, %s112
      %p119 = scmp.eq.s32.totalorder %s34, 1
      %p120 = por %p118, %p119
      %p121 = scmp.ne.s32.totalorder %s112, %s113
      %p122 = scmp.eq.s32.totalorder %s34, 0
      %p123 = por %p121, %p122
      %p124 = scmp.ne.s32.totalorder %s112, %s113
      %p125 = scmp.eq.s32.totalorder %s35, 1
      %p126 = por %p124, %p125
      %p128 = scmp.ne.s32.totalorder %s113, %s127
      %p129 = scmp.eq.s32.totalorder %s35, 0
      %p130 = por %p128, %p129
      %s132 = sadd.s32 %s131, 1
      %p135 = scmp.eq.s32.totalorder %s29, 1
      %p136 = scmp.ne.s32.totalorder %s131, %s133
      %p137 = scmp.eq.s32.totalorder %s29, 0
      %p138 = por %p136, %p137
      %p139 = scmp.ne.s32.totalorder %s131, %s133
      %p140 = scmp.eq.s32.totalorder %s34, 1
      %p141 = por %p139, %p140
      %p142 = scmp.ne.s32.totalorder %s133, %s134
      %p143 = scmp.eq.s32.totalorder %s34, 0
      %p144 = por %p142, %p143
      %p145 = scmp.ne.s32.totalorder %s133, %s134
      %p146 = scmp.eq.s32.totalorder %s35, 1
      %p147 = por %p145, %p146
      %p149 = scmp.ne.s32.totalorder %s134, %s148
      %p150 = scmp.eq.s32.totalorder %s35, 0
      %p151 = por %p149, %p150
      %s153 = sadd.s32 %s152, 1
      %p156 = scmp.eq.s32.totalorder %s29, 1
      %p157 = scmp.ne.s32.totalorder %s152, %s154
      %p158 = scmp.eq.s32.totalorder %s29, 0
      %p159 = por %p157, %p158
      %p160 = scmp.ne.s32.totalorder %s152, %s154
      %p161 = scmp.eq.s32.totalorder %s34, 1
      %p162 = por %p160, %p161
      %p163 = scmp.ne.s32.totalorder %s154, %s155
      %p164 = scmp.eq.s32.totalorder %s34, 0
      %p165 = por %p163, %p164
      %p166 = scmp.ne.s32.totalorder %s154, %s155
      %p167 = scmp.eq.s32.totalorder %s35, 1
      %p168 = por %p166, %p167
      %p170 = scmp.ne.s32.totalorder %s155, %s169
      %p171 = scmp.eq.s32.totalorder %s35, 0
      %p172 = por %p170, %p171
      %s174 = sadd.s32 %s173, 1
      %p177 = scmp.eq.s32.totalorder %s29, 1
      %p178 = scmp.ne.s32.totalorder %s173, %s175
      %p179 = scmp.eq.s32.totalorder %s29, 0
      %p180 = por %p178, %p179
      %p181 = scmp.ne.s32.totalorder %s173, %s175
      %p182 = scmp.eq.s32.totalorder %s34, 1
      %p183 = por %p181, %p182
      %p184 = scmp.ne.s32.totalorder %s175, %s176
      %p185 = scmp.eq.s32.totalorder %s34, 0
      %p186 = por %p184, %p185
      %p187 = scmp.ne.s32.totalorder %s175, %s176
      %p188 = scmp.eq.s32.totalorder %s35, 1
      %p189 = por %p187, %p188
      %p191 = scmp.ne.s32.totalorder %s176, %s190
      %p192 = scmp.eq.s32.totalorder %s35, 0
      %p193 = por %p191, %p192
      %s195 = sadd.s32 %s194, 1
      %p198 = scmp.eq.s32.totalorder %s29, 1
      %p199 = scmp.ne.s32.totalorder %s194, %s196
      %p200 = scmp.eq.s32.totalorder %s29, 0
      %p201 = por %p199, %p200
      %p202 = scmp.ne.s32.totalorder %s194, %s196
      %p203 = scmp.eq.s32.totalorder %s34, 1
      %p204 = por %p202, %p203
      %p205 = scmp.ne.s32.totalorder %s196, %s197
      %p206 = scmp.eq.s32.totalorder %s34, 0
      %p207 = por %p205, %p206
      %p208 = scmp.ne.s32.totalorder %s196, %s197
      %p209 = scmp.eq.s32.totalorder %s35, 1
      %p210 = por %p208, %p209
      %p212 = scmp.ne.s32.totalorder %s197, %s211
      %p213 = scmp.eq.s32.totalorder %s35, 0
      %p214 = por %p212, %p213
      %s216 = sadd.s32 %s215, 1
      %p219 = scmp.eq.s32.totalorder %s29, 1
      %p220 = scmp.ne.s32.totalorder %s215, %s217
      %p221 = scmp.eq.s32.totalorder %s29, 0
      %p222 = por %p220, %p221
      %p223 = scmp.ne.s32.totalorder %s215, %s217
      %p224 = scmp.eq.s32.totalorder %s34, 1
      %p225 = por %p223, %p224
      %p226 = scmp.ne.s32.totalorder %s217, %s218
      %p227 = scmp.eq.s32.totalorder %s34, 0
      %p228 = por %p226, %p227
      %p229 = scmp.ne.s32.totalorder %s217, %s218
      %p230 = scmp.eq.s32.totalorder %s35, 1
      %p231 = por %p229, %p230
      %p233 = scmp.ne.s32.totalorder %s218, %s232
      %p234 = scmp.eq.s32.totalorder %s35, 0
      %p235 = por %p233, %p234
      %s237 = sadd.s32 %s236, 1
      %p240 = scmp.eq.s32.totalorder %s29, 1
      %p241 = scmp.ne.s32.totalorder %s236, %s238
      %p242 = scmp.eq.s32.totalorder %s29, 0
      %p243 = por %p241, %p242
      %p244 = scmp.ne.s32.totalorder %s236, %s238
      %p245 = scmp.eq.s32.totalorder %s34, 1
      %p246 = por %p244, %p245
      %p247 = scmp.ne.s32.totalorder %s238, %s239
      %p248 = scmp.eq.s32.totalorder %s34, 0
      %p249 = por %p247, %p248
      %p250 = scmp.ne.s32.totalorder %s238, %s239
      %p251 = scmp.eq.s32.totalorder %s35, 1
      %p252 = por %p250, %p251
      %p254 = scmp.ne.s32.totalorder %s239, %s253
      %p255 = scmp.eq.s32.totalorder %s35, 0
      %p256 = por %p254, %p255
      %s257 = ssub.s32 %s29, %s36
      %p258 = scmp.eq.s32.totalorder %s257, 0
      %s260 = sadd.s32 %s259, 1
      %s261 = scalar_select %p258, %s259, %s260
      %p264 = pneg %p258
      %p265 = scmp.eq.s32.totalorder %s29, 1
      %p266 = por %p264, %p265
      %p267 = scmp.ne.s32.totalorder %s259, %s262
      %p268 = scmp.eq.s32.totalorder %s29, 0
      %p269 = por %p267, %p268
      %p270 = scmp.ne.s32.totalorder %s259, %s262
      %p271 = scmp.eq.s32.totalorder %s34, 1
      %p272 = por %p270, %p271
      %p273 = scmp.ne.s32.totalorder %s262, %s263
      %p274 = scmp.eq.s32.totalorder %s34, 0
      %p275 = por %p273, %p274
      %p276 = scmp.ne.s32.totalorder %s262, %s263
      %p277 = scmp.eq.s32.totalorder %s35, 1
      %p278 = por %p276, %p277
      %p280 = scmp.ne.s32.totalorder %s263, %s279
      %p281 = scmp.eq.s32.totalorder %s35, 0
      %p282 = por %p280, %p281
      %p283 = scmp.le.s32.totalorder 1, %s29
      %p284 = scmp.lt.s32.totalorder %s29, 3
      %p285 = pnand %p283, %p284
      %p286 = pneg %p285
      // Predicated region
      $region9: #{tpu_custom_call.1} parent=5 // pred_check
        _
      $region10: #{tpu_custom_call.1} parent=5 // pred_check_branch
        %288 = sbr.rel (%p285) target = $region12
      $region11: #{tpu_custom_call.1} parent=5 // pred_region
        %s289 = ssub.s32 %s29, 1
        // Predicated region
        $region13: #{tpu_custom_call.1} parent=11 // pred_check
          %p290 = pneg %p102
        $region14: #{tpu_custom_call.1} parent=11 // pred_check_branch
          %292 = sbr.rel (%p290) target = $region16
        $region15: #{tpu_custom_call.1} parent=11 // pred_region
          %s294 = ssub.s32 1536, 1536
          %295 = vsyncadd [#allocation6], %s294
          %s296 = sshll.u32 [#allocation7], 4
          %s297 = int_to_ptr.vmem [resolvable:$true] %s296
          %302 = dma.hbm_to_vmem [thread:$0]  %s2, 1536, %s297, [#allocation6], 768, 768, 48
        $region16: #{tpu_custom_call.1} parent=11 // pred_fallthru
          _
        // Predicated region
        $region17: #{tpu_custom_call.1} parent=11 // pred_check
          %p303 = pneg %p123
        $region18: #{tpu_custom_call.1} parent=11 // pred_check_branch
          %305 = sbr.rel (%p303) target = $region20
        $region19: #{tpu_custom_call.1} parent=11 // pred_region
          %s307 = ssub.s32 36864, 36864
          %308 = vsyncadd [#allocation9], %s307
          %s309 = sshll.u32 [#allocation8], 4
          %s310 = int_to_ptr.vmem [resolvable:$true] %s309
          %315 = dma.hbm_to_vmem [thread:$0]  %s3, 36864, %s310, [#allocation9], 384, 384, 24
        $region20: #{tpu_custom_call.1} parent=11 // pred_fallthru
          _
        // Predicated region
        $region21: #{tpu_custom_call.1} parent=11 // pred_check
          %p316 = pneg %p144
        $region22: #{tpu_custom_call.1} parent=11 // pred_check_branch
          %318 = sbr.rel (%p316) target = $region24
        $region23: #{tpu_custom_call.1} parent=11 // pred_region
          %s320 = ssub.s32 1024, 1024
          %321 = vsyncadd [#allocation9], %s320
          %s322 = sshll.u32 [#allocation10], 4
          %s323 = int_to_ptr.vmem [resolvable:$true] %s322
          %328 = dma.hbm_to_vmem [thread:$0]  %s4, 1024, %s323, [#allocation9], 128, 128, 8
        $region24: #{tpu_custom_call.1} parent=11 // pred_fallthru
          _
        // Predicated region
        $region25: #{tpu_custom_call.1} parent=11 // pred_check
          %p329 = pneg %p165
        $region26: #{tpu_custom_call.1} parent=11 // pred_check_branch
          %331 = sbr.rel (%p329) target = $region28
        $region27: #{tpu_custom_call.1} parent=11 // pred_region
          %s333 = ssub.s32 12288, 12288
          %334 = vsyncadd [#allocation12], %s333
          %s335 = sshll.u32 [#allocation11], 4
          %s336 = int_to_ptr.vmem [resolvable:$true] %s335
          %341 = dma.hbm_to_vmem [thread:$0]  %s5, 12288, %s336, [#allocation12], 128, 128, 8
        $region28: #{tpu_custom_call.1} parent=11 // pred_fallthru
          _
        // Predicated region
        $region29: #{tpu_custom_call.1} parent=11 // pred_check
          %p342 = pneg %p186
        $region30: #{tpu_custom_call.1} parent=11 // pred_check_branch
          %344 = sbr.rel (%p342) target = $region32
        $region31: #{tpu_custom_call.1} parent=11 // pred_region
          %s346 = ssub.s32 4096, 4096
          %347 = vsyncadd [#allocation12], %s346
          %s348 = sshll.u32 [#allocation13], 4
          %s349 = int_to_ptr.vmem [resolvable:$true] %s348
          %354 = dma.hbm_to_vmem [thread:$0]  %s6, 4096, %s349, [#allocation12], 128, 128, 8
        $region32: #{tpu_custom_call.1} parent=11 // pred_fallthru
          _
        // Predicated region
        $region33: #{tpu_custom_call.1} parent=11 // pred_check
          %p355 = pneg %p207
        $region34: #{tpu_custom_call.1} parent=11 // pred_check_branch
          %357 = sbr.rel (%p355) target = $region36
        $region35: #{tpu_custom_call.1} parent=11 // pred_region
          %s359 = ssub.s32 4096, 4096
          %360 = vsyncadd [#allocation15], %s359
          %s361 = sshll.u32 [#allocation14], 4
          %s362 = int_to_ptr.vmem [resolvable:$true] %s361
          %367 = dma.hbm_to_vmem [thread:$0]  %s7, 4096, %s362, [#allocation15], 128, 128, 8
        $region36: #{tpu_custom_call.1} parent=11 // pred_fallthru
          _
        // Predicated region
        $region37: #{tpu_custom_call.1} parent=11 // pred_check
          %p368 = pneg %p228
        $region38: #{tpu_custom_call.1} parent=11 // pred_check_branch
          %370 = sbr.rel (%p368) target = $region40
        $region39: #{tpu_custom_call.1} parent=11 // pred_region
          %s372 = ssub.s32 2048, 2048
          %373 = vsyncadd [#allocation15], %s372
          %s374 = sshll.u32 [#allocation16], 4
          %s375 = int_to_ptr.vmem [resolvable:$true] %s374
          %380 = dma.hbm_to_vmem [thread:$0]  %s8, 2048, %s375, [#allocation15], 64, 64, 4
        $region40: #{tpu_custom_call.1} parent=11 // pred_fallthru
          _
        // Predicated region
        $region41: #{tpu_custom_call.1} parent=11 // pred_check
          %p381 = pneg %p249
        $region42: #{tpu_custom_call.1} parent=11 // pred_check_branch
          %383 = sbr.rel (%p381) target = $region44
        $region43: #{tpu_custom_call.1} parent=11 // pred_region
          %s385 = ssub.s32 1024, 1024
          %386 = vsyncadd [#allocation18], %s385
          %s387 = sshll.u32 [#allocation17], 4
          %s388 = int_to_ptr.vmem [resolvable:$true] %s387
          %393 = dma.hbm_to_vmem [thread:$0]  %s9, 1024, %s388, [#allocation18], 64, 64, 4
        $region44: #{tpu_custom_call.1} parent=11 // pred_fallthru
          _
      $region12: #{tpu_custom_call.1} parent=5 // pred_fallthru
        _
      %p394 = scmp.lt.s32.totalorder %s29, 2
      // Predicated region
      $region45: #{tpu_custom_call.1} parent=5 // pred_check
        %p395 = pneg %p394
      $region46: #{tpu_custom_call.1} parent=5 // pred_check_branch
        %397 = sbr.rel (%p395) target = $region48
      $region47: #{tpu_custom_call.1} parent=5 // pred_region
        // Predicated region
        $region49: #{tpu_custom_call.1} parent=47 // pred_check
          %p398 = pneg %p49
        $region50: #{tpu_custom_call.1} parent=47 // pred_check_branch
          %400 = sbr.rel (%p398) target = $region52
        $region51: #{tpu_custom_call.1} parent=47 // pred_region
          %s401 = sand.u32 %s39, 1
          %s402 = scalar_lea.sflag [#allocation3], %s401
          %s403 = sand.u32 %s39, 1
          %s404 = smul.addr %s403, 96
          %s405 = scalar_lea.vmem [#allocation2], %s404
          %s406 = smul.u32 4, %s29
          %s408 = ssub.s32 1536, 1536
          %409 = vsyncadd %s402, %s408
          %s410 = smul.addr %s406, 6
          %s411 = smul.addr %s410, 64
          %s412 = scalar_lea.hbm %s0, %s411
          %s413 = sshll.u32 %s405, 4
          %s414 = int_to_ptr.vmem [resolvable:$true] %s413
          %419 = dma.hbm_to_vmem [thread:$0]  %s412, 1536, %s414, %s402, 384, 384, 24
        $region52: #{tpu_custom_call.1} parent=47 // pred_fallthru
          _
        // Predicated region
        $region53: #{tpu_custom_call.1} parent=47 // pred_check
          %p420 = pneg %p75
        $region54: #{tpu_custom_call.1} parent=47 // pred_check_branch
          %422 = sbr.rel (%p420) target = $region56
        $region55: #{tpu_custom_call.1} parent=47 // pred_region
          %s423 = sand.u32 %s29, 1
          %s424 = scalar_lea.sflag [#allocation6], %s423
          %s425 = sand.u32 %s65, 1
          %s426 = smul.addr %s425, 16
          %s427 = scalar_lea.vmem [#allocation5], %s426
          %s428 = smul.u32 4, %s29
          %s430 = ssub.s32 256, 256
          %431 = vsyncadd %s424, %s430
          %s432 = smul.addr %s428, 64
          %s433 = scalar_lea.hbm %s1, %s432
          %s434 = sshll.u32 %s427, 4
          %s435 = int_to_ptr.vmem [resolvable:$true] %s434
          %440 = dma.hbm_to_vmem [thread:$0]  %s433, 256, %s435, %s424, 64, 64, 4
        $region56: #{tpu_custom_call.1} parent=47 // pred_fallthru
          _
      $region48: #{tpu_custom_call.1} parent=5 // pred_fallthru
        _
      %p441 = scmp.le.s32.totalorder 1, %s29
      %p442 = scmp.lt.s32.totalorder %s29, 3
      %p443 = pnand %p441, %p442
      %p444 = pneg %p443
      // Predicated region
      $region57: #{tpu_custom_call.1} parent=5 // pred_check
        _
      $region58: #{tpu_custom_call.1} parent=5 // pred_check_branch
        %446 = sbr.rel (%p443) target = $region60
      $region59: #{tpu_custom_call.1} parent=5 // pred_region
        %s447 = ssub.s32 %s29, 1
        %s448 = sand.u32 %s42, 1
        %s449 = scalar_lea.sflag [#allocation3], %s448
        %s450 = sand.u32 %s42, 1
        %s451 = smul.addr %s450, 96
        %s452 = scalar_lea.vmem [#allocation2], %s451
        // Predicated region
        $region61: #{tpu_custom_call.1} parent=59 // pred_check
          %p453 = pneg %p55
        $region62: #{tpu_custom_call.1} parent=59 // pred_check_branch
          %455 = sbr.rel (%p453) target = $region64
        $region63: #{tpu_custom_call.1} parent=59 // pred_region
          %456 = dma.done %s449, 1536
        $region64: #{tpu_custom_call.1} parent=59 // pred_fallthru
          _
        %s457 = sand.u32 %s34, 1
        %s458 = scalar_lea.sflag [#allocation6], %s457
        %s459 = sand.u32 %s68, 1
        %s460 = smul.addr %s459, 16
        %s461 = scalar_lea.vmem [#allocation5], %s460
        // Predicated region
        $region65: #{tpu_custom_call.1} parent=59 // pred_check
          %p462 = pneg %p81
        $region66: #{tpu_custom_call.1} parent=59 // pred_check_branch
          %464 = sbr.rel (%p462) target = $region68
        $region67: #{tpu_custom_call.1} parent=59 // pred_region
          %465 = dma.done %s458, 256
        $region68: #{tpu_custom_call.1} parent=59 // pred_fallthru
          _
        // Predicated region
        $region69: #{tpu_custom_call.1} parent=59 // pred_check
          %p466 = pneg %p102
        $region70: #{tpu_custom_call.1} parent=59 // pred_check_branch
          %468 = sbr.rel (%p466) target = $region72
        $region71: #{tpu_custom_call.1} parent=59 // pred_region
          %469 = dma.done [#allocation6], 1536
        $region72: #{tpu_custom_call.1} parent=59 // pred_fallthru
          _
        // Predicated region
        $region73: #{tpu_custom_call.1} parent=59 // pred_check
          %p470 = pneg %p123
        $region74: #{tpu_custom_call.1} parent=59 // pred_check_branch
          %472 = sbr.rel (%p470) target = $region76
        $region75: #{tpu_custom_call.1} parent=59 // pred_region
          %473 = dma.done [#allocation9], 36864
        $region76: #{tpu_custom_call.1} parent=59 // pred_fallthru
          _
        // Predicated region
        $region77: #{tpu_custom_call.1} parent=59 // pred_check
          %p474 = pneg %p144
        $region78: #{tpu_custom_call.1} parent=59 // pred_check_branch
          %476 = sbr.rel (%p474) target = $region80
        $region79: #{tpu_custom_call.1} parent=59 // pred_region
          %477 = dma.done [#allocation9], 1024
        $region80: #{tpu_custom_call.1} parent=59 // pred_fallthru
          _
        // Predicated region
        $region81: #{tpu_custom_call.1} parent=59 // pred_check
          %p478 = pneg %p165
        $region82: #{tpu_custom_call.1} parent=59 // pred_check_branch
          %480 = sbr.rel (%p478) target = $region84
        $region83: #{tpu_custom_call.1} parent=59 // pred_region
          %481 = dma.done [#allocation12], 12288
        $region84: #{tpu_custom_call.1} parent=59 // pred_fallthru
          _
        // Predicated region
        $region85: #{tpu_custom_call.1} parent=59 // pred_check
          %p482 = pneg %p186
        $region86: #{tpu_custom_call.1} parent=59 // pred_check_branch
          %484 = sbr.rel (%p482) target = $region88
        $region87: #{tpu_custom_call.1} parent=59 // pred_region
          %485 = dma.done [#allocation12], 4096
        $region88: #{tpu_custom_call.1} parent=59 // pred_fallthru
          _
        // Predicated region
        $region89: #{tpu_custom_call.1} parent=59 // pred_check
          %p486 = pneg %p207
        $region90: #{tpu_custom_call.1} parent=59 // pred_check_branch
          %488 = sbr.rel (%p486) target = $region92
        $region91: #{tpu_custom_call.1} parent=59 // pred_region
          %489 = dma.done [#allocation15], 4096
        $region92: #{tpu_custom_call.1} parent=59 // pred_fallthru
          _
        // Predicated region
        $region93: #{tpu_custom_call.1} parent=59 // pred_check
          %p490 = pneg %p228
        $region94: #{tpu_custom_call.1} parent=59 // pred_check_branch
          %492 = sbr.rel (%p490) target = $region96
        $region95: #{tpu_custom_call.1} parent=59 // pred_region
          %493 = dma.done [#allocation15], 2048
        $region96: #{tpu_custom_call.1} parent=59 // pred_fallthru
          _
        // Predicated region
        $region97: #{tpu_custom_call.1} parent=59 // pred_check
          %p494 = pneg %p249
        $region98: #{tpu_custom_call.1} parent=59 // pred_check_branch
          %496 = sbr.rel (%p494) target = $region100
        $region99: #{tpu_custom_call.1} parent=59 // pred_region
          %497 = dma.done [#allocation18], 1024
        $region100: #{tpu_custom_call.1} parent=59 // pred_fallthru
          _
        %s498 = sand.u32 %s42, 1
        %s499 = scalar_lea.sflag [#allocation3], %s498
        %s500 = sand.u32 %s42, 1
        %s501 = smul.addr %s500, 96
        %s502 = scalar_lea.vmem [#allocation2], %s501
        %p503 = pneg %p55
        %p504 = pneg %p52
        %s505 = sand.u32 %s34, 1
        %s506 = scalar_lea.sflag [#allocation6], %s505
        %s507 = sand.u32 %s68, 1
        %s508 = smul.addr %s507, 16
        %s509 = scalar_lea.vmem [#allocation5], %s508
        %p510 = pneg %p81
        %p511 = pneg %p78
        %p512 = pneg %p102
        %p513 = pneg %p99
        %p514 = pneg %p123
        %p515 = pneg %p120
        %p516 = pneg %p144
        %p517 = pneg %p141
        %p518 = pneg %p165
        %p519 = pneg %p162
        %p520 = pneg %p186
        %p521 = pneg %p183
        %p522 = pneg %p207
        %p523 = pneg %p204
        %p524 = pneg %p228
        %p525 = pneg %p225
        %p526 = pneg %p249
        %p527 = pneg %p246
        %p528 = pneg %p275
        %p529 = pneg %p272
        %s530 = sand.u32 %s262, 1
        %s531 = scalar_lea.sflag [#allocation4], %s530
        %s532 = sand.u32 %s262, 1
        %s533 = smul.addr %s532, 16
        %s534 = scalar_lea.vmem [#allocation19], %s533
        %s535 = smul.u32 4, %s34
        %s536 = smul.u32 4, %s34
        %s537 = smul.u32 4, %s34
        %v539 = vld [vmem:[%s452] sm:$0xff]
        %v540 = vld [vmem:[%s452 + $0x8] sm:$0xff]
        %v541 = vld [vmem:[%s452 + $0x10] sm:$0xff]
        %v542 = vld [vmem:[%s452 + $0x18] sm:$0xff]
        %v543 = vld [vmem:[%s452 + $0x20] sm:$0xff]
        %v544 = vld [vmem:[%s452 + $0x28] sm:$0xff]
        %v545 = vld [vmem:[%s452 + $0x30] sm:$0xff]
        %v546 = vld [vmem:[%s452 + $0x38] sm:$0xff]
        %v547 = vld [vmem:[%s452 + $0x40] sm:$0xff]
        %v548 = vld [vmem:[%s452 + $0x48] sm:$0xff]
        %v549 = vld [vmem:[%s452 + $0x50] sm:$0xff]
        %v550 = vld [vmem:[%s452 + $0x58] sm:$0xff]
        %v551 = vld [vmem:[#allocation8] sm:$0xff]
        %v552 = vld [vmem:[#allocation8 + $0x8] sm:$0xff]
        %v553 = vld [vmem:[#allocation8 + $0x10] sm:$0xff]
        %v554 = vld [vmem:[#allocation8 + $0x18] sm:$0xff]
        %v555 = vld [vmem:[#allocation8 + $0x20] sm:$0xff]
        %v556 = vld [vmem:[#allocation8 + $0x28] sm:$0xff]
        %v557 = vld [vmem:[#allocation8 + $0x30] sm:$0xff]
        %v558 = vld [vmem:[#allocation8 + $0x38] sm:$0xff]
        %v559 = vld [vmem:[#allocation8 + $0x40] sm:$0xff]
        %v560 = vld [vmem:[#allocation8 + $0x48] sm:$0xff]
        %v561 = vld [vmem:[#allocation8 + $0x50] sm:$0xff]
        %v562 = vld [vmem:[#allocation8 + $0x58] sm:$0xff]
        %v563 = vld [vmem:[#allocation8 + $0x60] sm:$0xff]
        %v564 = vld [vmem:[#allocation8 + $0x68] sm:$0xff]
        %v565 = vld [vmem:[#allocation8 + $0x70] sm:$0xff]
        %v566 = vld [vmem:[#allocation8 + $0x78] sm:$0xff]
        %v567 = vld [vmem:[#allocation8 + $0x80] sm:$0xff]
        %v568 = vld [vmem:[#allocation8 + $0x88] sm:$0xff]
        %v569 = vld [vmem:[#allocation8 + $0x90] sm:$0xff]
        %v570 = vld [vmem:[#allocation8 + $0x98] sm:$0xff]
        %v571 = vld [vmem:[#allocation8 + $0xa0] sm:$0xff]
        %v572 = vld [vmem:[#allocation8 + $0xa8] sm:$0xff]
        %v573 = vld [vmem:[#allocation8 + $0xb0] sm:$0xff]
        %v574 = vld [vmem:[#allocation8 + $0xb8] sm:$0xff]
        %v575 = vld [vmem:[#allocation8 + $0xc0] sm:$0xff]
        %v576 = vld [vmem:[#allocation8 + $0xc8] sm:$0xff]
        %v577 = vld [vmem:[#allocation8 + $0xd0] sm:$0xff]
        %v578 = vld [vmem:[#allocation8 + $0xd8] sm:$0xff]
        %v579 = vld [vmem:[#allocation8 + $0xe0] sm:$0xff]
        %v580 = vld [vmem:[#allocation8 + $0xe8] sm:$0xff]
        %v581 = vld [vmem:[#allocation8 + $0xf0] sm:$0xff]
        %v582 = vld [vmem:[#allocation8 + $0xf8] sm:$0xff]
        %v583 = vld [vmem:[#allocation8 + $0x100] sm:$0xff]
        %v584 = vld [vmem:[#allocation8 + $0x108] sm:$0xff]
        %v585 = vld [vmem:[#allocation8 + $0x110] sm:$0xff]
        %v586 = vld [vmem:[#allocation8 + $0x118] sm:$0xff]
        %v587 = vld [vmem:[#allocation8 + $0x120] sm:$0xff]
        %v588 = vld [vmem:[#allocation8 + $0x128] sm:$0xff]
        %v589 = vld [vmem:[#allocation8 + $0x130] sm:$0xff]
        %v590 = vld [vmem:[#allocation8 + $0x138] sm:$0xff]
        %v591 = vld [vmem:[#allocation8 + $0x140] sm:$0xff]
        %v592 = vld [vmem:[#allocation8 + $0x148] sm:$0xff]
        %v593 = vld [vmem:[#allocation8 + $0x150] sm:$0xff]
        %v594 = vld [vmem:[#allocation8 + $0x158] sm:$0xff]
        %v595 = vld [vmem:[#allocation8 + $0x160] sm:$0xff]
        %v596 = vld [vmem:[#allocation8 + $0x168] sm:$0xff]
        %v597 = vld [vmem:[#allocation8 + $0x170] sm:$0xff]
        %v598 = vld [vmem:[#allocation8 + $0x178] sm:$0xff]
        %v599 = vld [vmem:[#allocation8 + $0x180] sm:$0xff]
        %v600 = vld [vmem:[#allocation8 + $0x188] sm:$0xff]
        %v601 = vld [vmem:[#allocation8 + $0x190] sm:$0xff]
        %v602 = vld [vmem:[#allocation8 + $0x198] sm:$0xff]
        %v603 = vld [vmem:[#allocation8 + $0x1a0] sm:$0xff]
        %v604 = vld [vmem:[#allocation8 + $0x1a8] sm:$0xff]
        %v605 = vld [vmem:[#allocation8 + $0x1b0] sm:$0xff]
        %v606 = vld [vmem:[#allocation8 + $0x1b8] sm:$0xff]
        %v607 = vld [vmem:[#allocation8 + $0x1c0] sm:$0xff]
        %v608 = vld [vmem:[#allocation8 + $0x1c8] sm:$0xff]
        %v609 = vld [vmem:[#allocation8 + $0x1d0] sm:$0xff]
        %v610 = vld [vmem:[#allocation8 + $0x1d8] sm:$0xff]
        %v611 = vld [vmem:[#allocation8 + $0x1e0] sm:$0xff]
        %v612 = vld [vmem:[#allocation8 + $0x1e8] sm:$0xff]
        %v613 = vld [vmem:[#allocation8 + $0x1f0] sm:$0xff]
        %v614 = vld [vmem:[#allocation8 + $0x1f8] sm:$0xff]
        %v615 = vld [vmem:[#allocation8 + $0x200] sm:$0xff]
        %v616 = vld [vmem:[#allocation8 + $0x208] sm:$0xff]
        %v617 = vld [vmem:[#allocation8 + $0x210] sm:$0xff]
        %v618 = vld [vmem:[#allocation8 + $0x218] sm:$0xff]
        %v619 = vld [vmem:[#allocation8 + $0x220] sm:$0xff]
        %v620 = vld [vmem:[#allocation8 + $0x228] sm:$0xff]
        %v621 = vld [vmem:[#allocation8 + $0x230] sm:$0xff]
        %v622 = vld [vmem:[#allocation8 + $0x238] sm:$0xff]
        %v623 = vld [vmem:[#allocation8 + $0x240] sm:$0xff]
        %v624 = vld [vmem:[#allocation8 + $0x248] sm:$0xff]
        %v625 = vld [vmem:[#allocation8 + $0x250] sm:$0xff]
        %v626 = vld [vmem:[#allocation8 + $0x258] sm:$0xff]
        %v627 = vld [vmem:[#allocation8 + $0x260] sm:$0xff]
        %v628 = vld [vmem:[#allocation8 + $0x268] sm:$0xff]
        %v629 = vld [vmem:[#allocation8 + $0x270] sm:$0xff]
        %v630 = vld [vmem:[#allocation8 + $0x278] sm:$0xff]
        %v631 = vld [vmem:[#allocation8 + $0x280] sm:$0xff]
        %v632 = vld [vmem:[#allocation8 + $0x288] sm:$0xff]
        %v633 = vld [vmem:[#allocation8 + $0x290] sm:$0xff]
        %v634 = vld [vmem:[#allocation8 + $0x298] sm:$0xff]
        %v635 = vld [vmem:[#allocation8 + $0x2a0] sm:$0xff]
        %v636 = vld [vmem:[#allocation8 + $0x2a8] sm:$0xff]
        %v637 = vld [vmem:[#allocation8 + $0x2b0] sm:$0xff]
        %v638 = vld [vmem:[#allocation8 + $0x2b8] sm:$0xff]
        %v639 = vld [vmem:[#allocation8 + $0x2c0] sm:$0xff]
        %v640 = vld [vmem:[#allocation8 + $0x2c8] sm:$0xff]
        %v641 = vld [vmem:[#allocation8 + $0x2d0] sm:$0xff]
        %v642 = vld [vmem:[#allocation8 + $0x2d8] sm:$0xff]
        %v643 = vld [vmem:[#allocation8 + $0x2e0] sm:$0xff]
        %v644 = vld [vmem:[#allocation8 + $0x2e8] sm:$0xff]
        %v645 = vld [vmem:[#allocation8 + $0x2f0] sm:$0xff]
        %v646 = vld [vmem:[#allocation8 + $0x2f8] sm:$0xff]
        %v647 = vld [vmem:[#allocation8 + $0x300] sm:$0xff]
        %v648 = vld [vmem:[#allocation8 + $0x308] sm:$0xff]
        %v649 = vld [vmem:[#allocation8 + $0x310] sm:$0xff]
        %v650 = vld [vmem:[#allocation8 + $0x318] sm:$0xff]
        %v651 = vld [vmem:[#allocation8 + $0x320] sm:$0xff]
        %v652 = vld [vmem:[#allocation8 + $0x328] sm:$0xff]
        %v653 = vld [vmem:[#allocation8 + $0x330] sm:$0xff]
        %v654 = vld [vmem:[#allocation8 + $0x338] sm:$0xff]
        %v655 = vld [vmem:[#allocation8 + $0x340] sm:$0xff]
        %v656 = vld [vmem:[#allocation8 + $0x348] sm:$0xff]
        %v657 = vld [vmem:[#allocation8 + $0x350] sm:$0xff]
        %v658 = vld [vmem:[#allocation8 + $0x358] sm:$0xff]
        %v659 = vld [vmem:[#allocation8 + $0x360] sm:$0xff]
        %v660 = vld [vmem:[#allocation8 + $0x368] sm:$0xff]
        %v661 = vld [vmem:[#allocation8 + $0x370] sm:$0xff]
        %v662 = vld [vmem:[#allocation8 + $0x378] sm:$0xff]
        %v663 = vld [vmem:[#allocation8 + $0x380] sm:$0xff]
        %v664 = vld [vmem:[#allocation8 + $0x388] sm:$0xff]
        %v665 = vld [vmem:[#allocation8 + $0x390] sm:$0xff]
        %v666 = vld [vmem:[#allocation8 + $0x398] sm:$0xff]
        %v667 = vld [vmem:[#allocation8 + $0x3a0] sm:$0xff]
        %v668 = vld [vmem:[#allocation8 + $0x3a8] sm:$0xff]
        %v669 = vld [vmem:[#allocation8 + $0x3b0] sm:$0xff]
        %v670 = vld [vmem:[#allocation8 + $0x3b8] sm:$0xff]
        %v671 = vld [vmem:[#allocation8 + $0x3c0] sm:$0xff]
        %v672 = vld [vmem:[#allocation8 + $0x3c8] sm:$0xff]
        %v673 = vld [vmem:[#allocation8 + $0x3d0] sm:$0xff]
        %v674 = vld [vmem:[#allocation8 + $0x3d8] sm:$0xff]
        %v675 = vld [vmem:[#allocation8 + $0x3e0] sm:$0xff]
        %v676 = vld [vmem:[#allocation8 + $0x3e8] sm:$0xff]
        %v677 = vld [vmem:[#allocation8 + $0x3f0] sm:$0xff]
        %v678 = vld [vmem:[#allocation8 + $0x3f8] sm:$0xff]
        %v679 = vld [vmem:[#allocation8 + $0x400] sm:$0xff]
        %v680 = vld [vmem:[#allocation8 + $0x408] sm:$0xff]
        %v681 = vld [vmem:[#allocation8 + $0x410] sm:$0xff]
        %v682 = vld [vmem:[#allocation8 + $0x418] sm:$0xff]
        %v683 = vld [vmem:[#allocation8 + $0x420] sm:$0xff]
        %v684 = vld [vmem:[#allocation8 + $0x428] sm:$0xff]
        %v685 = vld [vmem:[#allocation8 + $0x430] sm:$0xff]
        %v686 = vld [vmem:[#allocation8 + $0x438] sm:$0xff]
        %v687 = vld [vmem:[#allocation8 + $0x440] sm:$0xff]
        %v688 = vld [vmem:[#allocation8 + $0x448] sm:$0xff]
        %v689 = vld [vmem:[#allocation8 + $0x450] sm:$0xff]
        %v690 = vld [vmem:[#allocation8 + $0x458] sm:$0xff]
        %v691 = vld [vmem:[#allocation8 + $0x460] sm:$0xff]
        %v692 = vld [vmem:[#allocation8 + $0x468] sm:$0xff]
        %v693 = vld [vmem:[#allocation8 + $0x470] sm:$0xff]
        %v694 = vld [vmem:[#allocation8 + $0x478] sm:$0xff]
        %v695 = vld [vmem:[#allocation8 + $0x480] sm:$0xff]
        %v696 = vld [vmem:[#allocation8 + $0x488] sm:$0xff]
        %v697 = vld [vmem:[#allocation8 + $0x490] sm:$0xff]
        %v698 = vld [vmem:[#allocation8 + $0x498] sm:$0xff]
        %v699 = vld [vmem:[#allocation8 + $0x4a0] sm:$0xff]
        %v700 = vld [vmem:[#allocation8 + $0x4a8] sm:$0xff]
        %v701 = vld [vmem:[#allocation8 + $0x4b0] sm:$0xff]
        %v702 = vld [vmem:[#allocation8 + $0x4b8] sm:$0xff]
        %v703 = vld [vmem:[#allocation8 + $0x4c0] sm:$0xff]
        %v704 = vld [vmem:[#allocation8 + $0x4c8] sm:$0xff]
        %v705 = vld [vmem:[#allocation8 + $0x4d0] sm:$0xff]
        %v706 = vld [vmem:[#allocation8 + $0x4d8] sm:$0xff]
        %v707 = vld [vmem:[#allocation8 + $0x4e0] sm:$0xff]
        %v708 = vld [vmem:[#allocation8 + $0x4e8] sm:$0xff]
        %v709 = vld [vmem:[#allocation8 + $0x4f0] sm:$0xff]
        %v710 = vld [vmem:[#allocation8 + $0x4f8] sm:$0xff]
        %v711 = vld [vmem:[#allocation8 + $0x500] sm:$0xff]
        %v712 = vld [vmem:[#allocation8 + $0x508] sm:$0xff]
        %v713 = vld [vmem:[#allocation8 + $0x510] sm:$0xff]
        %v714 = vld [vmem:[#allocation8 + $0x518] sm:$0xff]
        %v715 = vld [vmem:[#allocation8 + $0x520] sm:$0xff]
        %v716 = vld [vmem:[#allocation8 + $0x528] sm:$0xff]
        %v717 = vld [vmem:[#allocation8 + $0x530] sm:$0xff]
        %v718 = vld [vmem:[#allocation8 + $0x538] sm:$0xff]
        %v719 = vld [vmem:[#allocation8 + $0x540] sm:$0xff]
        %v720 = vld [vmem:[#allocation8 + $0x548] sm:$0xff]
        %v721 = vld [vmem:[#allocation8 + $0x550] sm:$0xff]
        %v722 = vld [vmem:[#allocation8 + $0x558] sm:$0xff]
        %v723 = vld [vmem:[#allocation8 + $0x560] sm:$0xff]
        %v724 = vld [vmem:[#allocation8 + $0x568] sm:$0xff]
        %v725 = vld [vmem:[#allocation8 + $0x570] sm:$0xff]
        %v726 = vld [vmem:[#allocation8 + $0x578] sm:$0xff]
        %v727 = vld [vmem:[#allocation8 + $0x580] sm:$0xff]
        %v728 = vld [vmem:[#allocation8 + $0x588] sm:$0xff]
        %v729 = vld [vmem:[#allocation8 + $0x590] sm:$0xff]
        %v730 = vld [vmem:[#allocation8 + $0x598] sm:$0xff]
        %v731 = vld [vmem:[#allocation8 + $0x5a0] sm:$0xff]
        %v732 = vld [vmem:[#allocation8 + $0x5a8] sm:$0xff]
        %v733 = vld [vmem:[#allocation8 + $0x5b0] sm:$0xff]
        %v734 = vld [vmem:[#allocation8 + $0x5b8] sm:$0xff]
        %v735 = vld [vmem:[#allocation8 + $0x5c0] sm:$0xff]
        %v736 = vld [vmem:[#allocation8 + $0x5c8] sm:$0xff]
        %v737 = vld [vmem:[#allocation8 + $0x5d0] sm:$0xff]
        %v738 = vld [vmem:[#allocation8 + $0x5d8] sm:$0xff]
        %v739 = vld [vmem:[#allocation8 + $0x5e0] sm:$0xff]
        %v740 = vld [vmem:[#allocation8 + $0x5e8] sm:$0xff]
        %v741 = vld [vmem:[#allocation8 + $0x5f0] sm:$0xff]
        %v742 = vld [vmem:[#allocation8 + $0x5f8] sm:$0xff]
        %v743 = vld [vmem:[#allocation8 + $0x600] sm:$0xff]
        %v744 = vld [vmem:[#allocation8 + $0x608] sm:$0xff]
        %v745 = vld [vmem:[#allocation8 + $0x610] sm:$0xff]
        %v746 = vld [vmem:[#allocation8 + $0x618] sm:$0xff]
        %v747 = vld [vmem:[#allocation8 + $0x620] sm:$0xff]
        %v748 = vld [vmem:[#allocation8 + $0x628] sm:$0xff]
        %v749 = vld [vmem:[#allocation8 + $0x630] sm:$0xff]
        %v750 = vld [vmem:[#allocation8 + $0x638] sm:$0xff]
        %v751 = vld [vmem:[#allocation8 + $0x640] sm:$0xff]
        %v752 = vld [vmem:[#allocation8 + $0x648] sm:$0xff]
        %v753 = vld [vmem:[#allocation8 + $0x650] sm:$0xff]
        %v754 = vld [vmem:[#allocation8 + $0x658] sm:$0xff]
        %v755 = vld [vmem:[#allocation8 + $0x660] sm:$0xff]
        %v756 = vld [vmem:[#allocation8 + $0x668] sm:$0xff]
        %v757 = vld [vmem:[#allocation8 + $0x670] sm:$0xff]
        %v758 = vld [vmem:[#allocation8 + $0x678] sm:$0xff]
        %v759 = vld [vmem:[#allocation8 + $0x680] sm:$0xff]
        %v760 = vld [vmem:[#allocation8 + $0x688] sm:$0xff]
        %v761 = vld [vmem:[#allocation8 + $0x690] sm:$0xff]
        %v762 = vld [vmem:[#allocation8 + $0x698] sm:$0xff]
        %v763 = vld [vmem:[#allocation8 + $0x6a0] sm:$0xff]
        %v764 = vld [vmem:[#allocation8 + $0x6a8] sm:$0xff]
        %v765 = vld [vmem:[#allocation8 + $0x6b0] sm:$0xff]
        %v766 = vld [vmem:[#allocation8 + $0x6b8] sm:$0xff]
        %v767 = vld [vmem:[#allocation8 + $0x6c0] sm:$0xff]
        %v768 = vld [vmem:[#allocation8 + $0x6c8] sm:$0xff]
        %v769 = vld [vmem:[#allocation8 + $0x6d0] sm:$0xff]
        %v770 = vld [vmem:[#allocation8 + $0x6d8] sm:$0xff]
        %v771 = vld [vmem:[#allocation8 + $0x6e0] sm:$0xff]
        %v772 = vld [vmem:[#allocation8 + $0x6e8] sm:$0xff]
        %v773 = vld [vmem:[#allocation8 + $0x6f0] sm:$0xff]
        %v774 = vld [vmem:[#allocation8 + $0x6f8] sm:$0xff]
        %v775 = vld [vmem:[#allocation8 + $0x700] sm:$0xff]
        %v776 = vld [vmem:[#allocation8 + $0x708] sm:$0xff]
        %v777 = vld [vmem:[#allocation8 + $0x710] sm:$0xff]
        %v778 = vld [vmem:[#allocation8 + $0x718] sm:$0xff]
        %v779 = vld [vmem:[#allocation8 + $0x720] sm:$0xff]
        %v780 = vld [vmem:[#allocation8 + $0x728] sm:$0xff]
        %v781 = vld [vmem:[#allocation8 + $0x730] sm:$0xff]
        %v782 = vld [vmem:[#allocation8 + $0x738] sm:$0xff]
        %v783 = vld [vmem:[#allocation8 + $0x740] sm:$0xff]
        %v784 = vld [vmem:[#allocation8 + $0x748] sm:$0xff]
        %v785 = vld [vmem:[#allocation8 + $0x750] sm:$0xff]
        %v786 = vld [vmem:[#allocation8 + $0x758] sm:$0xff]
        %v787 = vld [vmem:[#allocation8 + $0x760] sm:$0xff]
        %v788 = vld [vmem:[#allocation8 + $0x768] sm:$0xff]
        %v789 = vld [vmem:[#allocation8 + $0x770] sm:$0xff]
        %v790 = vld [vmem:[#allocation8 + $0x778] sm:$0xff]
        %v791 = vld [vmem:[#allocation8 + $0x780] sm:$0xff]
        %v792 = vld [vmem:[#allocation8 + $0x788] sm:$0xff]
        %v793 = vld [vmem:[#allocation8 + $0x790] sm:$0xff]
        %v794 = vld [vmem:[#allocation8 + $0x798] sm:$0xff]
        %v795 = vld [vmem:[#allocation8 + $0x7a0] sm:$0xff]
        %v796 = vld [vmem:[#allocation8 + $0x7a8] sm:$0xff]
        %v797 = vld [vmem:[#allocation8 + $0x7b0] sm:$0xff]
        %v798 = vld [vmem:[#allocation8 + $0x7b8] sm:$0xff]
        %v799 = vld [vmem:[#allocation8 + $0x7c0] sm:$0xff]
        %v800 = vld [vmem:[#allocation8 + $0x7c8] sm:$0xff]
        %v801 = vld [vmem:[#allocation8 + $0x7d0] sm:$0xff]
        %v802 = vld [vmem:[#allocation8 + $0x7d8] sm:$0xff]
        %v803 = vld [vmem:[#allocation8 + $0x7e0] sm:$0xff]
        %v804 = vld [vmem:[#allocation8 + $0x7e8] sm:$0xff]
        %v805 = vld [vmem:[#allocation8 + $0x7f0] sm:$0xff]
        %v806 = vld [vmem:[#allocation8 + $0x7f8] sm:$0xff]
        %v807 = vld [vmem:[#allocation8 + $0x800] sm:$0xff]
        %v808 = vld [vmem:[#allocation8 + $0x808] sm:$0xff]
        %v809 = vld [vmem:[#allocation8 + $0x810] sm:$0xff]
        %v810 = vld [vmem:[#allocation8 + $0x818] sm:$0xff]
        %v811 = vld [vmem:[#allocation8 + $0x820] sm:$0xff]
        %v812 = vld [vmem:[#allocation8 + $0x828] sm:$0xff]
        %v813 = vld [vmem:[#allocation8 + $0x830] sm:$0xff]
        %v814 = vld [vmem:[#allocation8 + $0x838] sm:$0xff]
        %v815 = vld [vmem:[#allocation8 + $0x840] sm:$0xff]
        %v816 = vld [vmem:[#allocation8 + $0x848] sm:$0xff]
        %v817 = vld [vmem:[#allocation8 + $0x850] sm:$0xff]
        %v818 = vld [vmem:[#allocation8 + $0x858] sm:$0xff]
        %v819 = vld [vmem:[#allocation8 + $0x860] sm:$0xff]
        %v820 = vld [vmem:[#allocation8 + $0x868] sm:$0xff]
        %v821 = vld [vmem:[#allocation8 + $0x870] sm:$0xff]
        %v822 = vld [vmem:[#allocation8 + $0x878] sm:$0xff]
        %v823 = vld [vmem:[#allocation8 + $0x880] sm:$0xff]
        %v824 = vld [vmem:[#allocation8 + $0x888] sm:$0xff]
        %v825 = vld [vmem:[#allocation8 + $0x890] sm:$0xff]
        %v826 = vld [vmem:[#allocation8 + $0x898] sm:$0xff]
        %v827 = vld [vmem:[#allocation8 + $0x8a0] sm:$0xff]
        %v828 = vld [vmem:[#allocation8 + $0x8a8] sm:$0xff]
        %v829 = vld [vmem:[#allocation8 + $0x8b0] sm:$0xff]
        %v830 = vld [vmem:[#allocation8 + $0x8b8] sm:$0xff]
        %v831 = vld [vmem:[#allocation8 + $0x8c0] sm:$0xff]
        %v832 = vld [vmem:[#allocation8 + $0x8c8] sm:$0xff]
        %v833 = vld [vmem:[#allocation8 + $0x8d0] sm:$0xff]
        %v834 = vld [vmem:[#allocation8 + $0x8d8] sm:$0xff]
        %v835 = vld [vmem:[#allocation8 + $0x8e0] sm:$0xff]
        %v836 = vld [vmem:[#allocation8 + $0x8e8] sm:$0xff]
        %v837 = vld [vmem:[#allocation8 + $0x8f0] sm:$0xff]
        %v838 = vld [vmem:[#allocation8 + $0x8f8] sm:$0xff]
        %v839 = vld [vmem:[#allocation7] ss:$8 sm:$0xf]
        %v840 = vld [vmem:[#allocation7] ss:$8 sm:$0x30]
        %v841 = vor.u32 %v839, %v840
        %v843 = vlaneseq
        %v844 = vshrl.u32 %v843, 7
        %v845 = vsub.s32 0, %v844
        %v846 = vrot.slane %v841, %v845
        %v847 = vlaneseq
        %v848 = vshrl.u32 %v847, 7
        %v849 = vsub.s32 1, %v848
        %v850 = vrot.slane %v841, %v849
        %v851 = vlaneseq
        %v852 = vshrl.u32 %v851, 7
        %v853 = vsub.s32 2, %v852
        %v854 = vrot.slane %v841, %v853
        %v855 = vlaneseq
        %v856 = vshrl.u32 %v855, 7
        %v857 = vsub.s32 3, %v856
        %v858 = vrot.slane %v841, %v857
        %v859 = vlaneseq
        %v860 = vshrl.u32 %v859, 7
        %v861 = vsub.s32 4, %v860
        %v862 = vrot.slane %v841, %v861
        %v863 = vlaneseq
        %v864 = vshrl.u32 %v863, 7
        %v865 = vsub.s32 5, %v864
        %v866 = vrot.slane %v841, %v865
        %v885 = vunpack.c.l.b16 %v539
        %v886 = vunpack.c.h.b16 %v539
        %v887 = vunpack.c.l.b16 %v540
        %v888 = vunpack.c.h.b16 %v540
        %v889 = vunpack.c.l.b16 %v541
        %v890 = vunpack.c.h.b16 %v541
        %v891 = vunpack.c.l.b16 %v542
        %v892 = vunpack.c.h.b16 %v542
        %v893 = vunpack.c.l.b16 %v543
        %v894 = vunpack.c.h.b16 %v543
        %v895 = vunpack.c.l.b16 %v544
        %v896 = vunpack.c.h.b16 %v544
        %v897 = vunpack.c.l.b16 %v545
        %v898 = vunpack.c.h.b16 %v545
        %v899 = vunpack.c.l.b16 %v546
        %v900 = vunpack.c.h.b16 %v546
        %v901 = vunpack.c.l.b16 %v547
        %v902 = vunpack.c.h.b16 %v547
        %v903 = vunpack.c.l.b16 %v548
        %v904 = vunpack.c.h.b16 %v548
        %v905 = vunpack.c.l.b16 %v549
        %v906 = vunpack.c.h.b16 %v549
        %v907 = vunpack.c.l.b16 %v550
        %v908 = vunpack.c.h.b16 %v550
        %v909 = vpack.c.b16 %v891, %v885
        %v910 = vpack.c.b16 %v892, %v886
        %v911 = vpack.c.b16 %v893, %v887
        %v912 = vpack.c.b16 %v894, %v888
        %v913 = vpack.c.b16 %v895, %v889
        %v914 = vpack.c.b16 %v896, %v890
        %v915 = vpack.c.b16 %v903, %v897
        %v916 = vpack.c.b16 %v904, %v898
        %v917 = vpack.c.b16 %v905, %v899
        %v918 = vpack.c.b16 %v906, %v900
        %v919 = vpack.c.b16 %v907, %v901
        %v920 = vpack.c.b16 %v908, %v902
        %v1221 = vunpack.c.l.b16 %v551
        %v1222 = vunpack.c.h.b16 %v551
        %v1223 = vunpack.c.l.b16 %v552
        %v1224 = vunpack.c.h.b16 %v552
        %v1225 = vunpack.c.l.b16 %v553
        %v1226 = vunpack.c.h.b16 %v553
        %v1227 = vunpack.c.l.b16 %v554
        %v1228 = vunpack.c.h.b16 %v554
        %v1229 = vunpack.c.l.b16 %v555
        %v1230 = vunpack.c.h.b16 %v555
        %v1231 = vunpack.c.l.b16 %v556
        %v1232 = vunpack.c.h.b16 %v556
        %v1233 = vunpack.c.l.b16 %v557
        %v1234 = vunpack.c.h.b16 %v557
        %v1235 = vunpack.c.l.b16 %v558
        %v1236 = vunpack.c.h.b16 %v558
        %v1237 = vunpack.c.l.b16 %v559
        %v1238 = vunpack.c.h.b16 %v559
        %v1239 = vunpack.c.l.b16 %v560
        %v1240 = vunpack.c.h.b16 %v560
        %v1241 = vunpack.c.l.b16 %v561
        %v1242 = vunpack.c.h.b16 %v561
        %v1243 = vunpack.c.l.b16 %v562
        %v1244 = vunpack.c.h.b16 %v562
        %v1245 = vunpack.c.l.b16 %v563
        %v1246 = vunpack.c.h.b16 %v563
        %v1247 = vunpack.c.l.b16 %v564
        %v1248 = vunpack.c.h.b16 %v564
        %v1249 = vunpack.c.l.b16 %v565
        %v1250 = vunpack.c.h.b16 %v565
        %v1251 = vunpack.c.l.b16 %v566
        %v1252 = vunpack.c.h.b16 %v566
        %v1253 = vunpack.c.l.b16 %v567
        %v1254 = vunpack.c.h.b16 %v567
        %v1255 = vunpack.c.l.b16 %v568
        %v1256 = vunpack.c.h.b16 %v568
        %v1257 = vunpack.c.l.b16 %v569
        %v1258 = vunpack.c.h.b16 %v569
        %v1259 = vunpack.c.l.b16 %v570
        %v1260 = vunpack.c.h.b16 %v570
        %v1261 = vunpack.c.l.b16 %v571
        %v1262 = vunpack.c.h.b16 %v571
        %v1263 = vunpack.c.l.b16 %v572
        %v1264 = vunpack.c.h.b16 %v572
        %v1265 = vunpack.c.l.b16 %v573
        %v1266 = vunpack.c.h.b16 %v573
        %v1267 = vunpack.c.l.b16 %v574
        %v1268 = vunpack.c.h.b16 %v574
        %v1269 = vunpack.c.l.b16 %v575
        %v1270 = vunpack.c.h.b16 %v575
        %v1271 = vunpack.c.l.b16 %v576
        %v1272 = vunpack.c.h.b16 %v576
        %v1273 = vunpack.c.l.b16 %v577
        %v1274 = vunpack.c.h.b16 %v577
        %v1275 = vunpack.c.l.b16 %v578
        %v1276 = vunpack.c.h.b16 %v578
        %v1277 = vunpack.c.l.b16 %v579
        %v1278 = vunpack.c.h.b16 %v579
        %v1279 = vunpack.c.l.b16 %v580
        %v1280 = vunpack.c.h.b16 %v580
        %v1281 = vunpack.c.l.b16 %v581
        %v1282 = vunpack.c.h.b16 %v581
        %v1283 = vunpack.c.l.b16 %v582
        %v1284 = vunpack.c.h.b16 %v582
        %v1285 = vunpack.c.l.b16 %v583
        %v1286 = vunpack.c.h.b16 %v583
        %v1287 = vunpack.c.l.b16 %v584
        %v1288 = vunpack.c.h.b16 %v584
        %v1289 = vunpack.c.l.b16 %v585
        %v1290 = vunpack.c.h.b16 %v585
        %v1291 = vunpack.c.l.b16 %v586
        %v1292 = vunpack.c.h.b16 %v586
        %v1293 = vunpack.c.l.b16 %v587
        %v1294 = vunpack.c.h.b16 %v587
        %v1295 = vunpack.c.l.b16 %v588
        %v1296 = vunpack.c.h.b16 %v588
        %v1297 = vunpack.c.l.b16 %v589
        %v1298 = vunpack.c.h.b16 %v589
        %v1299 = vunpack.c.l.b16 %v590
        %v1300 = vunpack.c.h.b16 %v590
        %v1301 = vunpack.c.l.b16 %v591
        %v1302 = vunpack.c.h.b16 %v591
        %v1303 = vunpack.c.l.b16 %v592
        %v1304 = vunpack.c.h.b16 %v592
        %v1305 = vunpack.c.l.b16 %v593
        %v1306 = vunpack.c.h.b16 %v593
        %v1307 = vunpack.c.l.b16 %v594
        %v1308 = vunpack.c.h.b16 %v594
        %v1309 = vunpack.c.l.b16 %v595
        %v1310 = vunpack.c.h.b16 %v595
        %v1311 = vunpack.c.l.b16 %v596
        %v1312 = vunpack.c.h.b16 %v596
        %v1313 = vunpack.c.l.b16 %v597
        %v1314 = vunpack.c.h.b16 %v597
        %v1315 = vunpack.c.l.b16 %v598
        %v1316 = vunpack.c.h.b16 %v598
        %v1317 = vunpack.c.l.b16 %v599
        %v1318 = vunpack.c.h.b16 %v599
        %v1319 = vunpack.c.l.b16 %v600
        %v1320 = vunpack.c.h.b16 %v600
        %v1321 = vunpack.c.l.b16 %v601
        %v1322 = vunpack.c.h.b16 %v601
        %v1323 = vunpack.c.l.b16 %v602
        %v1324 = vunpack.c.h.b16 %v602
        %v1325 = vunpack.c.l.b16 %v603
        %v1326 = vunpack.c.h.b16 %v603
        %v1327 = vunpack.c.l.b16 %v604
        %v1328 = vunpack.c.h.b16 %v604
        %v1329 = vunpack.c.l.b16 %v605
        %v1330 = vunpack.c.h.b16 %v605
        %v1331 = vunpack.c.l.b16 %v606
        %v1332 = vunpack.c.h.b16 %v606
        %v1333 = vunpack.c.l.b16 %v607
        %v1334 = vunpack.c.h.b16 %v607
        %v1335 = vunpack.c.l.b16 %v608
        %v1336 = vunpack.c.h.b16 %v608
        %v1337 = vunpack.c.l.b16 %v609
        %v1338 = vunpack.c.h.b16 %v609
        %v1339 = vunpack.c.l.b16 %v610
        %v1340 = vunpack.c.h.b16 %v610
        %v1341 = vunpack.c.l.b16 %v611
        %v1342 = vunpack.c.h.b16 %v611
        %v1343 = vunpack.c.l.b16 %v612
        %v1344 = vunpack.c.h.b16 %v612
        %v1345 = vunpack.c.l.b16 %v613
        %v1346 = vunpack.c.h.b16 %v613
        %v1347 = vunpack.c.l.b16 %v614
        %v1348 = vunpack.c.h.b16 %v614
        %v1349 = vunpack.c.l.b16 %v615
        %v1350 = vunpack.c.h.b16 %v615
        %v1351 = vunpack.c.l.b16 %v616
        %v1352 = vunpack.c.h.b16 %v616
        %v1353 = vunpack.c.l.b16 %v617
        %v1354 = vunpack.c.h.b16 %v617
        %v1355 = vunpack.c.l.b16 %v618
        %v1356 = vunpack.c.h.b16 %v618
        %v1357 = vunpack.c.l.b16 %v619
        %v1358 = vunpack.c.h.b16 %v619
        %v1359 = vunpack.c.l.b16 %v620
        %v1360 = vunpack.c.h.b16 %v620
        %v1361 = vunpack.c.l.b16 %v621
        %v1362 = vunpack.c.h.b16 %v621
        %v1363 = vunpack.c.l.b16 %v622
        %v1364 = vunpack.c.h.b16 %v622
        %v1365 = vunpack.c.l.b16 %v623
        %v1366 = vunpack.c.h.b16 %v623
        %v1367 = vunpack.c.l.b16 %v624
        %v1368 = vunpack.c.h.b16 %v624
        %v1369 = vunpack.c.l.b16 %v625
        %v1370 = vunpack.c.h.b16 %v625
        %v1371 = vunpack.c.l.b16 %v626
        %v1372 = vunpack.c.h.b16 %v626
        %v1373 = vunpack.c.l.b16 %v627
        %v1374 = vunpack.c.h.b16 %v627
        %v1375 = vunpack.c.l.b16 %v628
        %v1376 = vunpack.c.h.b16 %v628
        %v1377 = vunpack.c.l.b16 %v629
        %v1378 = vunpack.c.h.b16 %v629
        %v1379 = vunpack.c.l.b16 %v630
        %v1380 = vunpack.c.h.b16 %v630
        %v1381 = vunpack.c.l.b16 %v631
        %v1382 = vunpack.c.h.b16 %v631
        %v1383 = vunpack.c.l.b16 %v632
        %v1384 = vunpack.c.h.b16 %v632
        %v1385 = vunpack.c.l.b16 %v633
        %v1386 = vunpack.c.h.b16 %v633
        %v1387 = vunpack.c.l.b16 %v634
        %v1388 = vunpack.c.h.b16 %v634
        %v1389 = vunpack.c.l.b16 %v635
        %v1390 = vunpack.c.h.b16 %v635
        %v1391 = vunpack.c.l.b16 %v636
        %v1392 = vunpack.c.h.b16 %v636
        %v1393 = vunpack.c.l.b16 %v637
        %v1394 = vunpack.c.h.b16 %v637
        %v1395 = vunpack.c.l.b16 %v638
        %v1396 = vunpack.c.h.b16 %v638
        %v1397 = vunpack.c.l.b16 %v639
        %v1398 = vunpack.c.h.b16 %v639
        %v1399 = vunpack.c.l.b16 %v640
        %v1400 = vunpack.c.h.b16 %v640
        %v1401 = vunpack.c.l.b16 %v641
        %v1402 = vunpack.c.h.b16 %v641
        %v1403 = vunpack.c.l.b16 %v642
        %v1404 = vunpack.c.h.b16 %v642
        %v1405 = vunpack.c.l.b16 %v643
        %v1406 = vunpack.c.h.b16 %v643
        %v1407 = vunpack.c.l.b16 %v644
        %v1408 = vunpack.c.h.b16 %v644
        %v1409 = vunpack.c.l.b16 %v645
        %v1410 = vunpack.c.h.b16 %v645
        %v1411 = vunpack.c.l.b16 %v646
        %v1412 = vunpack.c.h.b16 %v646
        %v1413 = vunpack.c.l.b16 %v647
        %v1414 = vunpack.c.h.b16 %v647
        %v1415 = vunpack.c.l.b16 %v648
        %v1416 = vunpack.c.h.b16 %v648
        %v1417 = vunpack.c.l.b16 %v649
        %v1418 = vunpack.c.h.b16 %v649
        %v1419 = vunpack.c.l.b16 %v650
        %v1420 = vunpack.c.h.b16 %v650
        %v1421 = vunpack.c.l.b16 %v651
        %v1422 = vunpack.c.h.b16 %v651
        %v1423 = vunpack.c.l.b16 %v652
        %v1424 = vunpack.c.h.b16 %v652
        %v1425 = vunpack.c.l.b16 %v653
        %v1426 = vunpack.c.h.b16 %v653
        %v1427 = vunpack.c.l.b16 %v654
        %v1428 = vunpack.c.h.b16 %v654
        %v1429 = vunpack.c.l.b16 %v655
        %v1430 = vunpack.c.h.b16 %v655
        %v1431 = vunpack.c.l.b16 %v656
        %v1432 = vunpack.c.h.b16 %v656
        %v1433 = vunpack.c.l.b16 %v657
        %v1434 = vunpack.c.h.b16 %v657
        %v1435 = vunpack.c.l.b16 %v658
        %v1436 = vunpack.c.h.b16 %v658
        %v1437 = vunpack.c.l.b16 %v659
        %v1438 = vunpack.c.h.b16 %v659
        %v1439 = vunpack.c.l.b16 %v660
        %v1440 = vunpack.c.h.b16 %v660
        %v1441 = vunpack.c.l.b16 %v661
        %v1442 = vunpack.c.h.b16 %v661
        %v1443 = vunpack.c.l.b16 %v662
        %v1444 = vunpack.c.h.b16 %v662
        %v1445 = vunpack.c.l.b16 %v663
        %v1446 = vunpack.c.h.b16 %v663
        %v1447 = vunpack.c.l.b16 %v664
        %v1448 = vunpack.c.h.b16 %v664
        %v1449 = vunpack.c.l.b16 %v665
        %v1450 = vunpack.c.h.b16 %v665
        %v1451 = vunpack.c.l.b16 %v666
        %v1452 = vunpack.c.h.b16 %v666
        %v1453 = vunpack.c.l.b16 %v667
        %v1454 = vunpack.c.h.b16 %v667
        %v1455 = vunpack.c.l.b16 %v668
        %v1456 = vunpack.c.h.b16 %v668
        %v1457 = vunpack.c.l.b16 %v669
        %v1458 = vunpack.c.h.b16 %v669
        %v1459 = vunpack.c.l.b16 %v670
        %v1460 = vunpack.c.h.b16 %v670
        %v1461 = vunpack.c.l.b16 %v671
        %v1462 = vunpack.c.h.b16 %v671
        %v1463 = vunpack.c.l.b16 %v672
        %v1464 = vunpack.c.h.b16 %v672
        %v1465 = vunpack.c.l.b16 %v673
        %v1466 = vunpack.c.h.b16 %v673
        %v1467 = vunpack.c.l.b16 %v674
        %v1468 = vunpack.c.h.b16 %v674
        %v1469 = vunpack.c.l.b16 %v675
        %v1470 = vunpack.c.h.b16 %v675
        %v1471 = vunpack.c.l.b16 %v676
        %v1472 = vunpack.c.h.b16 %v676
        %v1473 = vunpack.c.l.b16 %v677
        %v1474 = vunpack.c.h.b16 %v677
        %v1475 = vunpack.c.l.b16 %v678
        %v1476 = vunpack.c.h.b16 %v678
        %v1477 = vunpack.c.l.b16 %v679
        %v1478 = vunpack.c.h.b16 %v679
        %v1479 = vunpack.c.l.b16 %v680
        %v1480 = vunpack.c.h.b16 %v680
        %v1481 = vunpack.c.l.b16 %v681
        %v1482 = vunpack.c.h.b16 %v681
        %v1483 = vunpack.c.l.b16 %v682
        %v1484 = vunpack.c.h.b16 %v682
        %v1485 = vunpack.c.l.b16 %v683
        %v1486 = vunpack.c.h.b16 %v683
        %v1487 = vunpack.c.l.b16 %v684
        %v1488 = vunpack.c.h.b16 %v684
        %v1489 = vunpack.c.l.b16 %v685
        %v1490 = vunpack.c.h.b16 %v685
        %v1491 = vunpack.c.l.b16 %v686
        %v1492 = vunpack.c.h.b16 %v686
        %v1493 = vunpack.c.l.b16 %v687
        %v1494 = vunpack.c.h.b16 %v687
        %v1495 = vunpack.c.l.b16 %v688
        %v1496 = vunpack.c.h.b16 %v688
        %v1497 = vunpack.c.l.b16 %v689
        %v1498 = vunpack.c.h.b16 %v689
        %v1499 = vunpack.c.l.b16 %v690
        %v1500 = vunpack.c.h.b16 %v690
        %v1501 = vunpack.c.l.b16 %v691
        %v1502 = vunpack.c.h.b16 %v691
        %v1503 = vunpack.c.l.b16 %v692
        %v1504 = vunpack.c.h.b16 %v692
        %v1505 = vunpack.c.l.b16 %v693
        %v1506 = vunpack.c.h.b16 %v693
        %v1507 = vunpack.c.l.b16 %v694
        %v1508 = vunpack.c.h.b16 %v694
        %v1509 = vunpack.c.l.b16 %v695
        %v1510 = vunpack.c.h.b16 %v695
        %v1511 = vunpack.c.l.b16 %v696
        %v1512 = vunpack.c.h.b16 %v696
        %v1513 = vunpack.c.l.b16 %v697
        %v1514 = vunpack.c.h.b16 %v697
        %v1515 = vunpack.c.l.b16 %v698
        %v1516 = vunpack.c.h.b16 %v698
        %v1517 = vunpack.c.l.b16 %v699
        %v1518 = vunpack.c.h.b16 %v699
        %v1519 = vunpack.c.l.b16 %v700
        %v1520 = vunpack.c.h.b16 %v700
        %v1521 = vunpack.c.l.b16 %v701
        %v1522 = vunpack.c.h.b16 %v701
        %v1523 = vunpack.c.l.b16 %v702
        %v1524 = vunpack.c.h.b16 %v702
        %v1525 = vunpack.c.l.b16 %v703
        %v1526 = vunpack.c.h.b16 %v703
        %v1527 = vunpack.c.l.b16 %v704
        %v1528 = vunpack.c.h.b16 %v704
        %v1529 = vunpack.c.l.b16 %v705
        %v1530 = vunpack.c.h.b16 %v705
        %v1531 = vunpack.c.l.b16 %v706
        %v1532 = vunpack.c.h.b16 %v706
        %v1533 = vunpack.c.l.b16 %v707
        %v1534 = vunpack.c.h.b16 %v707
        %v1535 = vunpack.c.l.b16 %v708
        %v1536 = vunpack.c.h.b16 %v708
        %v1537 = vunpack.c.l.b16 %v709
        %v1538 = vunpack.c.h.b16 %v709
        %v1539 = vunpack.c.l.b16 %v710
        %v1540 = vunpack.c.h.b16 %v710
        %v1541 = vunpack.c.l.b16 %v711
        %v1542 = vunpack.c.h.b16 %v711
        %v1543 = vunpack.c.l.b16 %v712
        %v1544 = vunpack.c.h.b16 %v712
        %v1545 = vunpack.c.l.b16 %v713
        %v1546 = vunpack.c.h.b16 %v713
        %v1547 = vunpack.c.l.b16 %v714
        %v1548 = vunpack.c.h.b16 %v714
        %v1549 = vunpack.c.l.b16 %v715
        %v1550 = vunpack.c.h.b16 %v715
        %v1551 = vunpack.c.l.b16 %v716
        %v1552 = vunpack.c.h.b16 %v716
        %v1553 = vunpack.c.l.b16 %v717
        %v1554 = vunpack.c.h.b16 %v717
        %v1555 = vunpack.c.l.b16 %v718
        %v1556 = vunpack.c.h.b16 %v718
        %v1557 = vunpack.c.l.b16 %v719
        %v1558 = vunpack.c.h.b16 %v719
        %v1559 = vunpack.c.l.b16 %v720
        %v1560 = vunpack.c.h.b16 %v720
        %v1561 = vunpack.c.l.b16 %v721
        %v1562 = vunpack.c.h.b16 %v721
        %v1563 = vunpack.c.l.b16 %v722
        %v1564 = vunpack.c.h.b16 %v722
        %v1565 = vunpack.c.l.b16 %v723
        %v1566 = vunpack.c.h.b16 %v723
        %v1567 = vunpack.c.l.b16 %v724
        %v1568 = vunpack.c.h.b16 %v724
        %v1569 = vunpack.c.l.b16 %v725
        %v1570 = vunpack.c.h.b16 %v725
        %v1571 = vunpack.c.l.b16 %v726
        %v1572 = vunpack.c.h.b16 %v726
        %v1573 = vunpack.c.l.b16 %v727
        %v1574 = vunpack.c.h.b16 %v727
        %v1575 = vunpack.c.l.b16 %v728
        %v1576 = vunpack.c.h.b16 %v728
        %v1577 = vunpack.c.l.b16 %v729
        %v1578 = vunpack.c.h.b16 %v729
        %v1579 = vunpack.c.l.b16 %v730
        %v1580 = vunpack.c.h.b16 %v730
        %v1581 = vunpack.c.l.b16 %v731
        %v1582 = vunpack.c.h.b16 %v731
        %v1583 = vunpack.c.l.b16 %v732
        %v1584 = vunpack.c.h.b16 %v732
        %v1585 = vunpack.c.l.b16 %v733
        %v1586 = vunpack.c.h.b16 %v733
        %v1587 = vunpack.c.l.b16 %v734
        %v1588 = vunpack.c.h.b16 %v734
        %v1589 = vunpack.c.l.b16 %v735
        %v1590 = vunpack.c.h.b16 %v735
        %v1591 = vunpack.c.l.b16 %v736
        %v1592 = vunpack.c.h.b16 %v736
        %v1593 = vunpack.c.l.b16 %v737
        %v1594 = vunpack.c.h.b16 %v737
        %v1595 = vunpack.c.l.b16 %v738
        %v1596 = vunpack.c.h.b16 %v738
        %v1597 = vunpack.c.l.b16 %v739
        %v1598 = vunpack.c.h.b16 %v739
        %v1599 = vunpack.c.l.b16 %v740
        %v1600 = vunpack.c.h.b16 %v740
        %v1601 = vunpack.c.l.b16 %v741
        %v1602 = vunpack.c.h.b16 %v741
        %v1603 = vunpack.c.l.b16 %v742
        %v1604 = vunpack.c.h.b16 %v742
        %v1605 = vunpack.c.l.b16 %v743
        %v1606 = vunpack.c.h.b16 %v743
        %v1607 = vunpack.c.l.b16 %v744
        %v1608 = vunpack.c.h.b16 %v744
        %v1609 = vunpack.c.l.b16 %v745
        %v1610 = vunpack.c.h.b16 %v745
        %v1611 = vunpack.c.l.b16 %v746
        %v1612 = vunpack.c.h.b16 %v746
        %v1613 = vunpack.c.l.b16 %v747
        %v1614 = vunpack.c.h.b16 %v747
        %v1615 = vunpack.c.l.b16 %v748
        %v1616 = vunpack.c.h.b16 %v748
        %v1617 = vunpack.c.l.b16 %v749
        %v1618 = vunpack.c.h.b16 %v749
        %v1619 = vunpack.c.l.b16 %v750
        %v1620 = vunpack.c.h.b16 %v750
        %v1621 = vunpack.c.l.b16 %v751
        %v1622 = vunpack.c.h.b16 %v751
        %v1623 = vunpack.c.l.b16 %v752
        %v1624 = vunpack.c.h.b16 %v752
        %v1625 = vunpack.c.l.b16 %v753
        %v1626 = vunpack.c.h.b16 %v753
        %v1627 = vunpack.c.l.b16 %v754
        %v1628 = vunpack.c.h.b16 %v754
        %v1629 = vunpack.c.l.b16 %v755
        %v1630 = vunpack.c.h.b16 %v755
        %v1631 = vunpack.c.l.b16 %v756
        %v1632 = vunpack.c.h.b16 %v756
        %v1633 = vunpack.c.l.b16 %v757
        %v1634 = vunpack.c.h.b16 %v757
        %v1635 = vunpack.c.l.b16 %v758
        %v1636 = vunpack.c.h.b16 %v758
        %v1637 = vunpack.c.l.b16 %v759
        %v1638 = vunpack.c.h.b16 %v759
        %v1639 = vunpack.c.l.b16 %v760
        %v1640 = vunpack.c.h.b16 %v760
        %v1641 = vunpack.c.l.b16 %v761
        %v1642 = vunpack.c.h.b16 %v761
        %v1643 = vunpack.c.l.b16 %v762
        %v1644 = vunpack.c.h.b16 %v762
        %v1645 = vunpack.c.l.b16 %v763
        %v1646 = vunpack.c.h.b16 %v763
        %v1647 = vunpack.c.l.b16 %v764
        %v1648 = vunpack.c.h.b16 %v764
        %v1649 = vunpack.c.l.b16 %v765
        %v1650 = vunpack.c.h.b16 %v765
        %v1651 = vunpack.c.l.b16 %v766
        %v1652 = vunpack.c.h.b16 %v766
        %v1653 = vunpack.c.l.b16 %v767
        %v1654 = vunpack.c.h.b16 %v767
        %v1655 = vunpack.c.l.b16 %v768
        %v1656 = vunpack.c.h.b16 %v768
        %v1657 = vunpack.c.l.b16 %v769
        %v1658 = vunpack.c.h.b16 %v769
        %v1659 = vunpack.c.l.b16 %v770
        %v1660 = vunpack.c.h.b16 %v770
        %v1661 = vunpack.c.l.b16 %v771
        %v1662 = vunpack.c.h.b16 %v771
        %v1663 = vunpack.c.l.b16 %v772
        %v1664 = vunpack.c.h.b16 %v772
        %v1665 = vunpack.c.l.b16 %v773
        %v1666 = vunpack.c.h.b16 %v773
        %v1667 = vunpack.c.l.b16 %v774
        %v1668 = vunpack.c.h.b16 %v774
        %v1669 = vunpack.c.l.b16 %v775
        %v1670 = vunpack.c.h.b16 %v775
        %v1671 = vunpack.c.l.b16 %v776
        %v1672 = vunpack.c.h.b16 %v776
        %v1673 = vunpack.c.l.b16 %v777
        %v1674 = vunpack.c.h.b16 %v777
        %v1675 = vunpack.c.l.b16 %v778
        %v1676 = vunpack.c.h.b16 %v778
        %v1677 = vunpack.c.l.b16 %v779
        %v1678 = vunpack.c.h.b16 %v779
        %v1679 = vunpack.c.l.b16 %v780
        %v1680 = vunpack.c.h.b16 %v780
        %v1681 = vunpack.c.l.b16 %v781
        %v1682 = vunpack.c.h.b16 %v781
        %v1683 = vunpack.c.l.b16 %v782
        %v1684 = vunpack.c.h.b16 %v782
        %v1685 = vunpack.c.l.b16 %v783
        %v1686 = vunpack.c.h.b16 %v783
        %v1687 = vunpack.c.l.b16 %v784
        %v1688 = vunpack.c.h.b16 %v784
        %v1689 = vunpack.c.l.b16 %v785
        %v1690 = vunpack.c.h.b16 %v785
        %v1691 = vunpack.c.l.b16 %v786
        %v1692 = vunpack.c.h.b16 %v786
        %v1693 = vunpack.c.l.b16 %v787
        %v1694 = vunpack.c.h.b16 %v787
        %v1695 = vunpack.c.l.b16 %v788
        %v1696 = vunpack.c.h.b16 %v788
        %v1697 = vunpack.c.l.b16 %v789
        %v1698 = vunpack.c.h.b16 %v789
        %v1699 = vunpack.c.l.b16 %v790
        %v1700 = vunpack.c.h.b16 %v790
        %v1701 = vunpack.c.l.b16 %v791
        %v1702 = vunpack.c.h.b16 %v791
        %v1703 = vunpack.c.l.b16 %v792
        %v1704 = vunpack.c.h.b16 %v792
        %v1705 = vunpack.c.l.b16 %v793
        %v1706 = vunpack.c.h.b16 %v793
        %v1707 = vunpack.c.l.b16 %v794
        %v1708 = vunpack.c.h.b16 %v794
        %v1709 = vunpack.c.l.b16 %v795
        %v1710 = vunpack.c.h.b16 %v795
        %v1711 = vunpack.c.l.b16 %v796
        %v1712 = vunpack.c.h.b16 %v796
        %v1713 = vunpack.c.l.b16 %v797
        %v1714 = vunpack.c.h.b16 %v797
        %v1715 = vunpack.c.l.b16 %v798
        %v1716 = vunpack.c.h.b16 %v798
        %v1717 = vunpack.c.l.b16 %v799
        %v1718 = vunpack.c.h.b16 %v799
        %v1719 = vunpack.c.l.b16 %v800
        %v1720 = vunpack.c.h.b16 %v800
        %v1721 = vunpack.c.l.b16 %v801
        %v1722 = vunpack.c.h.b16 %v801
        %v1723 = vunpack.c.l.b16 %v802
        %v1724 = vunpack.c.h.b16 %v802
        %v1725 = vunpack.c.l.b16 %v803
        %v1726 = vunpack.c.h.b16 %v803
        %v1727 = vunpack.c.l.b16 %v804
        %v1728 = vunpack.c.h.b16 %v804
        %v1729 = vunpack.c.l.b16 %v805
        %v1730 = vunpack.c.h.b16 %v805
        %v1731 = vunpack.c.l.b16 %v806
        %v1732 = vunpack.c.h.b16 %v806
        %v1733 = vunpack.c.l.b16 %v807
        %v1734 = vunpack.c.h.b16 %v807
        %v1735 = vunpack.c.l.b16 %v808
        %v1736 = vunpack.c.h.b16 %v808
        %v1737 = vunpack.c.l.b16 %v809
        %v1738 = vunpack.c.h.b16 %v809
        %v1739 = vunpack.c.l.b16 %v810
        %v1740 = vunpack.c.h.b16 %v810
        %v1741 = vunpack.c.l.b16 %v811
        %v1742 = vunpack.c.h.b16 %v811
        %v1743 = vunpack.c.l.b16 %v812
        %v1744 = vunpack.c.h.b16 %v812
        %v1745 = vunpack.c.l.b16 %v813
        %v1746 = vunpack.c.h.b16 %v813
        %v1747 = vunpack.c.l.b16 %v814
        %v1748 = vunpack.c.h.b16 %v814
        %v1749 = vunpack.c.l.b16 %v815
        %v1750 = vunpack.c.h.b16 %v815
        %v1751 = vunpack.c.l.b16 %v816
        %v1752 = vunpack.c.h.b16 %v816
        %v1753 = vunpack.c.l.b16 %v817
        %v1754 = vunpack.c.h.b16 %v817
        %v1755 = vunpack.c.l.b16 %v818
        %v1756 = vunpack.c.h.b16 %v818
        %v1757 = vunpack.c.l.b16 %v819
        %v1758 = vunpack.c.h.b16 %v819
        %v1759 = vunpack.c.l.b16 %v820
        %v1760 = vunpack.c.h.b16 %v820
        %v1761 = vunpack.c.l.b16 %v821
        %v1762 = vunpack.c.h.b16 %v821
        %v1763 = vunpack.c.l.b16 %v822
        %v1764 = vunpack.c.h.b16 %v822
        %v1765 = vunpack.c.l.b16 %v823
        %v1766 = vunpack.c.h.b16 %v823
        %v1767 = vunpack.c.l.b16 %v824
        %v1768 = vunpack.c.h.b16 %v824
        %v1769 = vunpack.c.l.b16 %v825
        %v1770 = vunpack.c.h.b16 %v825
        %v1771 = vunpack.c.l.b16 %v826
        %v1772 = vunpack.c.h.b16 %v826
        %v1773 = vunpack.c.l.b16 %v827
        %v1774 = vunpack.c.h.b16 %v827
        %v1775 = vunpack.c.l.b16 %v828
        %v1776 = vunpack.c.h.b16 %v828
        %v1777 = vunpack.c.l.b16 %v829
        %v1778 = vunpack.c.h.b16 %v829
        %v1779 = vunpack.c.l.b16 %v830
        %v1780 = vunpack.c.h.b16 %v830
        %v1781 = vunpack.c.l.b16 %v831
        %v1782 = vunpack.c.h.b16 %v831
        %v1783 = vunpack.c.l.b16 %v832
        %v1784 = vunpack.c.h.b16 %v832
        %v1785 = vunpack.c.l.b16 %v833
        %v1786 = vunpack.c.h.b16 %v833
        %v1787 = vunpack.c.l.b16 %v834
        %v1788 = vunpack.c.h.b16 %v834
        %v1789 = vunpack.c.l.b16 %v835
        %v1790 = vunpack.c.h.b16 %v835
        %v1791 = vunpack.c.l.b16 %v836
        %v1792 = vunpack.c.h.b16 %v836
        %v1793 = vunpack.c.l.b16 %v837
        %v1794 = vunpack.c.h.b16 %v837
        %v1795 = vunpack.c.l.b16 %v838
        %v1796 = vunpack.c.h.b16 %v838
        %v1797 = vpack.c.b16 %v1227, %v1221
        %v1798 = vpack.c.b16 %v1228, %v1222
        %v1799 = vpack.c.b16 %v1229, %v1223
        %v1800 = vpack.c.b16 %v1230, %v1224
        %v1801 = vpack.c.b16 %v1231, %v1225
        %v1802 = vpack.c.b16 %v1232, %v1226
        %v1803 = vpack.c.b16 %v1239, %v1233
        %v1804 = vpack.c.b16 %v1240, %v1234
        %v1805 = vpack.c.b16 %v1241, %v1235
        %v1806 = vpack.c.b16 %v1242, %v1236
        %v1807 = vpack.c.b16 %v1243, %v1237
        %v1808 = vpack.c.b16 %v1244, %v1238
        %v1809 = vpack.c.b16 %v1251, %v1245
        %v1810 = vpack.c.b16 %v1252, %v1246
        %v1811 = vpack.c.b16 %v1253, %v1247
        %v1812 = vpack.c.b16 %v1254, %v1248
        %v1813 = vpack.c.b16 %v1255, %v1249
        %v1814 = vpack.c.b16 %v1256, %v1250
        %v1815 = vpack.c.b16 %v1263, %v1257
        %v1816 = vpack.c.b16 %v1264, %v1258
        %v1817 = vpack.c.b16 %v1265, %v1259
        %v1818 = vpack.c.b16 %v1266, %v1260
        %v1819 = vpack.c.b16 %v1267, %v1261
        %v1820 = vpack.c.b16 %v1268, %v1262
        %v1821 = vpack.c.b16 %v1275, %v1269
        %v1822 = vpack.c.b16 %v1276, %v1270
        %v1823 = vpack.c.b16 %v1277, %v1271
        %v1824 = vpack.c.b16 %v1278, %v1272
        %v1825 = vpack.c.b16 %v1279, %v1273
        %v1826 = vpack.c.b16 %v1280, %v1274
        %v1827 = vpack.c.b16 %v1287, %v1281
        %v1828 = vpack.c.b16 %v1288, %v1282
        %v1829 = vpack.c.b16 %v1289, %v1283
        %v1830 = vpack.c.b16 %v1290, %v1284
        %v1831 = vpack.c.b16 %v1291, %v1285
        %v1832 = vpack.c.b16 %v1292, %v1286
        %v1833 = vpack.c.b16 %v1299, %v1293
        %v1834 = vpack.c.b16 %v1300, %v1294
        %v1835 = vpack.c.b16 %v1301, %v1295
        %v1836 = vpack.c.b16 %v1302, %v1296
        %v1837 = vpack.c.b16 %v1303, %v1297
        %v1838 = vpack.c.b16 %v1304, %v1298
        %v1839 = vpack.c.b16 %v1311, %v1305
        %v1840 = vpack.c.b16 %v1312, %v1306
        %v1841 = vpack.c.b16 %v1313, %v1307
        %v1842 = vpack.c.b16 %v1314, %v1308
        %v1843 = vpack.c.b16 %v1315, %v1309
        %v1844 = vpack.c.b16 %v1316, %v1310
        %v1845 = vpack.c.b16 %v1323, %v1317
        %v1846 = vpack.c.b16 %v1324, %v1318
        %v1847 = vpack.c.b16 %v1325, %v1319
        %v1848 = vpack.c.b16 %v1326, %v1320
        %v1849 = vpack.c.b16 %v1327, %v1321
        %v1850 = vpack.c.b16 %v1328, %v1322
        %v1851 = vpack.c.b16 %v1335, %v1329
        %v1852 = vpack.c.b16 %v1336, %v1330
        %v1853 = vpack.c.b16 %v1337, %v1331
        %v1854 = vpack.c.b16 %v1338, %v1332
        %v1855 = vpack.c.b16 %v1339, %v1333
        %v1856 = vpack.c.b16 %v1340, %v1334
        %v1857 = vpack.c.b16 %v1347, %v1341
        %v1858 = vpack.c.b16 %v1348, %v1342
        %v1859 = vpack.c.b16 %v1349, %v1343
        %v1860 = vpack.c.b16 %v1350, %v1344
        %v1861 = vpack.c.b16 %v1351, %v1345
        %v1862 = vpack.c.b16 %v1352, %v1346
        %v1863 = vpack.c.b16 %v1359, %v1353
        %v1864 = vpack.c.b16 %v1360, %v1354
        %v1865 = vpack.c.b16 %v1361, %v1355
        %v1866 = vpack.c.b16 %v1362, %v1356
        %v1867 = vpack.c.b16 %v1363, %v1357
        %v1868 = vpack.c.b16 %v1364, %v1358
        %v1869 = vpack.c.b16 %v1371, %v1365
        %v1870 = vpack.c.b16 %v1372, %v1366
        %v1871 = vpack.c.b16 %v1373, %v1367
        %v1872 = vpack.c.b16 %v1374, %v1368
        %v1873 = vpack.c.b16 %v1375, %v1369
        %v1874 = vpack.c.b16 %v1376, %v1370
        %v1875 = vpack.c.b16 %v1383, %v1377
        %v1876 = vpack.c.b16 %v1384, %v1378
        %v1877 = vpack.c.b16 %v1385, %v1379
        %v1878 = vpack.c.b16 %v1386, %v1380
        %v1879 = vpack.c.b16 %v1387, %v1381
        %v1880 = vpack.c.b16 %v1388, %v1382
        %v1881 = vpack.c.b16 %v1395, %v1389
        %v1882 = vpack.c.b16 %v1396, %v1390
        %v1883 = vpack.c.b16 %v1397, %v1391
        %v1884 = vpack.c.b16 %v1398, %v1392
        %v1885 = vpack.c.b16 %v1399, %v1393
        %v1886 = vpack.c.b16 %v1400, %v1394
        %v1887 = vpack.c.b16 %v1407, %v1401
        %v1888 = vpack.c.b16 %v1408, %v1402
        %v1889 = vpack.c.b16 %v1409, %v1403
        %v1890 = vpack.c.b16 %v1410, %v1404
        %v1891 = vpack.c.b16 %v1411, %v1405
        %v1892 = vpack.c.b16 %v1412, %v1406
        %v1893 = vpack.c.b16 %v1419, %v1413
        %v1894 = vpack.c.b16 %v1420, %v1414
        %v1895 = vpack.c.b16 %v1421, %v1415
        %v1896 = vpack.c.b16 %v1422, %v1416
        %v1897 = vpack.c.b16 %v1423, %v1417
        %v1898 = vpack.c.b16 %v1424, %v1418
        %v1899 = vpack.c.b16 %v1431, %v1425
        %v1900 = vpack.c.b16 %v1432, %v1426
        %v1901 = vpack.c.b16 %v1433, %v1427
        %v1902 = vpack.c.b16 %v1434, %v1428
        %v1903 = vpack.c.b16 %v1435, %v1429
        %v1904 = vpack.c.b16 %v1436, %v1430
        %v1905 = vpack.c.b16 %v1443, %v1437
        %v1906 = vpack.c.b16 %v1444, %v1438
        %v1907 = vpack.c.b16 %v1445, %v1439
        %v1908 = vpack.c.b16 %v1446, %v1440
        %v1909 = vpack.c.b16 %v1447, %v1441
        %v1910 = vpack.c.b16 %v1448, %v1442
        %v1911 = vpack.c.b16 %v1455, %v1449
        %v1912 = vpack.c.b16 %v1456, %v1450
        %v1913 = vpack.c.b16 %v1457, %v1451
        %v1914 = vpack.c.b16 %v1458, %v1452
        %v1915 = vpack.c.b16 %v1459, %v1453
        %v1916 = vpack.c.b16 %v1460, %v1454
        %v1917 = vpack.c.b16 %v1467, %v1461
        %v1918 = vpack.c.b16 %v1468, %v1462
        %v1919 = vpack.c.b16 %v1469, %v1463
        %v1920 = vpack.c.b16 %v1470, %v1464
        %v1921 = vpack.c.b16 %v1471, %v1465
        %v1922 = vpack.c.b16 %v1472, %v1466
        %v1923 = vpack.c.b16 %v1479, %v1473
        %v1924 = vpack.c.b16 %v1480, %v1474
        %v1925 = vpack.c.b16 %v1481, %v1475
        %v1926 = vpack.c.b16 %v1482, %v1476
        %v1927 = vpack.c.b16 %v1483, %v1477
        %v1928 = vpack.c.b16 %v1484, %v1478
        %v1929 = vpack.c.b16 %v1491, %v1485
        %v1930 = vpack.c.b16 %v1492, %v1486
        %v1931 = vpack.c.b16 %v1493, %v1487
        %v1932 = vpack.c.b16 %v1494, %v1488
        %v1933 = vpack.c.b16 %v1495, %v1489
        %v1934 = vpack.c.b16 %v1496, %v1490
        %v1935 = vpack.c.b16 %v1503, %v1497
        %v1936 = vpack.c.b16 %v1504, %v1498
        %v1937 = vpack.c.b16 %v1505, %v1499
        %v1938 = vpack.c.b16 %v1506, %v1500
        %v1939 = vpack.c.b16 %v1507, %v1501
        %v1940 = vpack.c.b16 %v1508, %v1502
        %v1941 = vpack.c.b16 %v1515, %v1509
        %v1942 = vpack.c.b16 %v1516, %v1510
        %v1943 = vpack.c.b16 %v1517, %v1511
        %v1944 = vpack.c.b16 %v1518, %v1512
        %v1945 = vpack.c.b16 %v1519, %v1513
        %v1946 = vpack.c.b16 %v1520, %v1514
        %v1947 = vpack.c.b16 %v1527, %v1521
        %v1948 = vpack.c.b16 %v1528, %v1522
        %v1949 = vpack.c.b16 %v1529, %v1523
        %v1950 = vpack.c.b16 %v1530, %v1524
        %v1951 = vpack.c.b16 %v1531, %v1525
        %v1952 = vpack.c.b16 %v1532, %v1526
        %v1953 = vpack.c.b16 %v1539, %v1533
        %v1954 = vpack.c.b16 %v1540, %v1534
        %v1955 = vpack.c.b16 %v1541, %v1535
        %v1956 = vpack.c.b16 %v1542, %v1536
        %v1957 = vpack.c.b16 %v1543, %v1537
        %v1958 = vpack.c.b16 %v1544, %v1538
        %v1959 = vpack.c.b16 %v1551, %v1545
        %v1960 = vpack.c.b16 %v1552, %v1546
        %v1961 = vpack.c.b16 %v1553, %v1547
        %v1962 = vpack.c.b16 %v1554, %v1548
        %v1963 = vpack.c.b16 %v1555, %v1549
        %v1964 = vpack.c.b16 %v1556, %v1550
        %v1965 = vpack.c.b16 %v1563, %v1557
        %v1966 = vpack.c.b16 %v1564, %v1558
        %v1967 = vpack.c.b16 %v1565, %v1559
        %v1968 = vpack.c.b16 %v1566, %v1560
        %v1969 = vpack.c.b16 %v1567, %v1561
        %v1970 = vpack.c.b16 %v1568, %v1562
        %v1971 = vpack.c.b16 %v1575, %v1569
        %v1972 = vpack.c.b16 %v1576, %v1570
        %v1973 = vpack.c.b16 %v1577, %v1571
        %v1974 = vpack.c.b16 %v1578, %v1572
        %v1975 = vpack.c.b16 %v1579, %v1573
        %v1976 = vpack.c.b16 %v1580, %v1574
        %v1977 = vpack.c.b16 %v1587, %v1581
        %v1978 = vpack.c.b16 %v1588, %v1582
        %v1979 = vpack.c.b16 %v1589, %v1583
        %v1980 = vpack.c.b16 %v1590, %v1584
        %v1981 = vpack.c.b16 %v1591, %v1585
        %v1982 = vpack.c.b16 %v1592, %v1586
        %v1983 = vpack.c.b16 %v1599, %v1593
        %v1984 = vpack.c.b16 %v1600, %v1594
        %v1985 = vpack.c.b16 %v1601, %v1595
        %v1986 = vpack.c.b16 %v1602, %v1596
        %v1987 = vpack.c.b16 %v1603, %v1597
        %v1988 = vpack.c.b16 %v1604, %v1598
        %v1989 = vpack.c.b16 %v1611, %v1605
        %v1990 = vpack.c.b16 %v1612, %v1606
        %v1991 = vpack.c.b16 %v1613, %v1607
        %v1992 = vpack.c.b16 %v1614, %v1608
        %v1993 = vpack.c.b16 %v1615, %v1609
        %v1994 = vpack.c.b16 %v1616, %v1610
        %v1995 = vpack.c.b16 %v1623, %v1617
        %v1996 = vpack.c.b16 %v1624, %v1618
        %v1997 = vpack.c.b16 %v1625, %v1619
        %v1998 = vpack.c.b16 %v1626, %v1620
        %v1999 = vpack.c.b16 %v1627, %v1621
        %v2000 = vpack.c.b16 %v1628, %v1622
        %v2001 = vpack.c.b16 %v1635, %v1629
        %v2002 = vpack.c.b16 %v1636, %v1630
        %v2003 = vpack.c.b16 %v1637, %v1631
        %v2004 = vpack.c.b16 %v1638, %v1632
        %v2005 = vpack.c.b16 %v1639, %v1633
        %v2006 = vpack.c.b16 %v1640, %v1634
        %v2007 = vpack.c.b16 %v1647, %v1641
        %v2008 = vpack.c.b16 %v1648, %v1642
        %v2009 = vpack.c.b16 %v1649, %v1643
        %v2010 = vpack.c.b16 %v1650, %v1644
        %v2011 = vpack.c.b16 %v1651, %v1645
        %v2012 = vpack.c.b16 %v1652, %v1646
        %v2013 = vpack.c.b16 %v1659, %v1653
        %v2014 = vpack.c.b16 %v1660, %v1654
        %v2015 = vpack.c.b16 %v1661, %v1655
        %v2016 = vpack.c.b16 %v1662, %v1656
        %v2017 = vpack.c.b16 %v1663, %v1657
        %v2018 = vpack.c.b16 %v1664, %v1658
        %v2019 = vpack.c.b16 %v1671, %v1665
        %v2020 = vpack.c.b16 %v1672, %v1666
        %v2021 = vpack.c.b16 %v1673, %v1667
        %v2022 = vpack.c.b16 %v1674, %v1668
        %v2023 = vpack.c.b16 %v1675, %v1669
        %v2024 = vpack.c.b16 %v1676, %v1670
        %v2025 = vpack.c.b16 %v1683, %v1677
        %v2026 = vpack.c.b16 %v1684, %v1678
        %v2027 = vpack.c.b16 %v1685, %v1679
        %v2028 = vpack.c.b16 %v1686, %v1680
        %v2029 = vpack.c.b16 %v1687, %v1681
        %v2030 = vpack.c.b16 %v1688, %v1682
        %v2031 = vpack.c.b16 %v1695, %v1689
        %v2032 = vpack.c.b16 %v1696, %v1690
        %v2033 = vpack.c.b16 %v1697, %v1691
        %v2034 = vpack.c.b16 %v1698, %v1692
        %v2035 = vpack.c.b16 %v1699, %v1693
        %v2036 = vpack.c.b16 %v1700, %v1694
        %v2037 = vpack.c.b16 %v1707, %v1701
        %v2038 = vpack.c.b16 %v1708, %v1702
        %v2039 = vpack.c.b16 %v1709, %v1703
        %v2040 = vpack.c.b16 %v1710, %v1704
        %v2041 = vpack.c.b16 %v1711, %v1705
        %v2042 = vpack.c.b16 %v1712, %v1706
        %v2043 = vpack.c.b16 %v1719, %v1713
        %v2044 = vpack.c.b16 %v1720, %v1714
        %v2045 = vpack.c.b16 %v1721, %v1715
        %v2046 = vpack.c.b16 %v1722, %v1716
        %v2047 = vpack.c.b16 %v1723, %v1717
        %v2048 = vpack.c.b16 %v1724, %v1718
        %v2049 = vpack.c.b16 %v1731, %v1725
        %v2050 = vpack.c.b16 %v1732, %v1726
        %v2051 = vpack.c.b16 %v1733, %v1727
        %v2052 = vpack.c.b16 %v1734, %v1728
        %v2053 = vpack.c.b16 %v1735, %v1729
        %v2054 = vpack.c.b16 %v1736, %v1730
        %v2055 = vpack.c.b16 %v1743, %v1737
        %v2056 = vpack.c.b16 %v1744, %v1738
        %v2057 = vpack.c.b16 %v1745, %v1739
        %v2058 = vpack.c.b16 %v1746, %v1740
        %v2059 = vpack.c.b16 %v1747, %v1741
        %v2060 = vpack.c.b16 %v1748, %v1742
        %v2061 = vpack.c.b16 %v1755, %v1749
        %v2062 = vpack.c.b16 %v1756, %v1750
        %v2063 = vpack.c.b16 %v1757, %v1751
        %v2064 = vpack.c.b16 %v1758, %v1752
        %v2065 = vpack.c.b16 %v1759, %v1753
        %v2066 = vpack.c.b16 %v1760, %v1754
        %v2067 = vpack.c.b16 %v1767, %v1761
        %v2068 = vpack.c.b16 %v1768, %v1762
        %v2069 = vpack.c.b16 %v1769, %v1763
        %v2070 = vpack.c.b16 %v1770, %v1764
        %v2071 = vpack.c.b16 %v1771, %v1765
        %v2072 = vpack.c.b16 %v1772, %v1766
        %v2073 = vpack.c.b16 %v1779, %v1773
        %v2074 = vpack.c.b16 %v1780, %v1774
        %v2075 = vpack.c.b16 %v1781, %v1775
        %v2076 = vpack.c.b16 %v1782, %v1776
        %v2077 = vpack.c.b16 %v1783, %v1777
        %v2078 = vpack.c.b16 %v1784, %v1778
        %v2079 = vpack.c.b16 %v1791, %v1785
        %v2080 = vpack.c.b16 %v1792, %v1786
        %v2081 = vpack.c.b16 %v1793, %v1787
        %v2082 = vpack.c.b16 %v1794, %v1788
        %v2083 = vpack.c.b16 %v1795, %v1789
        %v2084 = vpack.c.b16 %v1796, %v1790
        %2373 = vmatprep.subr.bf16.mxu0 %v1798
        %2374 = vmatpush1.bf16.msra.mxu0 %v1797
        %2375 = vmatprep.subr.bf16.mxu0 %v1804
        %2376 = vmatpush1.bf16.msra.mxu0 %v1803
        %2377 = vmatprep.subr.bf16.mxu0 %v1810
        %2378 = vmatpush1.bf16.msra.mxu0 %v1809
        %2379 = vmatprep.subr.bf16.mxu0 %v1816
        %2380 = vmatpush1.bf16.msra.mxu0 %v1815
        %2381 = vmatprep.subr.bf16.mxu0 %v1822
        %2382 = vmatpush1.bf16.msra.mxu0 %v1821
        %2383 = vmatprep.subr.bf16.mxu0 %v1828
        %2384 = vmatpush1.bf16.msra.mxu0 %v1827
        %2385 = vmatprep.subr.bf16.mxu0 %v1834
        %2386 = vmatpush1.bf16.msra.mxu0 %v1833
        %2387 = vmatprep.subr.bf16.mxu0 %v1840
        %2388 = vmatpush1.bf16.msra.mxu0 %v1839
        %2389 = vmatprep.subr.bf16.mxu0 %v1846
        %2390 = vmatpush1.bf16.msra.mxu0 %v1845
        %2391 = vmatprep.subr.bf16.mxu0 %v1852
        %2392 = vmatpush1.bf16.msra.mxu0 %v1851
        %2393 = vmatprep.subr.bf16.mxu0 %v1858
        %2394 = vmatpush1.bf16.msra.mxu0 %v1857
        %2395 = vmatprep.subr.bf16.mxu0 %v1864
        %2396 = vmatpush1.bf16.msra.mxu0 %v1863
        %2397 = vmatprep.subr.bf16.mxu0 %v1870
        %2398 = vmatpush1.bf16.msra.mxu0 %v1869
        %2399 = vmatprep.subr.bf16.mxu0 %v1876
        %2400 = vmatpush1.bf16.msra.mxu0 %v1875
        %2401 = vmatprep.subr.bf16.mxu0 %v1882
        %2402 = vmatpush1.bf16.msra.mxu0 %v1881
        %2403 = vmatprep.subr.bf16.mxu0 %v1888
        %2404 = vmatpush1.bf16.msra.mxu0 %v1887
        %2405 = vmatprep.mubr.bf16.mxu0 %v910
        %2406 = vmatmul.mubr.bf16.gmra.mrb[0].mxu0 %v909
        %v2407 = vpop.f32.mrb[0].mxu0
        %v2408 = vadd.f32 %v846, %v2407
        %v2409 = vpop.f32.mrb[0].mxu0
        %v2410 = vadd.f32 %v850, %v2409
        %v2411 = vpop.f32.mrb[0].mxu0
        %v2412 = vadd.f32 %v846, %v2411
        %v2413 = vpop.f32.mrb[0].mxu0
        %v2414 = vadd.f32 %v850, %v2413
        %2415 = vmatprep.mubr.bf16.mxu0 %v916
        %2416 = vmatmul.mubr.bf16.gmra.mrb[0].mxu0 %v915
        %v2417 = vpop.f32.mrb[0].mxu0
        %v2418 = vadd.f32 %v846, %v2417
        %v2419 = vpop.f32.mrb[0].mxu0
        %v2420 = vadd.f32 %v850, %v2419
        %v2421 = vpop.f32.mrb[0].mxu0
        %v2422 = vadd.f32 %v846, %v2421
        %v2423 = vpop.f32.mrb[0].mxu0
        %v2424 = vadd.f32 %v850, %v2423
        %2425 = vdwg.mxu0
        %2426 = vmatprep.subr.bf16.mxu0 %v1894
        %2427 = vmatpush1.bf16.msra.mxu0 %v1893
        %2428 = vmatprep.subr.bf16.mxu0 %v1900
        %2429 = vmatpush1.bf16.msra.mxu0 %v1899
        %2430 = vmatprep.subr.bf16.mxu0 %v1906
        %2431 = vmatpush1.bf16.msra.mxu0 %v1905
        %2432 = vmatprep.subr.bf16.mxu0 %v1912
        %2433 = vmatpush1.bf16.msra.mxu0 %v1911
        %2434 = vmatprep.subr.bf16.mxu0 %v1918
        %2435 = vmatpush1.bf16.msra.mxu0 %v1917
        %2436 = vmatprep.subr.bf16.mxu0 %v1924
        %2437 = vmatpush1.bf16.msra.mxu0 %v1923
        %2438 = vmatprep.subr.bf16.mxu0 %v1930
        %2439 = vmatpush1.bf16.msra.mxu0 %v1929
        %2440 = vmatprep.subr.bf16.mxu0 %v1936
        %2441 = vmatpush1.bf16.msra.mxu0 %v1935
        %2442 = vmatprep.subr.bf16.mxu0 %v1942
        %2443 = vmatpush1.bf16.msra.mxu0 %v1941
        %2444 = vmatprep.subr.bf16.mxu0 %v1948
        %2445 = vmatpush1.bf16.msra.mxu0 %v1947
        %2446 = vmatprep.subr.bf16.mxu0 %v1954
        %2447 = vmatpush1.bf16.msra.mxu0 %v1953
        %2448 = vmatprep.subr.bf16.mxu0 %v1960
        %2449 = vmatpush1.bf16.msra.mxu0 %v1959
        %2450 = vmatprep.subr.bf16.mxu0 %v1966
        %2451 = vmatpush1.bf16.msra.mxu0 %v1965
        %2452 = vmatprep.subr.bf16.mxu0 %v1972
        %2453 = vmatpush1.bf16.msra.mxu0 %v1971
        %2454 = vmatprep.subr.bf16.mxu0 %v1978
        %2455 = vmatpush1.bf16.msra.mxu0 %v1977
        %2456 = vmatprep.subr.bf16.mxu0 %v1984
        %2457 = vmatpush1.bf16.msra.mxu0 %v1983
        %2458 = vmatprep.mubr.bf16.mxu0 %v912
        %2459 = vmatmul.mubr.bf16.gmra.mrb[0].mxu0 %v911
        %v2460 = vpop.f32.mrb[0].mxu0
        %v2461 = vadd.f32 %v2408, %v2460
        %v2462 = vpop.f32.mrb[0].mxu0
        %v2463 = vadd.f32 %v2410, %v2462
        %v2464 = vpop.f32.mrb[0].mxu0
        %v2465 = vadd.f32 %v2412, %v2464
        %v2466 = vpop.f32.mrb[0].mxu0
        %v2467 = vadd.f32 %v2414, %v2466
        %2468 = vmatprep.mubr.bf16.mxu0 %v918
        %2469 = vmatmul.mubr.bf16.gmra.mrb[0].mxu0 %v917
        %v2470 = vpop.f32.mrb[0].mxu0
        %v2471 = vadd.f32 %v2418, %v2470
        %v2472 = vpop.f32.mrb[0].mxu0
        %v2473 = vadd.f32 %v2420, %v2472
        %v2474 = vpop.f32.mrb[0].mxu0
        %v2475 = vadd.f32 %v2422, %v2474
        %v2476 = vpop.f32.mrb[0].mxu0
        %v2477 = vadd.f32 %v2424, %v2476
        %2478 = vdwg.mxu0
        %2479 = vmatprep.subr.bf16.mxu0 %v1990
        %2480 = vmatpush1.bf16.msra.mxu0 %v1989
        %2481 = vmatprep.subr.bf16.mxu0 %v1996
        %2482 = vmatpush1.bf16.msra.mxu0 %v1995
        %2483 = vmatprep.subr.bf16.mxu0 %v2002
        %2484 = vmatpush1.bf16.msra.mxu0 %v2001
        %2485 = vmatprep.subr.bf16.mxu0 %v2008
        %2486 = vmatpush1.bf16.msra.mxu0 %v2007
        %2487 = vmatprep.subr.bf16.mxu0 %v2014
        %2488 = vmatpush1.bf16.msra.mxu0 %v2013
        %2489 = vmatprep.subr.bf16.mxu0 %v2020
        %2490 = vmatpush1.bf16.msra.mxu0 %v2019
        %2491 = vmatprep.subr.bf16.mxu0 %v2026
        %2492 = vmatpush1.bf16.msra.mxu0 %v2025
        %2493 = vmatprep.subr.bf16.mxu0 %v2032
        %2494 = vmatpush1.bf16.msra.mxu0 %v2031
        %2495 = vmatprep.subr.bf16.mxu0 %v2038
        %2496 = vmatpush1.bf16.msra.mxu0 %v2037
        %2497 = vmatprep.subr.bf16.mxu0 %v2044
        %2498 = vmatpush1.bf16.msra.mxu0 %v2043
        %2499 = vmatprep.subr.bf16.mxu0 %v2050
        %2500 = vmatpush1.bf16.msra.mxu0 %v2049
        %2501 = vmatprep.subr.bf16.mxu0 %v2056
        %2502 = vmatpush1.bf16.msra.mxu0 %v2055
        %2503 = vmatprep.subr.bf16.mxu0 %v2062
        %2504 = vmatpush1.bf16.msra.mxu0 %v2061
        %2505 = vmatprep.subr.bf16.mxu0 %v2068
        %2506 = vmatpush1.bf16.msra.mxu0 %v2067
        %2507 = vmatprep.subr.bf16.mxu0 %v2074
        %2508 = vmatpush1.bf16.msra.mxu0 %v2073
        %2509 = vmatprep.subr.bf16.mxu0 %v2080
        %2510 = vmatpush1.bf16.msra.mxu0 %v2079
        %2511 = vmatprep.mubr.bf16.mxu0 %v914
        %2512 = vmatmul.mubr.bf16.gmra.mrb[0].mxu0 %v913
        %v2513 = vpop.f32.mrb[0].mxu0
        %v2514 = vadd.f32 %v2461, %v2513
        %v2515 = vpop.f32.mrb[0].mxu0
        %v2516 = vadd.f32 %v2463, %v2515
        %v2517 = vpop.f32.mrb[0].mxu0
        %v2518 = vadd.f32 %v2465, %v2517
        %v2519 = vpop.f32.mrb[0].mxu0
        %v2520 = vadd.f32 %v2467, %v2519
        %2521 = vmatprep.mubr.bf16.mxu0 %v920
        %2522 = vmatmul.mubr.bf16.gmra.mrb[0].mxu0 %v919
        %v2523 = vpop.f32.mrb[0].mxu0
        %v2524 = vadd.f32 %v2471, %v2523
        %v2525 = vpop.f32.mrb[0].mxu0
        %v2526 = vadd.f32 %v2473, %v2525
        %v2527 = vpop.f32.mrb[0].mxu0
        %v2528 = vadd.f32 %v2475, %v2527
        %v2529 = vpop.f32.mrb[0].mxu0
        %v2530 = vadd.f32 %v2477, %v2529
        %2531 = vdwg.mxu0
        %2532 = vmatprep.subr.bf16.mxu0 %v1800
        %2533 = vmatpush1.bf16.msra.mxu0 %v1799
        %2534 = vmatprep.subr.bf16.mxu0 %v1806
        %2535 = vmatpush1.bf16.msra.mxu0 %v1805
        %2536 = vmatprep.subr.bf16.mxu0 %v1812
        %2537 = vmatpush1.bf16.msra.mxu0 %v1811
        %2538 = vmatprep.subr.bf16.mxu0 %v1818
        %2539 = vmatpush1.bf16.msra.mxu0 %v1817
        %2540 = vmatprep.subr.bf16.mxu0 %v1824
        %2541 = vmatpush1.bf16.msra.mxu0 %v1823
        %2542 = vmatprep.subr.bf16.mxu0 %v1830
        %2543 = vmatpush1.bf16.msra.mxu0 %v1829
        %2544 = vmatprep.subr.bf16.mxu0 %v1836
        %2545 = vmatpush1.bf16.msra.mxu0 %v1835
        %2546 = vmatprep.subr.bf16.mxu0 %v1842
        %2547 = vmatpush1.bf16.msra.mxu0 %v1841
        %2548 = vmatprep.subr.bf16.mxu0 %v1848
        %2549 = vmatpush1.bf16.msra.mxu0 %v1847
        %2550 = vmatprep.subr.bf16.mxu0 %v1854
        %2551 = vmatpush1.bf16.msra.mxu0 %v1853
        %2552 = vmatprep.subr.bf16.mxu0 %v1860
        %2553 = vmatpush1.bf16.msra.mxu0 %v1859
        %2554 = vmatprep.subr.bf16.mxu0 %v1866
        %2555 = vmatpush1.bf16.msra.mxu0 %v1865
        %2556 = vmatprep.subr.bf16.mxu0 %v1872
        %2557 = vmatpush1.bf16.msra.mxu0 %v1871
        %2558 = vmatprep.subr.bf16.mxu0 %v1878
        %2559 = vmatpush1.bf16.msra.mxu0 %v1877
        %2560 = vmatprep.subr.bf16.mxu0 %v1884
        %2561 = vmatpush1.bf16.msra.mxu0 %v1883
        %2562 = vmatprep.subr.bf16.mxu0 %v1890
        %2563 = vmatpush1.bf16.msra.mxu0 %v1889
        %2564 = vmatprep.mubr.bf16.mxu0 %v910
        %2565 = vmatmul.mubr.bf16.gmra.mrb[0].mxu0 %v909
        %v2566 = vpop.f32.mrb[0].mxu0
        %v2567 = vadd.f32 %v854, %v2566
        %v2568 = vpop.f32.mrb[0].mxu0
        %v2569 = vadd.f32 %v858, %v2568
        %v2570 = vpop.f32.mrb[0].mxu0
        %v2571 = vadd.f32 %v854, %v2570
        %v2572 = vpop.f32.mrb[0].mxu0
        %v2573 = vadd.f32 %v858, %v2572
        %2574 = vmatprep.mubr.bf16.mxu0 %v916
        %2575 = vmatmul.mubr.bf16.gmra.mrb[0].mxu0 %v915
        %v2576 = vpop.f32.mrb[0].mxu0
        %v2577 = vadd.f32 %v854, %v2576
        %v2578 = vpop.f32.mrb[0].mxu0
        %v2579 = vadd.f32 %v858, %v2578
        %v2580 = vpop.f32.mrb[0].mxu0
        %v2581 = vadd.f32 %v854, %v2580
        %v2582 = vpop.f32.mrb[0].mxu0
        %v2583 = vadd.f32 %v858, %v2582
        %2584 = vdwg.mxu0
        %2585 = vmatprep.subr.bf16.mxu0 %v1896
        %2586 = vmatpush1.bf16.msra.mxu0 %v1895
        %2587 = vmatprep.subr.bf16.mxu0 %v1902
        %2588 = vmatpush1.bf16.msra.mxu0 %v1901
        %2589 = vmatprep.subr.bf16.mxu0 %v1908
        %2590 = vmatpush1.bf16.msra.mxu0 %v1907
        %2591 = vmatprep.subr.bf16.mxu0 %v1914
        %2592 = vmatpush1.bf16.msra.mxu0 %v1913
        %2593 = vmatprep.subr.bf16.mxu0 %v1920
        %2594 = vmatpush1.bf16.msra.mxu0 %v1919
        %2595 = vmatprep.subr.bf16.mxu0 %v1926
        %2596 = vmatpush1.bf16.msra.mxu0 %v1925
        %2597 = vmatprep.subr.bf16.mxu0 %v1932
        %2598 = vmatpush1.bf16.msra.mxu0 %v1931
        %2599 = vmatprep.subr.bf16.mxu0 %v1938
        %2600 = vmatpush1.bf16.msra.mxu0 %v1937
        %2601 = vmatprep.subr.bf16.mxu0 %v1944
        %2602 = vmatpush1.bf16.msra.mxu0 %v1943
        %2603 = vmatprep.subr.bf16.mxu0 %v1950
        %2604 = vmatpush1.bf16.msra.mxu0 %v1949
        %2605 = vmatprep.subr.bf16.mxu0 %v1956
        %2606 = vmatpush1.bf16.msra.mxu0 %v1955
        %2607 = vmatprep.subr.bf16.mxu0 %v1962
        %2608 = vmatpush1.bf16.msra.mxu0 %v1961
        %2609 = vmatprep.subr.bf16.mxu0 %v1968
        %2610 = vmatpush1.bf16.msra.mxu0 %v1967
        %2611 = vmatprep.subr.bf16.mxu0 %v1974
        %2612 = vmatpush1.bf16.msra.mxu0 %v1973
        %2613 = vmatprep.subr.bf16.mxu0 %v1980
        %2614 = vmatpush1.bf16.msra.mxu0 %v1979
        %2615 = vmatprep.subr.bf16.mxu0 %v1986
        %2616 = vmatpush1.bf16.msra.mxu0 %v1985
        %2617 = vmatprep.mubr.bf16.mxu0 %v912
        %2618 = vmatmul.mubr.bf16.gmra.mrb[0].mxu0 %v911
        %v2619 = vpop.f32.mrb[0].mxu0
        %v2620 = vadd.f32 %v2567, %v2619
        %v2621 = vpop.f32.mrb[0].mxu0
        %v2622 = vadd.f32 %v2569, %v2621
        %v2623 = vpop.f32.mrb[0].mxu0
        %v2624 = vadd.f32 %v2571, %v2623
        %v2625 = vpop.f32.mrb[0].mxu0
        %v2626 = vadd.f32 %v2573, %v2625
        %2627 = vmatprep.mubr.bf16.mxu0 %v918
        %2628 = vmatmul.mubr.bf16.gmra.mrb[0].mxu0 %v917
        %v2629 = vpop.f32.mrb[0].mxu0
        %v2630 = vadd.f32 %v2577, %v2629
        %v2631 = vpop.f32.mrb[0].mxu0
        %v2632 = vadd.f32 %v2579, %v2631
        %v2633 = vpop.f32.mrb[0].mxu0
        %v2634 = vadd.f32 %v2581, %v2633
        %v2635 = vpop.f32.mrb[0].mxu0
        %v2636 = vadd.f32 %v2583, %v2635
        %2637 = vdwg.mxu0
        %2638 = vmatprep.subr.bf16.mxu0 %v1992
        %2639 = vmatpush1.bf16.msra.mxu0 %v1991
        %2640 = vmatprep.subr.bf16.mxu0 %v1998
        %2641 = vmatpush1.bf16.msra.mxu0 %v1997
        %2642 = vmatprep.subr.bf16.mxu0 %v2004
        %2643 = vmatpush1.bf16.msra.mxu0 %v2003
        %2644 = vmatprep.subr.bf16.mxu0 %v2010
        %2645 = vmatpush1.bf16.msra.mxu0 %v2009
        %2646 = vmatprep.subr.bf16.mxu0 %v2016
        %2647 = vmatpush1.bf16.msra.mxu0 %v2015
        %2648 = vmatprep.subr.bf16.mxu0 %v2022
        %2649 = vmatpush1.bf16.msra.mxu0 %v2021
        %2650 = vmatprep.subr.bf16.mxu0 %v2028
        %2651 = vmatpush1.bf16.msra.mxu0 %v2027
        %2652 = vmatprep.subr.bf16.mxu0 %v2034
        %2653 = vmatpush1.bf16.msra.mxu0 %v2033
        %2654 = vmatprep.subr.bf16.mxu0 %v2040
        %2655 = vmatpush1.bf16.msra.mxu0 %v2039
        %2656 = vmatprep.subr.bf16.mxu0 %v2046
        %2657 = vmatpush1.bf16.msra.mxu0 %v2045
        %2658 = vmatprep.subr.bf16.mxu0 %v2052
        %2659 = vmatpush1.bf16.msra.mxu0 %v2051
        %2660 = vmatprep.subr.bf16.mxu0 %v2058
        %2661 = vmatpush1.bf16.msra.mxu0 %v2057
        %2662 = vmatprep.subr.bf16.mxu0 %v2064
        %2663 = vmatpush1.bf16.msra.mxu0 %v2063
        %2664 = vmatprep.subr.bf16.mxu0 %v2070
        %2665 = vmatpush1.bf16.msra.mxu0 %v2069
        %2666 = vmatprep.subr.bf16.mxu0 %v2076
        %2667 = vmatpush1.bf16.msra.mxu0 %v2075
        %2668 = vmatprep.subr.bf16.mxu0 %v2082
        %2669 = vmatpush1.bf16.msra.mxu0 %v2081
        %2670 = vmatprep.mubr.bf16.mxu0 %v914
        %2671 = vmatmul.mubr.bf16.gmra.mrb[0].mxu0 %v913
        %v2672 = vpop.f32.mrb[0].mxu0
        %v2673 = vadd.f32 %v2620, %v2672
        %v2674 = vpop.f32.mrb[0].mxu0
        %v2675 = vadd.f32 %v2622, %v2674
        %v2676 = vpop.f32.mrb[0].mxu0
        %v2677 = vadd.f32 %v2624, %v2676
        %v2678 = vpop.f32.mrb[0].mxu0
        %v2679 = vadd.f32 %v2626, %v2678
        %2680 = vmatprep.mubr.bf16.mxu0 %v920
        %2681 = vmatmul.mubr.bf16.gmra.mrb[0].mxu0 %v919
        %v2682 = vpop.f32.mrb[0].mxu0
        %v2683 = vadd.f32 %v2630, %v2682
        %v2684 = vpop.f32.mrb[0].mxu0
        %v2685 = vadd.f32 %v2632, %v2684
        %v2686 = vpop.f32.mrb[0].mxu0
        %v2687 = vadd.f32 %v2634, %v2686
        %v2688 = vpop.f32.mrb[0].mxu0
        %v2689 = vadd.f32 %v2636, %v2688
        %2690 = vdwg.mxu0
        %2691 = vmatprep.subr.bf16.mxu0 %v1802
        %2692 = vmatpush1.bf16.msra.mxu0 %v1801
        %2693 = vmatprep.subr.bf16.mxu0 %v1808
        %2694 = vmatpush1.bf16.msra.mxu0 %v1807
        %2695 = vmatprep.subr.bf16.mxu0 %v1814
        %2696 = vmatpush1.bf16.msra.mxu0 %v1813
        %2697 = vmatprep.subr.bf16.mxu0 %v1820
        %2698 = vmatpush1.bf16.msra.mxu0 %v1819
        %2699 = vmatprep.subr.bf16.mxu0 %v1826
        %2700 = vmatpush1.bf16.msra.mxu0 %v1825
        %2701 = vmatprep.subr.bf16.mxu0 %v1832
        %2702 = vmatpush1.bf16.msra.mxu0 %v1831
        %2703 = vmatprep.subr.bf16.mxu0 %v1838
        %2704 = vmatpush1.bf16.msra.mxu0 %v1837
        %2705 = vmatprep.subr.bf16.mxu0 %v1844
        %2706 = vmatpush1.bf16.msra.mxu0 %v1843
        %2707 = vmatprep.subr.bf16.mxu0 %v1850
        %2708 = vmatpush1.bf16.msra.mxu0 %v1849
        %2709 = vmatprep.subr.bf16.mxu0 %v1856
        %2710 = vmatpush1.bf16.msra.mxu0 %v1855
        %2711 = vmatprep.subr.bf16.mxu0 %v1862
        %2712 = vmatpush1.bf16.msra.mxu0 %v1861
        %2713 = vmatprep.subr.bf16.mxu0 %v1868
        %2714 = vmatpush1.bf16.msra.mxu0 %v1867
        %2715 = vmatprep.subr.bf16.mxu0 %v1874
        %2716 = vmatpush1.bf16.msra.mxu0 %v1873
        %2717 = vmatprep.subr.bf16.mxu0 %v1880
        %2718 = vmatpush1.bf16.msra.mxu0 %v1879
        %2719 = vmatprep.subr.bf16.mxu0 %v1886
        %2720 = vmatpush1.bf16.msra.mxu0 %v1885
        %2721 = vmatprep.subr.bf16.mxu0 %v1892
        %2722 = vmatpush1.bf16.msra.mxu0 %v1891
        %2723 = vmatprep.mubr.bf16.mxu0 %v910
        %2724 = vmatmul.mubr.bf16.gmra.mrb[0].mxu0 %v909
        %v2725 = vpop.f32.mrb[0].mxu0
        %v2726 = vadd.f32 %v862, %v2725
        %v2727 = vpop.f32.mrb[0].mxu0
        %v2728 = vadd.f32 %v866, %v2727
        %v2729 = vpop.f32.mrb[0].mxu0
        %v2730 = vadd.f32 %v862, %v2729
        %v2731 = vpop.f32.mrb[0].mxu0
        %v2732 = vadd.f32 %v866, %v2731
        %2733 = vmatprep.mubr.bf16.mxu0 %v916
        %2734 = vmatmul.mubr.bf16.gmra.mrb[0].mxu0 %v915
        %v2735 = vpop.f32.mrb[0].mxu0
        %v2736 = vadd.f32 %v862, %v2735
        %v2737 = vpop.f32.mrb[0].mxu0
        %v2738 = vadd.f32 %v866, %v2737
        %v2739 = vpop.f32.mrb[0].mxu0
        %v2740 = vadd.f32 %v862, %v2739
        %v2741 = vpop.f32.mrb[0].mxu0
        %v2742 = vadd.f32 %v866, %v2741
        %2743 = vdwg.mxu0
        %2744 = vmatprep.subr.bf16.mxu0 %v1898
        %2745 = vmatpush1.bf16.msra.mxu0 %v1897
        %2746 = vmatprep.subr.bf16.mxu0 %v1904
        %2747 = vmatpush1.bf16.msra.mxu0 %v1903
        %2748 = vmatprep.subr.bf16.mxu0 %v1910
        %2749 = vmatpush1.bf16.msra.mxu0 %v1909
        %2750 = vmatprep.subr.bf16.mxu0 %v1916
        %2751 = vmatpush1.bf16.msra.mxu0 %v1915
        %2752 = vmatprep.subr.bf16.mxu0 %v1922
        %2753 = vmatpush1.bf16.msra.mxu0 %v1921
        %2754 = vmatprep.subr.bf16.mxu0 %v1928
        %2755 = vmatpush1.bf16.msra.mxu0 %v1927
        %2756 = vmatprep.subr.bf16.mxu0 %v1934
        %2757 = vmatpush1.bf16.msra.mxu0 %v1933
        %2758 = vmatprep.subr.bf16.mxu0 %v1940
        %2759 = vmatpush1.bf16.msra.mxu0 %v1939
        %2760 = vmatprep.subr.bf16.mxu0 %v1946
        %2761 = vmatpush1.bf16.msra.mxu0 %v1945
        %2762 = vmatprep.subr.bf16.mxu0 %v1952
        %2763 = vmatpush1.bf16.msra.mxu0 %v1951
        %2764 = vmatprep.subr.bf16.mxu0 %v1958
        %2765 = vmatpush1.bf16.msra.mxu0 %v1957
        %2766 = vmatprep.subr.bf16.mxu0 %v1964
        %2767 = vmatpush1.bf16.msra.mxu0 %v1963
        %2768 = vmatprep.subr.bf16.mxu0 %v1970
        %2769 = vmatpush1.bf16.msra.mxu0 %v1969
        %2770 = vmatprep.subr.bf16.mxu0 %v1976
        %2771 = vmatpush1.bf16.msra.mxu0 %v1975
        %2772 = vmatprep.subr.bf16.mxu0 %v1982
        %2773 = vmatpush1.bf16.msra.mxu0 %v1981
        %2774 = vmatprep.subr.bf16.mxu0 %v1988
        %2775 = vmatpush1.bf16.msra.mxu0 %v1987
        %2776 = vmatprep.mubr.bf16.mxu0 %v912
        %2777 = vmatmul.mubr.bf16.gmra.mrb[0].mxu0 %v911
        %v2778 = vpop.f32.mrb[0].mxu0
        %v2779 = vadd.f32 %v2726, %v2778
        %v2780 = vpop.f32.mrb[0].mxu0
        %v2781 = vadd.f32 %v2728, %v2780
        %v2782 = vpop.f32.mrb[0].mxu0
        %v2783 = vadd.f32 %v2730, %v2782
        %v2784 = vpop.f32.mrb[0].mxu0
        %v2785 = vadd.f32 %v2732, %v2784
        %2786 = vmatprep.mubr.bf16.mxu0 %v918
        %2787 = vmatmul.mubr.bf16.gmra.mrb[0].mxu0 %v917
        %v2788 = vpop.f32.mrb[0].mxu0
        %v2789 = vadd.f32 %v2736, %v2788
        %v2790 = vpop.f32.mrb[0].mxu0
        %v2791 = vadd.f32 %v2738, %v2790
        %v2792 = vpop.f32.mrb[0].mxu0
        %v2793 = vadd.f32 %v2740, %v2792
        %v2794 = vpop.f32.mrb[0].mxu0
        %v2795 = vadd.f32 %v2742, %v2794
        %2796 = vdwg.mxu0
        %2797 = vmatprep.subr.bf16.mxu0 %v1994
        %2798 = vmatpush1.bf16.msra.mxu0 %v1993
        %2799 = vmatprep.subr.bf16.mxu0 %v2000
        %2800 = vmatpush1.bf16.msra.mxu0 %v1999
        %2801 = vmatprep.subr.bf16.mxu0 %v2006
        %2802 = vmatpush1.bf16.msra.mxu0 %v2005
        %2803 = vmatprep.subr.bf16.mxu0 %v2012
        %2804 = vmatpush1.bf16.msra.mxu0 %v2011
        %2805 = vmatprep.subr.bf16.mxu0 %v2018
        %2806 = vmatpush1.bf16.msra.mxu0 %v2017
        %2807 = vmatprep.subr.bf16.mxu0 %v2024
        %2808 = vmatpush1.bf16.msra.mxu0 %v2023
        %2809 = vmatprep.subr.bf16.mxu0 %v2030
        %2810 = vmatpush1.bf16.msra.mxu0 %v2029
        %2811 = vmatprep.subr.bf16.mxu0 %v2036
        %2812 = vmatpush1.bf16.msra.mxu0 %v2035
        %2813 = vmatprep.subr.bf16.mxu0 %v2042
        %2814 = vmatpush1.bf16.msra.mxu0 %v2041
        %2815 = vmatprep.subr.bf16.mxu0 %v2048
        %2816 = vmatpush1.bf16.msra.mxu0 %v2047
        %2817 = vmatprep.subr.bf16.mxu0 %v2054
        %2818 = vmatpush1.bf16.msra.mxu0 %v2053
        %2819 = vmatprep.subr.bf16.mxu0 %v2060
        %2820 = vmatpush1.bf16.msra.mxu0 %v2059
        %2821 = vmatprep.subr.bf16.mxu0 %v2066
        %2822 = vmatpush1.bf16.msra.mxu0 %v2065
        %2823 = vmatprep.subr.bf16.mxu0 %v2072
        %2824 = vmatpush1.bf16.msra.mxu0 %v2071
        %2825 = vmatprep.subr.bf16.mxu0 %v2078
        %2826 = vmatpush1.bf16.msra.mxu0 %v2077
        %2827 = vmatprep.subr.bf16.mxu0 %v2084
        %2828 = vmatpush1.bf16.msra.mxu0 %v2083
        %2829 = vmatprep.mubr.bf16.mxu0 %v914
        %2830 = vmatmul.mubr.bf16.gmra.mrb[0].mxu0 %v913
        %v2831 = vpop.f32.mrb[0].mxu0
        %v2832 = vadd.f32 %v2779, %v2831
        %v2833 = vpop.f32.mrb[0].mxu0
        %v2834 = vadd.f32 %v2781, %v2833
        %v2835 = vpop.f32.mrb[0].mxu0
        %v2836 = vadd.f32 %v2783, %v2835
        %v2837 = vpop.f32.mrb[0].mxu0
        %v2838 = vadd.f32 %v2785, %v2837
        %2839 = vmatprep.mubr.bf16.mxu0 %v920
        %2840 = vmatmul.mubr.bf16.gmra.mrb[0].mxu0 %v919
        %v2841 = vpop.f32.mrb[0].mxu0
        %v2842 = vadd.f32 %v2789, %v2841
        %v2843 = vpop.f32.mrb[0].mxu0
        %v2844 = vadd.f32 %v2791, %v2843
        %v2845 = vpop.f32.mrb[0].mxu0
        %v2846 = vadd.f32 %v2793, %v2845
        %v2847 = vpop.f32.mrb[0].mxu0
        %v2848 = vadd.f32 %v2795, %v2847
        %2849 = vdwg.mxu0
        %v2850 = vtanh.pop %v2514
        %v2851 = vtanh.pop %v2516
        %v2852 = vtanh.pop %v2673
        %v2853 = vtanh.pop %v2675
        %v2854 = vtanh.pop %v2832
        %v2855 = vtanh.pop %v2834
        %v2856 = vtanh.pop %v2518
        %v2857 = vtanh.pop %v2520
        %v2858 = vtanh.pop %v2677
        %v2859 = vtanh.pop %v2679
        %v2860 = vtanh.pop %v2836
        %v2861 = vtanh.pop %v2838
        %v2862 = vtanh.pop %v2524
        %v2863 = vtanh.pop %v2526
        %v2864 = vtanh.pop %v2683
        %v2865 = vtanh.pop %v2685
        %v2866 = vtanh.pop %v2842
        %v2867 = vtanh.pop %v2844
        %v2868 = vtanh.pop %v2528
        %v2869 = vtanh.pop %v2530
        %v2870 = vtanh.pop %v2687
        %v2871 = vtanh.pop %v2689
        %v2872 = vtanh.pop %v2846
        %v2873 = vtanh.pop %v2848
        %v2874 = vpack.c.bf16 %v2856, %v2850
        %v2875 = vpack.c.bf16 %v2857, %v2851
        %v2876 = vpack.c.bf16 %v2858, %v2852
        %v2877 = vpack.c.bf16 %v2859, %v2853
        %v2878 = vpack.c.bf16 %v2860, %v2854
        %v2879 = vpack.c.bf16 %v2861, %v2855
        %v2880 = vpack.c.bf16 %v2868, %v2862
        %v2881 = vpack.c.bf16 %v2869, %v2863
        %v2882 = vpack.c.bf16 %v2870, %v2864
        %v2883 = vpack.c.bf16 %v2871, %v2865
        %v2884 = vpack.c.bf16 %v2872, %v2866
        %v2885 = vpack.c.bf16 %v2873, %v2867
        %v2886 = vld [vmem:[#allocation11] sm:$0xff]
        %v2887 = vld [vmem:[#allocation11 + $0x8] sm:$0xff]
        %v2888 = vld [vmem:[#allocation11 + $0x10] sm:$0xff]
        %v2889 = vld [vmem:[#allocation11 + $0x18] sm:$0xff]
        %v2890 = vld [vmem:[#allocation11 + $0x20] sm:$0xff]
        %v2891 = vld [vmem:[#allocation11 + $0x28] sm:$0xff]
        %v2892 = vld [vmem:[#allocation11 + $0x30] sm:$0xff]
        %v2893 = vld [vmem:[#allocation11 + $0x38] sm:$0xff]
        %v2894 = vld [vmem:[#allocation11 + $0x40] sm:$0xff]
        %v2895 = vld [vmem:[#allocation11 + $0x48] sm:$0xff]
        %v2896 = vld [vmem:[#allocation11 + $0x50] sm:$0xff]
        %v2897 = vld [vmem:[#allocation11 + $0x58] sm:$0xff]
        %v2898 = vld [vmem:[#allocation11 + $0x60] sm:$0xff]
        %v2899 = vld [vmem:[#allocation11 + $0x68] sm:$0xff]
        %v2900 = vld [vmem:[#allocation11 + $0x70] sm:$0xff]
        %v2901 = vld [vmem:[#allocation11 + $0x78] sm:$0xff]
        %v2902 = vld [vmem:[#allocation11 + $0x80] sm:$0xff]
        %v2903 = vld [vmem:[#allocation11 + $0x88] sm:$0xff]
        %v2904 = vld [vmem:[#allocation11 + $0x90] sm:$0xff]
        %v2905 = vld [vmem:[#allocation11 + $0x98] sm:$0xff]
        %v2906 = vld [vmem:[#allocation11 + $0xa0] sm:$0xff]
        %v2907 = vld [vmem:[#allocation11 + $0xa8] sm:$0xff]
        %v2908 = vld [vmem:[#allocation11 + $0xb0] sm:$0xff]
        %v2909 = vld [vmem:[#allocation11 + $0xb8] sm:$0xff]
        %v2910 = vld [vmem:[#allocation11 + $0xc0] sm:$0xff]
        %v2911 = vld [vmem:[#allocation11 + $0xc8] sm:$0xff]
        %v2912 = vld [vmem:[#allocation11 + $0xd0] sm:$0xff]
        %v2913 = vld [vmem:[#allocation11 + $0xd8] sm:$0xff]
        %v2914 = vld [vmem:[#allocation11 + $0xe0] sm:$0xff]
        %v2915 = vld [vmem:[#allocation11 + $0xe8] sm:$0xff]
        %v2916 = vld [vmem:[#allocation11 + $0xf0] sm:$0xff]
        %v2917 = vld [vmem:[#allocation11 + $0xf8] sm:$0xff]
        %v2918 = vld [vmem:[#allocation11 + $0x100] sm:$0xff]
        %v2919 = vld [vmem:[#allocation11 + $0x108] sm:$0xff]
        %v2920 = vld [vmem:[#allocation11 + $0x110] sm:$0xff]
        %v2921 = vld [vmem:[#allocation11 + $0x118] sm:$0xff]
        %v2922 = vld [vmem:[#allocation11 + $0x120] sm:$0xff]
        %v2923 = vld [vmem:[#allocation11 + $0x128] sm:$0xff]
        %v2924 = vld [vmem:[#allocation11 + $0x130] sm:$0xff]
        %v2925 = vld [vmem:[#allocation11 + $0x138] sm:$0xff]
        %v2926 = vld [vmem:[#allocation11 + $0x140] sm:$0xff]
        %v2927 = vld [vmem:[#allocation11 + $0x148] sm:$0xff]
        %v2928 = vld [vmem:[#allocation11 + $0x150] sm:$0xff]
        %v2929 = vld [vmem:[#allocation11 + $0x158] sm:$0xff]
        %v2930 = vld [vmem:[#allocation11 + $0x160] sm:$0xff]
        %v2931 = vld [vmem:[#allocation11 + $0x168] sm:$0xff]
        %v2932 = vld [vmem:[#allocation11 + $0x170] sm:$0xff]
        %v2933 = vld [vmem:[#allocation11 + $0x178] sm:$0xff]
        %v2934 = vld [vmem:[#allocation11 + $0x180] sm:$0xff]
        %v2935 = vld [vmem:[#allocation11 + $0x188] sm:$0xff]
        %v2936 = vld [vmem:[#allocation11 + $0x190] sm:$0xff]
        %v2937 = vld [vmem:[#allocation11 + $0x198] sm:$0xff]
        %v2938 = vld [vmem:[#allocation11 + $0x1a0] sm:$0xff]
        %v2939 = vld [vmem:[#allocation11 + $0x1a8] sm:$0xff]
        %v2940 = vld [vmem:[#allocation11 + $0x1b0] sm:$0xff]
        %v2941 = vld [vmem:[#allocation11 + $0x1b8] sm:$0xff]
        %v2942 = vld [vmem:[#allocation11 + $0x1c0] sm:$0xff]
        %v2943 = vld [vmem:[#allocation11 + $0x1c8] sm:$0xff]
        %v2944 = vld [vmem:[#allocation11 + $0x1d0] sm:$0xff]
        %v2945 = vld [vmem:[#allocation11 + $0x1d8] sm:$0xff]
        %v2946 = vld [vmem:[#allocation11 + $0x1e0] sm:$0xff]
        %v2947 = vld [vmem:[#allocation11 + $0x1e8] sm:$0xff]
        %v2948 = vld [vmem:[#allocation11 + $0x1f0] sm:$0xff]
        %v2949 = vld [vmem:[#allocation11 + $0x1f8] sm:$0xff]
        %v2950 = vld [vmem:[#allocation11 + $0x200] sm:$0xff]
        %v2951 = vld [vmem:[#allocation11 + $0x208] sm:$0xff]
        %v2952 = vld [vmem:[#allocation11 + $0x210] sm:$0xff]
        %v2953 = vld [vmem:[#allocation11 + $0x218] sm:$0xff]
        %v2954 = vld [vmem:[#allocation11 + $0x220] sm:$0xff]
        %v2955 = vld [vmem:[#allocation11 + $0x228] sm:$0xff]
        %v2956 = vld [vmem:[#allocation11 + $0x230] sm:$0xff]
        %v2957 = vld [vmem:[#allocation11 + $0x238] sm:$0xff]
        %v2958 = vld [vmem:[#allocation11 + $0x240] sm:$0xff]
        %v2959 = vld [vmem:[#allocation11 + $0x248] sm:$0xff]
        %v2960 = vld [vmem:[#allocation11 + $0x250] sm:$0xff]
        %v2961 = vld [vmem:[#allocation11 + $0x258] sm:$0xff]
        %v2962 = vld [vmem:[#allocation11 + $0x260] sm:$0xff]
        %v2963 = vld [vmem:[#allocation11 + $0x268] sm:$0xff]
        %v2964 = vld [vmem:[#allocation11 + $0x270] sm:$0xff]
        %v2965 = vld [vmem:[#allocation11 + $0x278] sm:$0xff]
        %v2966 = vld [vmem:[#allocation11 + $0x280] sm:$0xff]
        %v2967 = vld [vmem:[#allocation11 + $0x288] sm:$0xff]
        %v2968 = vld [vmem:[#allocation11 + $0x290] sm:$0xff]
        %v2969 = vld [vmem:[#allocation11 + $0x298] sm:$0xff]
        %v2970 = vld [vmem:[#allocation11 + $0x2a0] sm:$0xff]
        %v2971 = vld [vmem:[#allocation11 + $0x2a8] sm:$0xff]
        %v2972 = vld [vmem:[#allocation11 + $0x2b0] sm:$0xff]
        %v2973 = vld [vmem:[#allocation11 + $0x2b8] sm:$0xff]
        %v2974 = vld [vmem:[#allocation11 + $0x2c0] sm:$0xff]
        %v2975 = vld [vmem:[#allocation11 + $0x2c8] sm:$0xff]
        %v2976 = vld [vmem:[#allocation11 + $0x2d0] sm:$0xff]
        %v2977 = vld [vmem:[#allocation11 + $0x2d8] sm:$0xff]
        %v2978 = vld [vmem:[#allocation11 + $0x2e0] sm:$0xff]
        %v2979 = vld [vmem:[#allocation11 + $0x2e8] sm:$0xff]
        %v2980 = vld [vmem:[#allocation11 + $0x2f0] sm:$0xff]
        %v2981 = vld [vmem:[#allocation11 + $0x2f8] sm:$0xff]
        %s2982 = scalar_lea.vmem [#allocation7], 4
        %v2983 = vld [vmem:[%s2982] ss:$8 sm:$0x3]
        %v2985 = vlaneseq
        %v2986 = vshrl.u32 %v2985, 7
        %v2987 = vsub.s32 0, %v2986
        %v2988 = vrot.slane %v2983, %v2987
        %v2989 = vlaneseq
        %v2990 = vshrl.u32 %v2989, 7
        %v2991 = vsub.s32 1, %v2990
        %v2992 = vrot.slane %v2983, %v2991
        %v3091 = vunpack.c.l.b16 %v2886
        %v3092 = vunpack.c.h.b16 %v2886
        %v3093 = vunpack.c.l.b16 %v2887
        %v3094 = vunpack.c.h.b16 %v2887
        %v3095 = vunpack.c.l.b16 %v2888
        %v3096 = vunpack.c.h.b16 %v2888
        %v3097 = vunpack.c.l.b16 %v2889
        %v3098 = vunpack.c.h.b16 %v2889
        %v3099 = vunpack.c.l.b16 %v2890
        %v3100 = vunpack.c.h.b16 %v2890
        %v3101 = vunpack.c.l.b16 %v2891
        %v3102 = vunpack.c.h.b16 %v2891
        %v3103 = vunpack.c.l.b16 %v2892
        %v3104 = vunpack.c.h.b16 %v2892
        %v3105 = vunpack.c.l.b16 %v2893
        %v3106 = vunpack.c.h.b16 %v2893
        %v3107 = vunpack.c.l.b16 %v2894
        %v3108 = vunpack.c.h.b16 %v2894
        %v3109 = vunpack.c.l.b16 %v2895
        %v3110 = vunpack.c.h.b16 %v2895
        %v3111 = vunpack.c.l.b16 %v2896
        %v3112 = vunpack.c.h.b16 %v2896
        %v3113 = vunpack.c.l.b16 %v2897
        %v3114 = vunpack.c.h.b16 %v2897
        %v3115 = vunpack.c.l.b16 %v2898
        %v3116 = vunpack.c.h.b16 %v2898
        %v3117 = vunpack.c.l.b16 %v2899
        %v3118 = vunpack.c.h.b16 %v2899
        %v3119 = vunpack.c.l.b16 %v2900
        %v3120 = vunpack.c.h.b16 %v2900
        %v3121 = vunpack.c.l.b16 %v2901
        %v3122 = vunpack.c.h.b16 %v2901
        %v3123 = vunpack.c.l.b16 %v2902
        %v3124 = vunpack.c.h.b16 %v2902
        %v3125 = vunpack.c.l.b16 %v2903
        %v3126 = vunpack.c.h.b16 %v2903
        %v3127 = vunpack.c.l.b16 %v2904
        %v3128 = vunpack.c.h.b16 %v2904
        %v3129 = vunpack.c.l.b16 %v2905
        %v3130 = vunpack.c.h.b16 %v2905
        %v3131 = vunpack.c.l.b16 %v2906
        %v3132 = vunpack.c.h.b16 %v2906
        %v3133 = vunpack.c.l.b16 %v2907
        %v3134 = vunpack.c.h.b16 %v2907
        %v3135 = vunpack.c.l.b16 %v2908
        %v3136 = vunpack.c.h.b16 %v2908
        %v3137 = vunpack.c.l.b16 %v2909
        %v3138 = vunpack.c.h.b16 %v2909
        %v3139 = vunpack.c.l.b16 %v2910
        %v3140 = vunpack.c.h.b16 %v2910
        %v3141 = vunpack.c.l.b16 %v2911
        %v3142 = vunpack.c.h.b16 %v2911
        %v3143 = vunpack.c.l.b16 %v2912
        %v3144 = vunpack.c.h.b16 %v2912
        %v3145 = vunpack.c.l.b16 %v2913
        %v3146 = vunpack.c.h.b16 %v2913
        %v3147 = vunpack.c.l.b16 %v2914
        %v3148 = vunpack.c.h.b16 %v2914
        %v3149 = vunpack.c.l.b16 %v2915
        %v3150 = vunpack.c.h.b16 %v2915
        %v3151 = vunpack.c.l.b16 %v2916
        %v3152 = vunpack.c.h.b16 %v2916
        %v3153 = vunpack.c.l.b16 %v2917
        %v3154 = vunpack.c.h.b16 %v2917
        %v3155 = vunpack.c.l.b16 %v2918
        %v3156 = vunpack.c.h.b16 %v2918
        %v3157 = vunpack.c.l.b16 %v2919
        %v3158 = vunpack.c.h.b16 %v2919
        %v3159 = vunpack.c.l.b16 %v2920
        %v3160 = vunpack.c.h.b16 %v2920
        %v3161 = vunpack.c.l.b16 %v2921
        %v3162 = vunpack.c.h.b16 %v2921
        %v3163 = vunpack.c.l.b16 %v2922
        %v3164 = vunpack.c.h.b16 %v2922
        %v3165 = vunpack.c.l.b16 %v2923
        %v3166 = vunpack.c.h.b16 %v2923
        %v3167 = vunpack.c.l.b16 %v2924
        %v3168 = vunpack.c.h.b16 %v2924
        %v3169 = vunpack.c.l.b16 %v2925
        %v3170 = vunpack.c.h.b16 %v2925
        %v3171 = vunpack.c.l.b16 %v2926
        %v3172 = vunpack.c.h.b16 %v2926
        %v3173 = vunpack.c.l.b16 %v2927
        %v3174 = vunpack.c.h.b16 %v2927
        %v3175 = vunpack.c.l.b16 %v2928
        %v3176 = vunpack.c.h.b16 %v2928
        %v3177 = vunpack.c.l.b16 %v2929
        %v3178 = vunpack.c.h.b16 %v2929
        %v3179 = vunpack.c.l.b16 %v2930
        %v3180 = vunpack.c.h.b16 %v2930
        %v3181 = vunpack.c.l.b16 %v2931
        %v3182 = vunpack.c.h.b16 %v2931
        %v3183 = vunpack.c.l.b16 %v2932
        %v3184 = vunpack.c.h.b16 %v2932
        %v3185 = vunpack.c.l.b16 %v2933
        %v3186 = vunpack.c.h.b16 %v2933
        %v3187 = vunpack.c.l.b16 %v2934
        %v3188 = vunpack.c.h.b16 %v2934
        %v3189 = vunpack.c.l.b16 %v2935
        %v3190 = vunpack.c.h.b16 %v2935
        %v3191 = vunpack.c.l.b16 %v2936
        %v3192 = vunpack.c.h.b16 %v2936
        %v3193 = vunpack.c.l.b16 %v2937
        %v3194 = vunpack.c.h.b16 %v2937
        %v3195 = vunpack.c.l.b16 %v2938
        %v3196 = vunpack.c.h.b16 %v2938
        %v3197 = vunpack.c.l.b16 %v2939
        %v3198 = vunpack.c.h.b16 %v2939
        %v3199 = vunpack.c.l.b16 %v2940
        %v3200 = vunpack.c.h.b16 %v2940
        %v3201 = vunpack.c.l.b16 %v2941
        %v3202 = vunpack.c.h.b16 %v2941
        %v3203 = vunpack.c.l.b16 %v2942
        %v3204 = vunpack.c.h.b16 %v2942
        %v3205 = vunpack.c.l.b16 %v2943
        %v3206 = vunpack.c.h.b16 %v2943
        %v3207 = vunpack.c.l.b16 %v2944
        %v3208 = vunpack.c.h.b16 %v2944
        %v3209 = vunpack.c.l.b16 %v2945
        %v3210 = vunpack.c.h.b16 %v2945
        %v3211 = vunpack.c.l.b16 %v2946
        %v3212 = vunpack.c.h.b16 %v2946
        %v3213 = vunpack.c.l.b16 %v2947
        %v3214 = vunpack.c.h.b16 %v2947
        %v3215 = vunpack.c.l.b16 %v2948
        %v3216 = vunpack.c.h.b16 %v2948
        %v3217 = vunpack.c.l.b16 %v2949
        %v3218 = vunpack.c.h.b16 %v2949
        %v3219 = vunpack.c.l.b16 %v2950
        %v3220 = vunpack.c.h.b16 %v2950
        %v3221 = vunpack.c.l.b16 %v2951
        %v3222 = vunpack.c.h.b16 %v2951
        %v3223 = vunpack.c.l.b16 %v2952
        %v3224 = vunpack.c.h.b16 %v2952
        %v3225 = vunpack.c.l.b16 %v2953
        %v3226 = vunpack.c.h.b16 %v2953
        %v3227 = vunpack.c.l.b16 %v2954
        %v3228 = vunpack.c.h.b16 %v2954
        %v3229 = vunpack.c.l.b16 %v2955
        %v3230 = vunpack.c.h.b16 %v2955
        %v3231 = vunpack.c.l.b16 %v2956
        %v3232 = vunpack.c.h.b16 %v2956
        %v3233 = vunpack.c.l.b16 %v2957
        %v3234 = vunpack.c.h.b16 %v2957
        %v3235 = vunpack.c.l.b16 %v2958
        %v3236 = vunpack.c.h.b16 %v2958
        %v3237 = vunpack.c.l.b16 %v2959
        %v3238 = vunpack.c.h.b16 %v2959
        %v3239 = vunpack.c.l.b16 %v2960
        %v3240 = vunpack.c.h.b16 %v2960
        %v3241 = vunpack.c.l.b16 %v2961
        %v3242 = vunpack.c.h.b16 %v2961
        %v3243 = vunpack.c.l.b16 %v2962
        %v3244 = vunpack.c.h.b16 %v2962
        %v3245 = vunpack.c.l.b16 %v2963
        %v3246 = vunpack.c.h.b16 %v2963
        %v3247 = vunpack.c.l.b16 %v2964
        %v3248 = vunpack.c.h.b16 %v2964
        %v3249 = vunpack.c.l.b16 %v2965
        %v3250 = vunpack.c.h.b16 %v2965
        %v3251 = vunpack.c.l.b16 %v2966
        %v3252 = vunpack.c.h.b16 %v2966
        %v3253 = vunpack.c.l.b16 %v2967
        %v3254 = vunpack.c.h.b16 %v2967
        %v3255 = vunpack.c.l.b16 %v2968
        %v3256 = vunpack.c.h.b16 %v2968
        %v3257 = vunpack.c.l.b16 %v2969
        %v3258 = vunpack.c.h.b16 %v2969
        %v3259 = vunpack.c.l.b16 %v2970
        %v3260 = vunpack.c.h.b16 %v2970
        %v3261 = vunpack.c.l.b16 %v2971
        %v3262 = vunpack.c.h.b16 %v2971
        %v3263 = vunpack.c.l.b16 %v2972
        %v3264 = vunpack.c.h.b16 %v2972
        %v3265 = vunpack.c.l.b16 %v2973
        %v3266 = vunpack.c.h.b16 %v2973
        %v3267 = vunpack.c.l.b16 %v2974
        %v3268 = vunpack.c.h.b16 %v2974
        %v3269 = vunpack.c.l.b16 %v2975
        %v3270 = vunpack.c.h.b16 %v2975
        %v3271 = vunpack.c.l.b16 %v2976
        %v3272 = vunpack.c.h.b16 %v2976
        %v3273 = vunpack.c.l.b16 %v2977
        %v3274 = vunpack.c.h.b16 %v2977
        %v3275 = vunpack.c.l.b16 %v2978
        %v3276 = vunpack.c.h.b16 %v2978
        %v3277 = vunpack.c.l.b16 %v2979
        %v3278 = vunpack.c.h.b16 %v2979
        %v3279 = vunpack.c.l.b16 %v2980
        %v3280 = vunpack.c.h.b16 %v2980
        %v3281 = vunpack.c.l.b16 %v2981
        %v3282 = vunpack.c.h.b16 %v2981
        %v3283 = vpack.c.b16 %v3093, %v3091
        %v3284 = vpack.c.b16 %v3094, %v3092
        %v3285 = vpack.c.b16 %v3097, %v3095
        %v3286 = vpack.c.b16 %v3098, %v3096
        %v3287 = vpack.c.b16 %v3101, %v3099
        %v3288 = vpack.c.b16 %v3102, %v3100
        %v3289 = vpack.c.b16 %v3105, %v3103
        %v3290 = vpack.c.b16 %v3106, %v3104
        %v3291 = vpack.c.b16 %v3109, %v3107
        %v3292 = vpack.c.b16 %v3110, %v3108
        %v3293 = vpack.c.b16 %v3113, %v3111
        %v3294 = vpack.c.b16 %v3114, %v3112
        %v3295 = vpack.c.b16 %v3117, %v3115
        %v3296 = vpack.c.b16 %v3118, %v3116
        %v3297 = vpack.c.b16 %v3121, %v3119
        %v3298 = vpack.c.b16 %v3122, %v3120
        %v3299 = vpack.c.b16 %v3125, %v3123
        %v3300 = vpack.c.b16 %v3126, %v3124
        %v3301 = vpack.c.b16 %v3129, %v3127
        %v3302 = vpack.c.b16 %v3130, %v3128
        %v3303 = vpack.c.b16 %v3133, %v3131
        %v3304 = vpack.c.b16 %v3134, %v3132
        %v3305 = vpack.c.b16 %v3137, %v3135
        %v3306 = vpack.c.b16 %v3138, %v3136
        %v3307 = vpack.c.b16 %v3141, %v3139
        %v3308 = vpack.c.b16 %v3142, %v3140
        %v3309 = vpack.c.b16 %v3145, %v3143
        %v3310 = vpack.c.b16 %v3146, %v3144
        %v3311 = vpack.c.b16 %v3149, %v3147
        %v3312 = vpack.c.b16 %v3150, %v3148
        %v3313 = vpack.c.b16 %v3153, %v3151
        %v3314 = vpack.c.b16 %v3154, %v3152
        %v3315 = vpack.c.b16 %v3157, %v3155
        %v3316 = vpack.c.b16 %v3158, %v3156
        %v3317 = vpack.c.b16 %v3161, %v3159
        %v3318 = vpack.c.b16 %v3162, %v3160
        %v3319 = vpack.c.b16 %v3165, %v3163
        %v3320 = vpack.c.b16 %v3166, %v3164
        %v3321 = vpack.c.b16 %v3169, %v3167
        %v3322 = vpack.c.b16 %v3170, %v3168
        %v3323 = vpack.c.b16 %v3173, %v3171
        %v3324 = vpack.c.b16 %v3174, %v3172
        %v3325 = vpack.c.b16 %v3177, %v3175
        %v3326 = vpack.c.b16 %v3178, %v3176
        %v3327 = vpack.c.b16 %v3181, %v3179
        %v3328 = vpack.c.b16 %v3182, %v3180
        %v3329 = vpack.c.b16 %v3185, %v3183
        %v3330 = vpack.c.b16 %v3186, %v3184
        %v3331 = vpack.c.b16 %v3189, %v3187
        %v3332 = vpack.c.b16 %v3190, %v3188
        %v3333 = vpack.c.b16 %v3193, %v3191
        %v3334 = vpack.c.b16 %v3194, %v3192
        %v3335 = vpack.c.b16 %v3197, %v3195
        %v3336 = vpack.c.b16 %v3198, %v3196
        %v3337 = vpack.c.b16 %v3201, %v3199
        %v3338 = vpack.c.b16 %v3202, %v3200
        %v3339 = vpack.c.b16 %v3205, %v3203
        %v3340 = vpack.c.b16 %v3206, %v3204
        %v3341 = vpack.c.b16 %v3209, %v3207
        %v3342 = vpack.c.b16 %v3210, %v3208
        %v3343 = vpack.c.b16 %v3213, %v3211
        %v3344 = vpack.c.b16 %v3214, %v3212
        %v3345 = vpack.c.b16 %v3217, %v3215
        %v3346 = vpack.c.b16 %v3218, %v3216
        %v3347 = vpack.c.b16 %v3221, %v3219
        %v3348 = vpack.c.b16 %v3222, %v3220
        %v3349 = vpack.c.b16 %v3225, %v3223
        %v3350 = vpack.c.b16 %v3226, %v3224
        %v3351 = vpack.c.b16 %v3229, %v3227
        %v3352 = vpack.c.b16 %v3230, %v3228
        %v3353 = vpack.c.b16 %v3233, %v3231
        %v3354 = vpack.c.b16 %v3234, %v3232
        %v3355 = vpack.c.b16 %v3237, %v3235
        %v3356 = vpack.c.b16 %v3238, %v3236
        %v3357 = vpack.c.b16 %v3241, %v3239
        %v3358 = vpack.c.b16 %v3242, %v3240
        %v3359 = vpack.c.b16 %v3245, %v3243
        %v3360 = vpack.c.b16 %v3246, %v3244
        %v3361 = vpack.c.b16 %v3249, %v3247
        %v3362 = vpack.c.b16 %v3250, %v3248
        %v3363 = vpack.c.b16 %v3253, %v3251
        %v3364 = vpack.c.b16 %v3254, %v3252
        %v3365 = vpack.c.b16 %v3257, %v3255
        %v3366 = vpack.c.b16 %v3258, %v3256
        %v3367 = vpack.c.b16 %v3261, %v3259
        %v3368 = vpack.c.b16 %v3262, %v3260
        %v3369 = vpack.c.b16 %v3265, %v3263
        %v3370 = vpack.c.b16 %v3266, %v3264
        %v3371 = vpack.c.b16 %v3269, %v3267
        %v3372 = vpack.c.b16 %v3270, %v3268
        %v3373 = vpack.c.b16 %v3273, %v3271
        %v3374 = vpack.c.b16 %v3274, %v3272
        %v3375 = vpack.c.b16 %v3277, %v3275
        %v3376 = vpack.c.b16 %v3278, %v3276
        %v3377 = vpack.c.b16 %v3281, %v3279
        %v3378 = vpack.c.b16 %v3282, %v3280
        %3475 = vmatprep.subr.bf16.mxu0 %v3284
        %3476 = vmatpush1.bf16.msra.mxu0 %v3283
        %3477 = vmatprep.subr.bf16.mxu0 %v3286
        %3478 = vmatpush1.bf16.msra.mxu0 %v3285
        %3479 = vmatprep.subr.bf16.mxu0 %v3288
        %3480 = vmatpush1.bf16.msra.mxu0 %v3287
        %3481 = vmatprep.subr.bf16.mxu0 %v3290
        %3482 = vmatpush1.bf16.msra.mxu0 %v3289
        %3483 = vmatprep.subr.bf16.mxu0 %v3292
        %3484 = vmatpush1.bf16.msra.mxu0 %v3291
        %3485 = vmatprep.subr.bf16.mxu0 %v3294
        %3486 = vmatpush1.bf16.msra.mxu0 %v3293
        %3487 = vmatprep.subr.bf16.mxu0 %v3296
        %3488 = vmatpush1.bf16.msra.mxu0 %v3295
        %3489 = vmatprep.subr.bf16.mxu0 %v3298
        %3490 = vmatpush1.bf16.msra.mxu0 %v3297
        %3491 = vmatprep.subr.bf16.mxu0 %v3300
        %3492 = vmatpush1.bf16.msra.mxu0 %v3299
        %3493 = vmatprep.subr.bf16.mxu0 %v3302
        %3494 = vmatpush1.bf16.msra.mxu0 %v3301
        %3495 = vmatprep.subr.bf16.mxu0 %v3304
        %3496 = vmatpush1.bf16.msra.mxu0 %v3303
        %3497 = vmatprep.subr.bf16.mxu0 %v3306
        %3498 = vmatpush1.bf16.msra.mxu0 %v3305
        %3499 = vmatprep.subr.bf16.mxu0 %v3308
        %3500 = vmatpush1.bf16.msra.mxu0 %v3307
        %3501 = vmatprep.subr.bf16.mxu0 %v3310
        %3502 = vmatpush1.bf16.msra.mxu0 %v3309
        %3503 = vmatprep.subr.bf16.mxu0 %v3312
        %3504 = vmatpush1.bf16.msra.mxu0 %v3311
        %3505 = vmatprep.subr.bf16.mxu0 %v3314
        %3506 = vmatpush1.bf16.msra.mxu0 %v3313
        %3507 = vmatprep.mubr.bf16.mxu0 %v2875
        %3508 = vmatmul.mubr.bf16.gmra.mrb[0].mxu0 %v2874
        %v3509 = vpop.f32.mrb[0].mxu0
        %v3510 = vadd.f32 %v2988, %v3509
        %v3511 = vpop.f32.mrb[0].mxu0
        %v3512 = vadd.f32 %v2992, %v3511
        %v3513 = vpop.f32.mrb[0].mxu0
        %v3514 = vadd.f32 %v2988, %v3513
        %v3515 = vpop.f32.mrb[0].mxu0
        %v3516 = vadd.f32 %v2992, %v3515
        %3517 = vmatprep.mubr.bf16.mxu0 %v2881
        %3518 = vmatmul.mubr.bf16.gmra.mrb[0].mxu0 %v2880
        %v3519 = vpop.f32.mrb[0].mxu0
        %v3520 = vadd.f32 %v2988, %v3519
        %v3521 = vpop.f32.mrb[0].mxu0
        %v3522 = vadd.f32 %v2992, %v3521
        %v3523 = vpop.f32.mrb[0].mxu0
        %v3524 = vadd.f32 %v2988, %v3523
        %v3525 = vpop.f32.mrb[0].mxu0
        %v3526 = vadd.f32 %v2992, %v3525
        %3527 = vdwg.mxu0
        %3528 = vmatprep.subr.bf16.mxu0 %v3316
        %3529 = vmatpush1.bf16.msra.mxu0 %v3315
        %3530 = vmatprep.subr.bf16.mxu0 %v3318
        %3531 = vmatpush1.bf16.msra.mxu0 %v3317
        %3532 = vmatprep.subr.bf16.mxu0 %v3320
        %3533 = vmatpush1.bf16.msra.mxu0 %v3319
        %3534 = vmatprep.subr.bf16.mxu0 %v3322
        %3535 = vmatpush1.bf16.msra.mxu0 %v3321
        %3536 = vmatprep.subr.bf16.mxu0 %v3324
        %3537 = vmatpush1.bf16.msra.mxu0 %v3323
        %3538 = vmatprep.subr.bf16.mxu0 %v3326
        %3539 = vmatpush1.bf16.msra.mxu0 %v3325
        %3540 = vmatprep.subr.bf16.mxu0 %v3328
        %3541 = vmatpush1.bf16.msra.mxu0 %v3327
        %3542 = vmatprep.subr.bf16.mxu0 %v3330
        %3543 = vmatpush1.bf16.msra.mxu0 %v3329
        %3544 = vmatprep.subr.bf16.mxu0 %v3332
        %3545 = vmatpush1.bf16.msra.mxu0 %v3331
        %3546 = vmatprep.subr.bf16.mxu0 %v3334
        %3547 = vmatpush1.bf16.msra.mxu0 %v3333
        %3548 = vmatprep.subr.bf16.mxu0 %v3336
        %3549 = vmatpush1.bf16.msra.mxu0 %v3335
        %3550 = vmatprep.subr.bf16.mxu0 %v3338
        %3551 = vmatpush1.bf16.msra.mxu0 %v3337
        %3552 = vmatprep.subr.bf16.mxu0 %v3340
        %3553 = vmatpush1.bf16.msra.mxu0 %v3339
        %3554 = vmatprep.subr.bf16.mxu0 %v3342
        %3555 = vmatpush1.bf16.msra.mxu0 %v3341
        %3556 = vmatprep.subr.bf16.mxu0 %v3344
        %3557 = vmatpush1.bf16.msra.mxu0 %v3343
        %3558 = vmatprep.subr.bf16.mxu0 %v3346
        %3559 = vmatpush1.bf16.msra.mxu0 %v3345
        %3560 = vmatprep.mubr.bf16.mxu0 %v2877
        %3561 = vmatmul.mubr.bf16.gmra.mrb[0].mxu0 %v2876
        %v3562 = vpop.f32.mrb[0].mxu0
        %v3563 = vadd.f32 %v3510, %v3562
        %v3564 = vpop.f32.mrb[0].mxu0
        %v3565 = vadd.f32 %v3512, %v3564
        %v3566 = vpop.f32.mrb[0].mxu0
        %v3567 = vadd.f32 %v3514, %v3566
        %v3568 = vpop.f32.mrb[0].mxu0
        %v3569 = vadd.f32 %v3516, %v3568
        %3570 = vmatprep.mubr.bf16.mxu0 %v2883
        %3571 = vmatmul.mubr.bf16.gmra.mrb[0].mxu0 %v2882
        %v3572 = vpop.f32.mrb[0].mxu0
        %v3573 = vadd.f32 %v3520, %v3572
        %v3574 = vpop.f32.mrb[0].mxu0
        %v3575 = vadd.f32 %v3522, %v3574
        %v3576 = vpop.f32.mrb[0].mxu0
        %v3577 = vadd.f32 %v3524, %v3576
        %v3578 = vpop.f32.mrb[0].mxu0
        %v3579 = vadd.f32 %v3526, %v3578
        %3580 = vdwg.mxu0
        %3581 = vmatprep.subr.bf16.mxu0 %v3348
        %3582 = vmatpush1.bf16.msra.mxu0 %v3347
        %3583 = vmatprep.subr.bf16.mxu0 %v3350
        %3584 = vmatpush1.bf16.msra.mxu0 %v3349
        %3585 = vmatprep.subr.bf16.mxu0 %v3352
        %3586 = vmatpush1.bf16.msra.mxu0 %v3351
        %3587 = vmatprep.subr.bf16.mxu0 %v3354
        %3588 = vmatpush1.bf16.msra.mxu0 %v3353
        %3589 = vmatprep.subr.bf16.mxu0 %v3356
        %3590 = vmatpush1.bf16.msra.mxu0 %v3355
        %3591 = vmatprep.subr.bf16.mxu0 %v3358
        %3592 = vmatpush1.bf16.msra.mxu0 %v3357
        %3593 = vmatprep.subr.bf16.mxu0 %v3360
        %3594 = vmatpush1.bf16.msra.mxu0 %v3359
        %3595 = vmatprep.subr.bf16.mxu0 %v3362
        %3596 = vmatpush1.bf16.msra.mxu0 %v3361
        %3597 = vmatprep.subr.bf16.mxu0 %v3364
        %3598 = vmatpush1.bf16.msra.mxu0 %v3363
        %3599 = vmatprep.subr.bf16.mxu0 %v3366
        %3600 = vmatpush1.bf16.msra.mxu0 %v3365
        %3601 = vmatprep.subr.bf16.mxu0 %v3368
        %3602 = vmatpush1.bf16.msra.mxu0 %v3367
        %3603 = vmatprep.subr.bf16.mxu0 %v3370
        %3604 = vmatpush1.bf16.msra.mxu0 %v3369
        %3605 = vmatprep.subr.bf16.mxu0 %v3372
        %3606 = vmatpush1.bf16.msra.mxu0 %v3371
        %3607 = vmatprep.subr.bf16.mxu0 %v3374
        %3608 = vmatpush1.bf16.msra.mxu0 %v3373
        %3609 = vmatprep.subr.bf16.mxu0 %v3376
        %3610 = vmatpush1.bf16.msra.mxu0 %v3375
        %3611 = vmatprep.subr.bf16.mxu0 %v3378
        %3612 = vmatpush1.bf16.msra.mxu0 %v3377
        %3613 = vmatprep.mubr.bf16.mxu0 %v2879
        %3614 = vmatmul.mubr.bf16.gmra.mrb[0].mxu0 %v2878
        %v3615 = vpop.f32.mrb[0].mxu0
        %v3616 = vadd.f32 %v3563, %v3615
        %v3617 = vpop.f32.mrb[0].mxu0
        %v3618 = vadd.f32 %v3565, %v3617
        %v3619 = vpop.f32.mrb[0].mxu0
        %v3620 = vadd.f32 %v3567, %v3619
        %v3621 = vpop.f32.mrb[0].mxu0
        %v3622 = vadd.f32 %v3569, %v3621
        %3623 = vmatprep.mubr.bf16.mxu0 %v2885
        %3624 = vmatmul.mubr.bf16.gmra.mrb[0].mxu0 %v2884
        %v3625 = vpop.f32.mrb[0].mxu0
        %v3626 = vadd.f32 %v3573, %v3625
        %v3627 = vpop.f32.mrb[0].mxu0
        %v3628 = vadd.f32 %v3575, %v3627
        %v3629 = vpop.f32.mrb[0].mxu0
        %v3630 = vadd.f32 %v3577, %v3629
        %v3631 = vpop.f32.mrb[0].mxu0
        %v3632 = vadd.f32 %v3579, %v3631
        %3633 = vdwg.mxu0
        %v3634 = vadd.f32 %v3616, %v3618
        %3635 = vadd.xlane.f32.xlu0 %v3634
        %v3636 = vpop.xlane.xlu0 %3635
        %v3637 = vadd.f32 %v3620, %v3622
        %3638 = vadd.xlane.f32.xlu0 %v3637
        %v3639 = vpop.xlane.xlu0 %3638
        %v3640 = vadd.f32 %v3626, %v3628
        %3641 = vadd.xlane.f32.xlu0 %v3640
        %v3642 = vpop.xlane.xlu0 %3641
        %v3643 = vadd.f32 %v3630, %v3632
        %3644 = vadd.xlane.f32.xlu0 %v3643
        %v3645 = vpop.xlane.xlu0 %3644
        %v3646 = vrcp.pop 256.0
        %v3647 = vmul.f32 %v3636, %v3646
        %v3648 = vmul.f32 %v3639, %v3646
        %v3649 = vmul.f32 %v3642, %v3646
        %v3650 = vmul.f32 %v3645, %v3646
        %v3651 = vsub.f32 %v3616, %v3647
        %v3652 = vsub.f32 %v3618, %v3647
        %v3653 = vsub.f32 %v3620, %v3648
        %v3654 = vsub.f32 %v3622, %v3648
        %v3655 = vsub.f32 %v3626, %v3649
        %v3656 = vsub.f32 %v3628, %v3649
        %v3657 = vsub.f32 %v3630, %v3650
        %v3658 = vsub.f32 %v3632, %v3650
        %v3659 = vmul.f32 %v3651, %v3651
        %v3660 = vmul.f32 %v3652, %v3652
        %v3661 = vmul.f32 %v3653, %v3653
        %v3662 = vmul.f32 %v3654, %v3654
        %v3663 = vmul.f32 %v3655, %v3655
        %v3664 = vmul.f32 %v3656, %v3656
        %v3665 = vmul.f32 %v3657, %v3657
        %v3666 = vmul.f32 %v3658, %v3658
        %v3667 = vadd.f32 %v3659, %v3660
        %3668 = vadd.xlane.f32.xlu0 %v3667
        %v3669 = vpop.xlane.xlu0 %3668
        %v3670 = vadd.f32 %v3661, %v3662
        %3671 = vadd.xlane.f32.xlu0 %v3670
        %v3672 = vpop.xlane.xlu0 %3671
        %v3673 = vadd.f32 %v3663, %v3664
        %3674 = vadd.xlane.f32.xlu0 %v3673
        %v3675 = vpop.xlane.xlu0 %3674
        %v3676 = vadd.f32 %v3665, %v3666
        %3677 = vadd.xlane.f32.xlu0 %v3676
        %v3678 = vpop.xlane.xlu0 %3677
        %v3679 = vmul.f32 %v3669, %v3646
        %v3680 = vmul.f32 %v3672, %v3646
        %v3681 = vmul.f32 %v3675, %v3646
        %v3682 = vmul.f32 %v3678, %v3646
        %v3683 = vadd.f32 %v3679, 1e-05
        %v3684 = vadd.f32 %v3680, 1e-05
        %v3685 = vadd.f32 %v3681, 1e-05
        %v3686 = vadd.f32 %v3682, 1e-05
        %v3687 = vrsqrt.pop %v3683
        %v3688 = vrsqrt.pop %v3684
        %v3689 = vrsqrt.pop %v3685
        %v3690 = vrsqrt.pop %v3686
        %v3691 = vmul.f32 %v3651, %v3687
        %v3692 = vmul.f32 %v3652, %v3687
        %v3693 = vmul.f32 %v3653, %v3688
        %v3694 = vmul.f32 %v3654, %v3688
        %v3695 = vmul.f32 %v3655, %v3689
        %v3696 = vmul.f32 %v3656, %v3689
        %v3697 = vmul.f32 %v3657, %v3690
        %v3698 = vmul.f32 %v3658, %v3690
        %s3699 = scalar_lea.vmem [#allocation7], 5
        %v3700 = vld [vmem:[%s3699] ss:$8 sm:$0x3]
        %v3702 = vlaneseq
        %v3703 = vshrl.u32 %v3702, 7
        %v3704 = vsub.s32 0, %v3703
        %v3705 = vrot.slane %v3700, %v3704
        %v3706 = vlaneseq
        %v3707 = vshrl.u32 %v3706, 7
        %v3708 = vsub.s32 1, %v3707
        %v3709 = vrot.slane %v3700, %v3708
        %v3712 = vmul.f32 %v3691, %v3705
        %v3713 = vmul.f32 %v3692, %v3709
        %v3714 = vmul.f32 %v3693, %v3705
        %v3715 = vmul.f32 %v3694, %v3709
        %v3716 = vmul.f32 %v3695, %v3705
        %v3717 = vmul.f32 %v3696, %v3709
        %v3718 = vmul.f32 %v3697, %v3705
        %v3719 = vmul.f32 %v3698, %v3709
        %s3720 = scalar_lea.vmem [#allocation7], 6
        %v3721 = vld [vmem:[%s3720] ss:$8 sm:$0x3]
        %v3723 = vlaneseq
        %v3724 = vshrl.u32 %v3723, 7
        %v3725 = vsub.s32 0, %v3724
        %v3726 = vrot.slane %v3721, %v3725
        %v3727 = vlaneseq
        %v3728 = vshrl.u32 %v3727, 7
        %v3729 = vsub.s32 1, %v3728
        %v3730 = vrot.slane %v3721, %v3729
        %v3733 = vadd.f32 %v3712, %v3726
        %v3734 = vadd.f32 %v3713, %v3730
        %v3735 = vadd.f32 %v3714, %v3726
        %v3736 = vadd.f32 %v3715, %v3730
        %v3737 = vadd.f32 %v3716, %v3726
        %v3738 = vadd.f32 %v3717, %v3730
        %v3739 = vadd.f32 %v3718, %v3726
        %v3740 = vadd.f32 %v3719, %v3730
        %v3741 = vmul.f32 %v3733, 0.5
        %v3742 = vmul.f32 %v3734, 0.5
        %v3743 = vmul.f32 %v3735, 0.5
        %v3744 = vmul.f32 %v3736, 0.5
        %v3745 = vmul.f32 %v3737, 0.5
        %v3746 = vmul.f32 %v3738, 0.5
        %v3747 = vmul.f32 %v3739, 0.5
        %v3748 = vmul.f32 %v3740, 0.5
        %v3749 = vmul.f32 %v3733, 0.044715
        %v3750 = vmul.f32 %v3734, 0.044715
        %v3751 = vmul.f32 %v3735, 0.044715
        %v3752 = vmul.f32 %v3736, 0.044715
        %v3753 = vmul.f32 %v3737, 0.044715
        %v3754 = vmul.f32 %v3738, 0.044715
        %v3755 = vmul.f32 %v3739, 0.044715
        %v3756 = vmul.f32 %v3740, 0.044715
        %v3757 = vmul.f32 %v3749, %v3733
        %v3758 = vmul.f32 %v3750, %v3734
        %v3759 = vmul.f32 %v3751, %v3735
        %v3760 = vmul.f32 %v3752, %v3736
        %v3761 = vmul.f32 %v3753, %v3737
        %v3762 = vmul.f32 %v3754, %v3738
        %v3763 = vmul.f32 %v3755, %v3739
        %v3764 = vmul.f32 %v3756, %v3740
        %v3765 = vmul.f32 %v3757, %v3733
        %v3766 = vmul.f32 %v3758, %v3734
        %v3767 = vmul.f32 %v3759, %v3735
        %v3768 = vmul.f32 %v3760, %v3736
        %v3769 = vmul.f32 %v3761, %v3737
        %v3770 = vmul.f32 %v3762, %v3738
        %v3771 = vmul.f32 %v3763, %v3739
        %v3772 = vmul.f32 %v3764, %v3740
        %v3773 = vadd.f32 %v3733, %v3765
        %v3774 = vadd.f32 %v3734, %v3766
        %v3775 = vadd.f32 %v3735, %v3767
        %v3776 = vadd.f32 %v3736, %v3768
        %v3777 = vadd.f32 %v3737, %v3769
        %v3778 = vadd.f32 %v3738, %v3770
        %v3779 = vadd.f32 %v3739, %v3771
        %v3780 = vadd.f32 %v3740, %v3772
        %v3781 = vmul.f32 %v3773, 0.7978846
        %v3782 = vmul.f32 %v3774, 0.7978846
        %v3783 = vmul.f32 %v3775, 0.7978846
        %v3784 = vmul.f32 %v3776, 0.7978846
        %v3785 = vmul.f32 %v3777, 0.7978846
        %v3786 = vmul.f32 %v3778, 0.7978846
        %v3787 = vmul.f32 %v3779, 0.7978846
        %v3788 = vmul.f32 %v3780, 0.7978846
        %v3789 = vtanh.pop %v3781
        %v3790 = vtanh.pop %v3782
        %v3791 = vtanh.pop %v3783
        %v3792 = vtanh.pop %v3784
        %v3793 = vtanh.pop %v3785
        %v3794 = vtanh.pop %v3786
        %v3795 = vtanh.pop %v3787
        %v3796 = vtanh.pop %v3788
        %v3797 = vadd.f32 %v3789, 1.0
        %v3798 = vadd.f32 %v3790, 1.0
        %v3799 = vadd.f32 %v3791, 1.0
        %v3800 = vadd.f32 %v3792, 1.0
        %v3801 = vadd.f32 %v3793, 1.0
        %v3802 = vadd.f32 %v3794, 1.0
        %v3803 = vadd.f32 %v3795, 1.0
        %v3804 = vadd.f32 %v3796, 1.0
        %v3805 = vmul.f32 %v3741, %v3797
        %v3806 = vmul.f32 %v3742, %v3798
        %v3807 = vmul.f32 %v3743, %v3799
        %v3808 = vmul.f32 %v3744, %v3800
        %v3809 = vmul.f32 %v3745, %v3801
        %v3810 = vmul.f32 %v3746, %v3802
        %v3811 = vmul.f32 %v3747, %v3803
        %v3812 = vmul.f32 %v3748, %v3804
        %v3813 = vld [vmem:[%s461] sm:$0xf]
        %v3814 = vld [vmem:[%s461 + $0x4] sm:$0xf]
        %v3815 = vld [vmem:[%s461 + $0x8] sm:$0xf]
        %v3816 = vld [vmem:[%s461 + $0xc] sm:$0xf]
        %v3817 = vld [vmem:[#allocation10] sm:$0xff]
        %v3818 = vld [vmem:[#allocation10 + $0x8] sm:$0xff]
        %v3819 = vld [vmem:[#allocation10 + $0x10] sm:$0xff]
        %v3820 = vld [vmem:[#allocation10 + $0x18] sm:$0xff]
        %v3821 = vld [vmem:[#allocation10 + $0x20] sm:$0xff]
        %v3822 = vld [vmem:[#allocation10 + $0x28] sm:$0xff]
        %v3823 = vld [vmem:[#allocation10 + $0x30] sm:$0xff]
        %v3824 = vld [vmem:[#allocation10 + $0x38] sm:$0xff]
        %s3825 = scalar_lea.vmem [#allocation7], 1
        %v3826 = vld [vmem:[%s3825] ss:$8 sm:$0x3]
        %v3828 = vlaneseq
        %v3829 = vshrl.u32 %v3828, 7
        %v3830 = vsub.s32 0, %v3829
        %v3831 = vrot.slane %v3826, %v3830
        %v3832 = vlaneseq
        %v3833 = vshrl.u32 %v3832, 7
        %v3834 = vsub.s32 1, %v3833
        %v3835 = vrot.slane %v3826, %v3834
        %v3842 = vunpack.c.l.b16 %v3813
        %v3843 = vunpack.c.l.b16 %v3814
        %v3844 = vunpack.c.l.b16 %v3815
        %v3845 = vunpack.c.l.b16 %v3816
        %v3846 = vpack.c.b16 %v3843, %v3842
        %v3847 = vpack.c.b16 %v3845, %v3844
        %v3856 = vunpack.c.l.b16 %v3817
        %v3857 = vunpack.c.h.b16 %v3817
        %v3858 = vunpack.c.l.b16 %v3818
        %v3859 = vunpack.c.h.b16 %v3818
        %v3860 = vunpack.c.l.b16 %v3819
        %v3861 = vunpack.c.h.b16 %v3819
        %v3862 = vunpack.c.l.b16 %v3820
        %v3863 = vunpack.c.h.b16 %v3820
        %v3864 = vunpack.c.l.b16 %v3821
        %v3865 = vunpack.c.h.b16 %v3821
        %v3866 = vunpack.c.l.b16 %v3822
        %v3867 = vunpack.c.h.b16 %v3822
        %v3868 = vunpack.c.l.b16 %v3823
        %v3869 = vunpack.c.h.b16 %v3823
        %v3870 = vunpack.c.l.b16 %v3824
        %v3871 = vunpack.c.h.b16 %v3824
        %v3872 = vpack.c.b16 %v3858, %v3856
        %v3873 = vpack.c.b16 %v3859, %v3857
        %v3874 = vpack.c.b16 %v3862, %v3860
        %v3875 = vpack.c.b16 %v3863, %v3861
        %v3876 = vpack.c.b16 %v3866, %v3864
        %v3877 = vpack.c.b16 %v3867, %v3865
        %v3878 = vpack.c.b16 %v3870, %v3868
        %v3879 = vpack.c.b16 %v3871, %v3869
        %vm3888 = vcmask 523264
        %v3890 = vsel %vm3888, %v3846, 0
        %v3893 = vsel %vm3888, %v3847, 0
        %3895 = vmatprep.subr.bf16.mxu0 %v3873
        %3896 = vmatpush1.bf16.msra.mxu0 %v3872
        %3897 = vmatprep.subr.bf16.mxu0 %v3875
        %3898 = vmatpush1.bf16.msra.mxu0 %v3874
        %3899 = vmatprep.subr.bf16.mxu0 %v3877
        %3900 = vmatpush1.bf16.msra.mxu0 %v3876
        %3901 = vmatprep.subr.bf16.mxu0 %v3879
        %3902 = vmatpush1.bf16.msra.mxu0 %v3878
        %3903 = vmatprep.subr.bf16.mxu0 0
        %3904 = vmatpush1.bf16.msra.mxu0 0
        %3905 = vmatprep.subr.bf16.mxu0 0
        %3906 = vmatpush1.bf16.msra.mxu0 0
        %3907 = vmatprep.subr.bf16.mxu0 0
        %3908 = vmatpush1.bf16.msra.mxu0 0
        %3909 = vmatprep.subr.bf16.mxu0 0
        %3910 = vmatpush1.bf16.msra.mxu0 0
        %3911 = vmatprep.subr.bf16.mxu0 0
        %3912 = vmatpush1.bf16.msra.mxu0 0
        %3913 = vmatprep.subr.bf16.mxu0 0
        %3914 = vmatpush1.bf16.msra.mxu0 0
        %3915 = vmatprep.subr.bf16.mxu0 0
        %3916 = vmatpush1.bf16.msra.mxu0 0
        %3917 = vmatprep.subr.bf16.mxu0 0
        %3918 = vmatpush1.bf16.msra.mxu0 0
        %3919 = vmatprep.subr.bf16.mxu0 0
        %3920 = vmatpush1.bf16.msra.mxu0 0
        %3921 = vmatprep.subr.bf16.mxu0 0
        %3922 = vmatpush1.bf16.msra.mxu0 0
        %3923 = vmatprep.subr.bf16.mxu0 0
        %3924 = vmatpush1.bf16.msra.mxu0 0
        %3925 = vmatprep.subr.bf16.mxu0 0
        %3926 = vmatpush1.bf16.msra.mxu0 0
        %3927 = vmatprep.mubr.bf16.mxu0 0
        %3928 = vmatmul.mubr.bf16.gmra.mrb[0].mxu0 %v3890
        %v3929 = vpop.f32.mrb[0].mxu0
        %v3930 = vadd.f32 %v3831, %v3929
        %v3931 = vpop.f32.mrb[0].mxu0
        %v3932 = vadd.f32 %v3835, %v3931
        %v3933 = vpop.f32.mrb[0].mxu0
        %v3934 = vadd.f32 %v3831, %v3933
        %v3935 = vpop.f32.mrb[0].mxu0
        %v3936 = vadd.f32 %v3835, %v3935
        %3937 = vmatprep.mubr.bf16.mxu0 0
        %3938 = vmatmul.mubr.bf16.gmra.mrb[0].mxu0 %v3893
        %v3939 = vpop.f32.mrb[0].mxu0
        %v3940 = vadd.f32 %v3831, %v3939
        %v3941 = vpop.f32.mrb[0].mxu0
        %v3942 = vadd.f32 %v3835, %v3941
        %v3943 = vpop.f32.mrb[0].mxu0
        %v3944 = vadd.f32 %v3831, %v3943
        %v3945 = vpop.f32.mrb[0].mxu0
        %v3946 = vadd.f32 %v3835, %v3945
        %3947 = vdwg.mxu0
        %v3948 = vadd.f32 %v3930, %v3932
        %3949 = vadd.xlane.f32.xlu0 %v3948
        %v3950 = vpop.xlane.xlu0 %3949
        %v3951 = vadd.f32 %v3934, %v3936
        %3952 = vadd.xlane.f32.xlu0 %v3951
        %v3953 = vpop.xlane.xlu0 %3952
        %v3954 = vadd.f32 %v3940, %v3942
        %3955 = vadd.xlane.f32.xlu0 %v3954
        %v3956 = vpop.xlane.xlu0 %3955
        %v3957 = vadd.f32 %v3944, %v3946
        %3958 = vadd.xlane.f32.xlu0 %v3957
        %v3959 = vpop.xlane.xlu0 %3958
        %v3960 = vmul.f32 %v3950, %v3646
        %v3961 = vmul.f32 %v3953, %v3646
        %v3962 = vmul.f32 %v3956, %v3646
        %v3963 = vmul.f32 %v3959, %v3646
        %v3964 = vsub.f32 %v3930, %v3960
        %v3965 = vsub.f32 %v3932, %v3960
        %v3966 = vsub.f32 %v3934, %v3961
        %v3967 = vsub.f32 %v3936, %v3961
        %v3968 = vsub.f32 %v3940, %v3962
        %v3969 = vsub.f32 %v3942, %v3962
        %v3970 = vsub.f32 %v3944, %v3963
        %v3971 = vsub.f32 %v3946, %v3963
        %v3972 = vmul.f32 %v3964, %v3964
        %v3973 = vmul.f32 %v3965, %v3965
        %v3974 = vmul.f32 %v3966, %v3966
        %v3975 = vmul.f32 %v3967, %v3967
        %v3976 = vmul.f32 %v3968, %v3968
        %v3977 = vmul.f32 %v3969, %v3969
        %v3978 = vmul.f32 %v3970, %v3970
        %v3979 = vmul.f32 %v3971, %v3971
        %v3980 = vadd.f32 %v3972, %v3973
        %3981 = vadd.xlane.f32.xlu0 %v3980
        %v3982 = vpop.xlane.xlu0 %3981
        %v3983 = vadd.f32 %v3974, %v3975
        %3984 = vadd.xlane.f32.xlu0 %v3983
        %v3985 = vpop.xlane.xlu0 %3984
        %v3986 = vadd.f32 %v3976, %v3977
        %3987 = vadd.xlane.f32.xlu0 %v3986
        %v3988 = vpop.xlane.xlu0 %3987
        %v3989 = vadd.f32 %v3978, %v3979
        %3990 = vadd.xlane.f32.xlu0 %v3989
        %v3991 = vpop.xlane.xlu0 %3990
        %v3992 = vmul.f32 %v3982, %v3646
        %v3993 = vmul.f32 %v3985, %v3646
        %v3994 = vmul.f32 %v3988, %v3646
        %v3995 = vmul.f32 %v3991, %v3646
        %v3996 = vadd.f32 %v3992, 1e-05
        %v3997 = vadd.f32 %v3993, 1e-05
        %v3998 = vadd.f32 %v3994, 1e-05
        %v3999 = vadd.f32 %v3995, 1e-05
        %v4000 = vrsqrt.pop %v3996
        %v4001 = vrsqrt.pop %v3997
        %v4002 = vrsqrt.pop %v3998
        %v4003 = vrsqrt.pop %v3999
        %v4004 = vmul.f32 %v3964, %v4000
        %v4005 = vmul.f32 %v3965, %v4000
        %v4006 = vmul.f32 %v3966, %v4001
        %v4007 = vmul.f32 %v3967, %v4001
        %v4008 = vmul.f32 %v3968, %v4002
        %v4009 = vmul.f32 %v3969, %v4002
        %v4010 = vmul.f32 %v3970, %v4003
        %v4011 = vmul.f32 %v3971, %v4003
        %s4012 = scalar_lea.vmem [#allocation7], 2
        %v4013 = vld [vmem:[%s4012] ss:$8 sm:$0x3]
        %v4015 = vlaneseq
        %v4016 = vshrl.u32 %v4015, 7
        %v4017 = vsub.s32 0, %v4016
        %v4018 = vrot.slane %v4013, %v4017
        %v4019 = vlaneseq
        %v4020 = vshrl.u32 %v4019, 7
        %v4021 = vsub.s32 1, %v4020
        %v4022 = vrot.slane %v4013, %v4021
        %v4025 = vmul.f32 %v4004, %v4018
        %v4026 = vmul.f32 %v4005, %v4022
        %v4027 = vmul.f32 %v4006, %v4018
        %v4028 = vmul.f32 %v4007, %v4022
        %v4029 = vmul.f32 %v4008, %v4018
        %v4030 = vmul.f32 %v4009, %v4022
        %v4031 = vmul.f32 %v4010, %v4018
        %v4032 = vmul.f32 %v4011, %v4022
        %s4033 = scalar_lea.vmem [#allocation7], 3
        %v4034 = vld [vmem:[%s4033] ss:$8 sm:$0x3]
        %v4036 = vlaneseq
        %v4037 = vshrl.u32 %v4036, 7
        %v4038 = vsub.s32 0, %v4037
        %v4039 = vrot.slane %v4034, %v4038
        %v4040 = vlaneseq
        %v4041 = vshrl.u32 %v4040, 7
        %v4042 = vsub.s32 1, %v4041
        %v4043 = vrot.slane %v4034, %v4042
        %v4046 = vadd.f32 %v4025, %v4039
        %v4047 = vadd.f32 %v4026, %v4043
        %v4048 = vadd.f32 %v4027, %v4039
        %v4049 = vadd.f32 %v4028, %v4043
        %v4050 = vadd.f32 %v4029, %v4039
        %v4051 = vadd.f32 %v4030, %v4043
        %v4052 = vadd.f32 %v4031, %v4039
        %v4053 = vadd.f32 %v4032, %v4043
        %v4054 = vmul.f32 %v4046, 0.5
        %v4055 = vmul.f32 %v4047, 0.5
        %v4056 = vmul.f32 %v4048, 0.5
        %v4057 = vmul.f32 %v4049, 0.5
        %v4058 = vmul.f32 %v4050, 0.5
        %v4059 = vmul.f32 %v4051, 0.5
        %v4060 = vmul.f32 %v4052, 0.5
        %v4061 = vmul.f32 %v4053, 0.5
        %v4062 = vmul.f32 %v4046, 0.044715
        %v4063 = vmul.f32 %v4047, 0.044715
        %v4064 = vmul.f32 %v4048, 0.044715
        %v4065 = vmul.f32 %v4049, 0.044715
        %v4066 = vmul.f32 %v4050, 0.044715
        %v4067 = vmul.f32 %v4051, 0.044715
        %v4068 = vmul.f32 %v4052, 0.044715
        %v4069 = vmul.f32 %v4053, 0.044715
        %v4070 = vmul.f32 %v4062, %v4046
        %v4071 = vmul.f32 %v4063, %v4047
        %v4072 = vmul.f32 %v4064, %v4048
        %v4073 = vmul.f32 %v4065, %v4049
        %v4074 = vmul.f32 %v4066, %v4050
        %v4075 = vmul.f32 %v4067, %v4051
        %v4076 = vmul.f32 %v4068, %v4052
        %v4077 = vmul.f32 %v4069, %v4053
        %v4078 = vmul.f32 %v4070, %v4046
        %v4079 = vmul.f32 %v4071, %v4047
        %v4080 = vmul.f32 %v4072, %v4048
        %v4081 = vmul.f32 %v4073, %v4049
        %v4082 = vmul.f32 %v4074, %v4050
        %v4083 = vmul.f32 %v4075, %v4051
        %v4084 = vmul.f32 %v4076, %v4052
        %v4085 = vmul.f32 %v4077, %v4053
        %v4086 = vadd.f32 %v4046, %v4078
        %v4087 = vadd.f32 %v4047, %v4079
        %v4088 = vadd.f32 %v4048, %v4080
        %v4089 = vadd.f32 %v4049, %v4081
        %v4090 = vadd.f32 %v4050, %v4082
        %v4091 = vadd.f32 %v4051, %v4083
        %v4092 = vadd.f32 %v4052, %v4084
        %v4093 = vadd.f32 %v4053, %v4085
        %v4094 = vmul.f32 %v4086, 0.7978846
        %v4095 = vmul.f32 %v4087, 0.7978846
        %v4096 = vmul.f32 %v4088, 0.7978846
        %v4097 = vmul.f32 %v4089, 0.7978846
        %v4098 = vmul.f32 %v4090, 0.7978846
        %v4099 = vmul.f32 %v4091, 0.7978846
        %v4100 = vmul.f32 %v4092, 0.7978846
        %v4101 = vmul.f32 %v4093, 0.7978846
        %v4102 = vtanh.pop %v4094
        %v4103 = vtanh.pop %v4095
        %v4104 = vtanh.pop %v4096
        %v4105 = vtanh.pop %v4097
        %v4106 = vtanh.pop %v4098
        %v4107 = vtanh.pop %v4099
        %v4108 = vtanh.pop %v4100
        %v4109 = vtanh.pop %v4101
        %v4110 = vadd.f32 %v4102, 1.0
        %v4111 = vadd.f32 %v4103, 1.0
        %v4112 = vadd.f32 %v4104, 1.0
        %v4113 = vadd.f32 %v4105, 1.0
        %v4114 = vadd.f32 %v4106, 1.0
        %v4115 = vadd.f32 %v4107, 1.0
        %v4116 = vadd.f32 %v4108, 1.0
        %v4117 = vadd.f32 %v4109, 1.0
        %v4118 = vmul.f32 %v4054, %v4110
        %v4119 = vmul.f32 %v4055, %v4111
        %v4120 = vmul.f32 %v4056, %v4112
        %v4121 = vmul.f32 %v4057, %v4113
        %v4122 = vmul.f32 %v4058, %v4114
        %v4123 = vmul.f32 %v4059, %v4115
        %v4124 = vmul.f32 %v4060, %v4116
        %v4125 = vmul.f32 %v4061, %v4117
        %v4126 = vpack.c.bf16 %v3807, %v3805
        %v4127 = vpack.c.bf16 %v3808, %v3806
        %v4128 = vpack.c.bf16 %v3811, %v3809
        %v4129 = vpack.c.bf16 %v3812, %v3810
        %v4130 = vld [vmem:[#allocation13] sm:$0xff]
        %v4131 = vld [vmem:[#allocation13 + $0x8] sm:$0xff]
        %v4132 = vld [vmem:[#allocation13 + $0x10] sm:$0xff]
        %v4133 = vld [vmem:[#allocation13 + $0x18] sm:$0xff]
        %v4134 = vld [vmem:[#allocation13 + $0x20] sm:$0xff]
        %v4135 = vld [vmem:[#allocation13 + $0x28] sm:$0xff]
        %v4136 = vld [vmem:[#allocation13 + $0x30] sm:$0xff]
        %v4137 = vld [vmem:[#allocation13 + $0x38] sm:$0xff]
        %v4138 = vld [vmem:[#allocation13 + $0x40] sm:$0xff]
        %v4139 = vld [vmem:[#allocation13 + $0x48] sm:$0xff]
        %v4140 = vld [vmem:[#allocation13 + $0x50] sm:$0xff]
        %v4141 = vld [vmem:[#allocation13 + $0x58] sm:$0xff]
        %v4142 = vld [vmem:[#allocation13 + $0x60] sm:$0xff]
        %v4143 = vld [vmem:[#allocation13 + $0x68] sm:$0xff]
        %v4144 = vld [vmem:[#allocation13 + $0x70] sm:$0xff]
        %v4145 = vld [vmem:[#allocation13 + $0x78] sm:$0xff]
        %v4146 = vld [vmem:[#allocation13 + $0x80] sm:$0xff]
        %v4147 = vld [vmem:[#allocation13 + $0x88] sm:$0xff]
        %v4148 = vld [vmem:[#allocation13 + $0x90] sm:$0xff]
        %v4149 = vld [vmem:[#allocation13 + $0x98] sm:$0xff]
        %v4150 = vld [vmem:[#allocation13 + $0xa0] sm:$0xff]
        %v4151 = vld [vmem:[#allocation13 + $0xa8] sm:$0xff]
        %v4152 = vld [vmem:[#allocation13 + $0xb0] sm:$0xff]
        %v4153 = vld [vmem:[#allocation13 + $0xb8] sm:$0xff]
        %v4154 = vld [vmem:[#allocation13 + $0xc0] sm:$0xff]
        %v4155 = vld [vmem:[#allocation13 + $0xc8] sm:$0xff]
        %v4156 = vld [vmem:[#allocation13 + $0xd0] sm:$0xff]
        %v4157 = vld [vmem:[#allocation13 + $0xd8] sm:$0xff]
        %v4158 = vld [vmem:[#allocation13 + $0xe0] sm:$0xff]
        %v4159 = vld [vmem:[#allocation13 + $0xe8] sm:$0xff]
        %v4160 = vld [vmem:[#allocation13 + $0xf0] sm:$0xff]
        %v4161 = vld [vmem:[#allocation13 + $0xf8] sm:$0xff]
        %v4162 = vpack.c.bf16 %v4120, %v4118
        %v4163 = vpack.c.bf16 %v4121, %v4119
        %v4164 = vpack.c.bf16 %v4124, %v4122
        %v4165 = vpack.c.bf16 %v4125, %v4123
        %v4166 = vld [vmem:[#allocation14] sm:$0xff]
        %v4167 = vld [vmem:[#allocation14 + $0x8] sm:$0xff]
        %v4168 = vld [vmem:[#allocation14 + $0x10] sm:$0xff]
        %v4169 = vld [vmem:[#allocation14 + $0x18] sm:$0xff]
        %v4170 = vld [vmem:[#allocation14 + $0x20] sm:$0xff]
        %v4171 = vld [vmem:[#allocation14 + $0x28] sm:$0xff]
        %v4172 = vld [vmem:[#allocation14 + $0x30] sm:$0xff]
        %v4173 = vld [vmem:[#allocation14 + $0x38] sm:$0xff]
        %v4174 = vld [vmem:[#allocation14 + $0x40] sm:$0xff]
        %v4175 = vld [vmem:[#allocation14 + $0x48] sm:$0xff]
        %v4176 = vld [vmem:[#allocation14 + $0x50] sm:$0xff]
        %v4177 = vld [vmem:[#allocation14 + $0x58] sm:$0xff]
        %v4178 = vld [vmem:[#allocation14 + $0x60] sm:$0xff]
        %v4179 = vld [vmem:[#allocation14 + $0x68] sm:$0xff]
        %v4180 = vld [vmem:[#allocation14 + $0x70] sm:$0xff]
        %v4181 = vld [vmem:[#allocation14 + $0x78] sm:$0xff]
        %v4182 = vld [vmem:[#allocation14 + $0x80] sm:$0xff]
        %v4183 = vld [vmem:[#allocation14 + $0x88] sm:$0xff]
        %v4184 = vld [vmem:[#allocation14 + $0x90] sm:$0xff]
        %v4185 = vld [vmem:[#allocation14 + $0x98] sm:$0xff]
        %v4186 = vld [vmem:[#allocation14 + $0xa0] sm:$0xff]
        %v4187 = vld [vmem:[#allocation14 + $0xa8] sm:$0xff]
        %v4188 = vld [vmem:[#allocation14 + $0xb0] sm:$0xff]
        %v4189 = vld [vmem:[#allocation14 + $0xb8] sm:$0xff]
        %v4190 = vld [vmem:[#allocation14 + $0xc0] sm:$0xff]
        %v4191 = vld [vmem:[#allocation14 + $0xc8] sm:$0xff]
        %v4192 = vld [vmem:[#allocation14 + $0xd0] sm:$0xff]
        %v4193 = vld [vmem:[#allocation14 + $0xd8] sm:$0xff]
        %v4194 = vld [vmem:[#allocation14 + $0xe0] sm:$0xff]
        %v4195 = vld [vmem:[#allocation14 + $0xe8] sm:$0xff]
        %v4196 = vld [vmem:[#allocation14 + $0xf0] sm:$0xff]
        %v4197 = vld [vmem:[#allocation14 + $0xf8] sm:$0xff]
        %v4230 = vunpack.c.l.b16 %v4166
        %v4231 = vunpack.c.h.b16 %v4166
        %v4232 = vunpack.c.l.b16 %v4167
        %v4233 = vunpack.c.h.b16 %v4167
        %v4234 = vunpack.c.l.b16 %v4168
        %v4235 = vunpack.c.h.b16 %v4168
        %v4236 = vunpack.c.l.b16 %v4169
        %v4237 = vunpack.c.h.b16 %v4169
        %v4238 = vunpack.c.l.b16 %v4170
        %v4239 = vunpack.c.h.b16 %v4170
        %v4240 = vunpack.c.l.b16 %v4171
        %v4241 = vunpack.c.h.b16 %v4171
        %v4242 = vunpack.c.l.b16 %v4172
        %v4243 = vunpack.c.h.b16 %v4172
        %v4244 = vunpack.c.l.b16 %v4173
        %v4245 = vunpack.c.h.b16 %v4173
        %v4246 = vunpack.c.l.b16 %v4174
        %v4247 = vunpack.c.h.b16 %v4174
        %v4248 = vunpack.c.l.b16 %v4175
        %v4249 = vunpack.c.h.b16 %v4175
        %v4250 = vunpack.c.l.b16 %v4176
        %v4251 = vunpack.c.h.b16 %v4176
        %v4252 = vunpack.c.l.b16 %v4177
        %v4253 = vunpack.c.h.b16 %v4177
        %v4254 = vunpack.c.l.b16 %v4178
        %v4255 = vunpack.c.h.b16 %v4178
        %v4256 = vunpack.c.l.b16 %v4179
        %v4257 = vunpack.c.h.b16 %v4179
        %v4258 = vunpack.c.l.b16 %v4180
        %v4259 = vunpack.c.h.b16 %v4180
        %v4260 = vunpack.c.l.b16 %v4181
        %v4261 = vunpack.c.h.b16 %v4181
        %v4262 = vunpack.c.l.b16 %v4182
        %v4263 = vunpack.c.h.b16 %v4182
        %v4264 = vunpack.c.l.b16 %v4183
        %v4265 = vunpack.c.h.b16 %v4183
        %v4266 = vunpack.c.l.b16 %v4184
        %v4267 = vunpack.c.h.b16 %v4184
        %v4268 = vunpack.c.l.b16 %v4185
        %v4269 = vunpack.c.h.b16 %v4185
        %v4270 = vunpack.c.l.b16 %v4186
        %v4271 = vunpack.c.h.b16 %v4186
        %v4272 = vunpack.c.l.b16 %v4187
        %v4273 = vunpack.c.h.b16 %v4187
        %v4274 = vunpack.c.l.b16 %v4188
        %v4275 = vunpack.c.h.b16 %v4188
        %v4276 = vunpack.c.l.b16 %v4189
        %v4277 = vunpack.c.h.b16 %v4189
        %v4278 = vunpack.c.l.b16 %v4190
        %v4279 = vunpack.c.h.b16 %v4190
        %v4280 = vunpack.c.l.b16 %v4191
        %v4281 = vunpack.c.h.b16 %v4191
        %v4282 = vunpack.c.l.b16 %v4192
        %v4283 = vunpack.c.h.b16 %v4192
        %v4284 = vunpack.c.l.b16 %v4193
        %v4285 = vunpack.c.h.b16 %v4193
        %v4286 = vunpack.c.l.b16 %v4194
        %v4287 = vunpack.c.h.b16 %v4194
        %v4288 = vunpack.c.l.b16 %v4195
        %v4289 = vunpack.c.h.b16 %v4195
        %v4290 = vunpack.c.l.b16 %v4196
        %v4291 = vunpack.c.h.b16 %v4196
        %v4292 = vunpack.c.l.b16 %v4197
        %v4293 = vunpack.c.h.b16 %v4197
        %v4294 = vpack.c.b16 %v4232, %v4230
        %v4295 = vpack.c.b16 %v4233, %v4231
        %v4296 = vpack.c.b16 %v4236, %v4234
        %v4297 = vpack.c.b16 %v4237, %v4235
        %v4298 = vpack.c.b16 %v4240, %v4238
        %v4299 = vpack.c.b16 %v4241, %v4239
        %v4300 = vpack.c.b16 %v4244, %v4242
        %v4301 = vpack.c.b16 %v4245, %v4243
        %v4302 = vpack.c.b16 %v4248, %v4246
        %v4303 = vpack.c.b16 %v4249, %v4247
        %v4304 = vpack.c.b16 %v4252, %v4250
        %v4305 = vpack.c.b16 %v4253, %v4251
        %v4306 = vpack.c.b16 %v4256, %v4254
        %v4307 = vpack.c.b16 %v4257, %v4255
        %v4308 = vpack.c.b16 %v4260, %v4258
        %v4309 = vpack.c.b16 %v4261, %v4259
        %v4310 = vpack.c.b16 %v4264, %v4262
        %v4311 = vpack.c.b16 %v4265, %v4263
        %v4312 = vpack.c.b16 %v4268, %v4266
        %v4313 = vpack.c.b16 %v4269, %v4267
        %v4314 = vpack.c.b16 %v4272, %v4270
        %v4315 = vpack.c.b16 %v4273, %v4271
        %v4316 = vpack.c.b16 %v4276, %v4274
        %v4317 = vpack.c.b16 %v4277, %v4275
        %v4318 = vpack.c.b16 %v4280, %v4278
        %v4319 = vpack.c.b16 %v4281, %v4279
        %v4320 = vpack.c.b16 %v4284, %v4282
        %v4321 = vpack.c.b16 %v4285, %v4283
        %v4322 = vpack.c.b16 %v4288, %v4286
        %v4323 = vpack.c.b16 %v4289, %v4287
        %v4324 = vpack.c.b16 %v4292, %v4290
        %v4325 = vpack.c.b16 %v4293, %v4291
        %4358 = vmatprep.subr.bf16.mxu0 %v4295
        %4359 = vmatpush1.bf16.msra.mxu0 %v4294
        %4360 = vmatprep.subr.bf16.mxu0 %v4297
        %4361 = vmatpush1.bf16.msra.mxu0 %v4296
        %4362 = vmatprep.subr.bf16.mxu0 %v4299
        %4363 = vmatpush1.bf16.msra.mxu0 %v4298
        %4364 = vmatprep.subr.bf16.mxu0 %v4301
        %4365 = vmatpush1.bf16.msra.mxu0 %v4300
        %4366 = vmatprep.subr.bf16.mxu0 %v4303
        %4367 = vmatpush1.bf16.msra.mxu0 %v4302
        %4368 = vmatprep.subr.bf16.mxu0 %v4305
        %4369 = vmatpush1.bf16.msra.mxu0 %v4304
        %4370 = vmatprep.subr.bf16.mxu0 %v4307
        %4371 = vmatpush1.bf16.msra.mxu0 %v4306
        %4372 = vmatprep.subr.bf16.mxu0 %v4309
        %4373 = vmatpush1.bf16.msra.mxu0 %v4308
        %4374 = vmatprep.subr.bf16.mxu0 %v4311
        %4375 = vmatpush1.bf16.msra.mxu0 %v4310
        %4376 = vmatprep.subr.bf16.mxu0 %v4313
        %4377 = vmatpush1.bf16.msra.mxu0 %v4312
        %4378 = vmatprep.subr.bf16.mxu0 %v4315
        %4379 = vmatpush1.bf16.msra.mxu0 %v4314
        %4380 = vmatprep.subr.bf16.mxu0 %v4317
        %4381 = vmatpush1.bf16.msra.mxu0 %v4316
        %4382 = vmatprep.subr.bf16.mxu0 %v4319
        %4383 = vmatpush1.bf16.msra.mxu0 %v4318
        %4384 = vmatprep.subr.bf16.mxu0 %v4321
        %4385 = vmatpush1.bf16.msra.mxu0 %v4320
        %4386 = vmatprep.subr.bf16.mxu0 %v4323
        %4387 = vmatpush1.bf16.msra.mxu0 %v4322
        %4388 = vmatprep.subr.bf16.mxu0 %v4325
        %4389 = vmatpush1.bf16.msra.mxu0 %v4324
        %4390 = vmatprep.mubr.bf16.mxu0 %v4163
        %4391 = vmatmul.mubr.bf16.gmra.mrb[0].mxu0 %v4162
        %v4392 = vpop.f32.mrb[0].mxu0
        %v4393 = vadd.f32 0.0, %v4392
        %v4394 = vpop.f32.mrb[0].mxu0
        %v4395 = vadd.f32 0.0, %v4394
        %v4396 = vpop.f32.mrb[0].mxu0
        %v4397 = vadd.f32 0.0, %v4396
        %v4398 = vpop.f32.mrb[0].mxu0
        %v4399 = vadd.f32 0.0, %v4398
        %4400 = vmatprep.mubr.bf16.mxu0 %v4165
        %4401 = vmatmul.mubr.bf16.gmra.mrb[0].mxu0 %v4164
        %v4402 = vpop.f32.mrb[0].mxu0
        %v4403 = vadd.f32 0.0, %v4402
        %v4404 = vpop.f32.mrb[0].mxu0
        %v4405 = vadd.f32 0.0, %v4404
        %v4406 = vpop.f32.mrb[0].mxu0
        %v4407 = vadd.f32 0.0, %v4406
        %v4408 = vpop.f32.mrb[0].mxu0
        %v4409 = vadd.f32 0.0, %v4408
        %4410 = vdwg.mxu0
        %v4443 = vunpack.c.l.b16 %v4130
        %v4444 = vunpack.c.h.b16 %v4130
        %v4445 = vunpack.c.l.b16 %v4131
        %v4446 = vunpack.c.h.b16 %v4131
        %v4447 = vunpack.c.l.b16 %v4132
        %v4448 = vunpack.c.h.b16 %v4132
        %v4449 = vunpack.c.l.b16 %v4133
        %v4450 = vunpack.c.h.b16 %v4133
        %v4451 = vunpack.c.l.b16 %v4134
        %v4452 = vunpack.c.h.b16 %v4134
        %v4453 = vunpack.c.l.b16 %v4135
        %v4454 = vunpack.c.h.b16 %v4135
        %v4455 = vunpack.c.l.b16 %v4136
        %v4456 = vunpack.c.h.b16 %v4136
        %v4457 = vunpack.c.l.b16 %v4137
        %v4458 = vunpack.c.h.b16 %v4137
        %v4459 = vunpack.c.l.b16 %v4138
        %v4460 = vunpack.c.h.b16 %v4138
        %v4461 = vunpack.c.l.b16 %v4139
        %v4462 = vunpack.c.h.b16 %v4139
        %v4463 = vunpack.c.l.b16 %v4140
        %v4464 = vunpack.c.h.b16 %v4140
        %v4465 = vunpack.c.l.b16 %v4141
        %v4466 = vunpack.c.h.b16 %v4141
        %v4467 = vunpack.c.l.b16 %v4142
        %v4468 = vunpack.c.h.b16 %v4142
        %v4469 = vunpack.c.l.b16 %v4143
        %v4470 = vunpack.c.h.b16 %v4143
        %v4471 = vunpack.c.l.b16 %v4144
        %v4472 = vunpack.c.h.b16 %v4144
        %v4473 = vunpack.c.l.b16 %v4145
        %v4474 = vunpack.c.h.b16 %v4145
        %v4475 = vunpack.c.l.b16 %v4146
        %v4476 = vunpack.c.h.b16 %v4146
        %v4477 = vunpack.c.l.b16 %v4147
        %v4478 = vunpack.c.h.b16 %v4147
        %v4479 = vunpack.c.l.b16 %v4148
        %v4480 = vunpack.c.h.b16 %v4148
        %v4481 = vunpack.c.l.b16 %v4149
        %v4482 = vunpack.c.h.b16 %v4149
        %v4483 = vunpack.c.l.b16 %v4150
        %v4484 = vunpack.c.h.b16 %v4150
        %v4485 = vunpack.c.l.b16 %v4151
        %v4486 = vunpack.c.h.b16 %v4151
        %v4487 = vunpack.c.l.b16 %v4152
        %v4488 = vunpack.c.h.b16 %v4152
        %v4489 = vunpack.c.l.b16 %v4153
        %v4490 = vunpack.c.h.b16 %v4153
        %v4491 = vunpack.c.l.b16 %v4154
        %v4492 = vunpack.c.h.b16 %v4154
        %v4493 = vunpack.c.l.b16 %v4155
        %v4494 = vunpack.c.h.b16 %v4155
        %v4495 = vunpack.c.l.b16 %v4156
        %v4496 = vunpack.c.h.b16 %v4156
        %v4497 = vunpack.c.l.b16 %v4157
        %v4498 = vunpack.c.h.b16 %v4157
        %v4499 = vunpack.c.l.b16 %v4158
        %v4500 = vunpack.c.h.b16 %v4158
        %v4501 = vunpack.c.l.b16 %v4159
        %v4502 = vunpack.c.h.b16 %v4159
        %v4503 = vunpack.c.l.b16 %v4160
        %v4504 = vunpack.c.h.b16 %v4160
        %v4505 = vunpack.c.l.b16 %v4161
        %v4506 = vunpack.c.h.b16 %v4161
        %v4507 = vpack.c.b16 %v4445, %v4443
        %v4508 = vpack.c.b16 %v4446, %v4444
        %v4509 = vpack.c.b16 %v4449, %v4447
        %v4510 = vpack.c.b16 %v4450, %v4448
        %v4511 = vpack.c.b16 %v4453, %v4451
        %v4512 = vpack.c.b16 %v4454, %v4452
        %v4513 = vpack.c.b16 %v4457, %v4455
        %v4514 = vpack.c.b16 %v4458, %v4456
        %v4515 = vpack.c.b16 %v4461, %v4459
        %v4516 = vpack.c.b16 %v4462, %v4460
        %v4517 = vpack.c.b16 %v4465, %v4463
        %v4518 = vpack.c.b16 %v4466, %v4464
        %v4519 = vpack.c.b16 %v4469, %v4467
        %v4520 = vpack.c.b16 %v4470, %v4468
        %v4521 = vpack.c.b16 %v4473, %v4471
        %v4522 = vpack.c.b16 %v4474, %v4472
        %v4523 = vpack.c.b16 %v4477, %v4475
        %v4524 = vpack.c.b16 %v4478, %v4476
        %v4525 = vpack.c.b16 %v4481, %v4479
        %v4526 = vpack.c.b16 %v4482, %v4480
        %v4527 = vpack.c.b16 %v4485, %v4483
        %v4528 = vpack.c.b16 %v4486, %v4484
        %v4529 = vpack.c.b16 %v4489, %v4487
        %v4530 = vpack.c.b16 %v4490, %v4488
        %v4531 = vpack.c.b16 %v4493, %v4491
        %v4532 = vpack.c.b16 %v4494, %v4492
        %v4533 = vpack.c.b16 %v4497, %v4495
        %v4534 = vpack.c.b16 %v4498, %v4496
        %v4535 = vpack.c.b16 %v4501, %v4499
        %v4536 = vpack.c.b16 %v4502, %v4500
        %v4537 = vpack.c.b16 %v4505, %v4503
        %v4538 = vpack.c.b16 %v4506, %v4504
        %4571 = vmatprep.subr.bf16.mxu0 %v4508
        %4572 = vmatpush1.bf16.msra.mxu0 %v4507
        %4573 = vmatprep.subr.bf16.mxu0 %v4510
        %4574 = vmatpush1.bf16.msra.mxu0 %v4509
        %4575 = vmatprep.subr.bf16.mxu0 %v4512
        %4576 = vmatpush1.bf16.msra.mxu0 %v4511
        %4577 = vmatprep.subr.bf16.mxu0 %v4514
        %4578 = vmatpush1.bf16.msra.mxu0 %v4513
        %4579 = vmatprep.subr.bf16.mxu0 %v4516
        %4580 = vmatpush1.bf16.msra.mxu0 %v4515
        %4581 = vmatprep.subr.bf16.mxu0 %v4518
        %4582 = vmatpush1.bf16.msra.mxu0 %v4517
        %4583 = vmatprep.subr.bf16.mxu0 %v4520
        %4584 = vmatpush1.bf16.msra.mxu0 %v4519
        %4585 = vmatprep.subr.bf16.mxu0 %v4522
        %4586 = vmatpush1.bf16.msra.mxu0 %v4521
        %4587 = vmatprep.subr.bf16.mxu0 %v4524
        %4588 = vmatpush1.bf16.msra.mxu0 %v4523
        %4589 = vmatprep.subr.bf16.mxu0 %v4526
        %4590 = vmatpush1.bf16.msra.mxu0 %v4525
        %4591 = vmatprep.subr.bf16.mxu0 %v4528
        %4592 = vmatpush1.bf16.msra.mxu0 %v4527
        %4593 = vmatprep.subr.bf16.mxu0 %v4530
        %4594 = vmatpush1.bf16.msra.mxu0 %v4529
        %4595 = vmatprep.subr.bf16.mxu0 %v4532
        %4596 = vmatpush1.bf16.msra.mxu0 %v4531
        %4597 = vmatprep.subr.bf16.mxu0 %v4534
        %4598 = vmatpush1.bf16.msra.mxu0 %v4533
        %4599 = vmatprep.subr.bf16.mxu0 %v4536
        %4600 = vmatpush1.bf16.msra.mxu0 %v4535
        %4601 = vmatprep.subr.bf16.mxu0 %v4538
        %4602 = vmatpush1.bf16.msra.mxu0 %v4537
        %4603 = vmatprep.mubr.bf16.mxu0 %v4127
        %4604 = vmatmul.mubr.bf16.gmra.mrb[0].mxu0 %v4126
        %v4605 = vpop.f32.mrb[0].mxu0
        %v4606 = vadd.f32 %v4393, %v4605
        %v4607 = vpop.f32.mrb[0].mxu0
        %v4608 = vadd.f32 %v4395, %v4607
        %v4609 = vpop.f32.mrb[0].mxu0
        %v4610 = vadd.f32 %v4397, %v4609
        %v4611 = vpop.f32.mrb[0].mxu0
        %v4612 = vadd.f32 %v4399, %v4611
        %4613 = vmatprep.mubr.bf16.mxu0 %v4129
        %4614 = vmatmul.mubr.bf16.gmra.mrb[0].mxu0 %v4128
        %v4615 = vpop.f32.mrb[0].mxu0
        %v4616 = vadd.f32 %v4403, %v4615
        %v4617 = vpop.f32.mrb[0].mxu0
        %v4618 = vadd.f32 %v4405, %v4617
        %v4619 = vpop.f32.mrb[0].mxu0
        %v4620 = vadd.f32 %v4407, %v4619
        %v4621 = vpop.f32.mrb[0].mxu0
        %v4622 = vadd.f32 %v4409, %v4621
        %4623 = vdwg.mxu0
        %s4624 = scalar_lea.vmem [#allocation7], 7
        %v4625 = vld [vmem:[%s4624] ss:$8 sm:$0x3]
        %v4627 = vlaneseq
        %v4628 = vshrl.u32 %v4627, 7
        %v4629 = vsub.s32 0, %v4628
        %v4630 = vrot.slane %v4625, %v4629
        %v4631 = vlaneseq
        %v4632 = vshrl.u32 %v4631, 7
        %v4633 = vsub.s32 1, %v4632
        %v4634 = vrot.slane %v4625, %v4633
        %v4637 = vadd.f32 %v4606, %v4630
        %v4638 = vadd.f32 %v4608, %v4634
        %v4639 = vadd.f32 %v4610, %v4630
        %v4640 = vadd.f32 %v4612, %v4634
        %v4641 = vadd.f32 %v4616, %v4630
        %v4642 = vadd.f32 %v4618, %v4634
        %v4643 = vadd.f32 %v4620, %v4630
        %v4644 = vadd.f32 %v4622, %v4634
        %v4645 = vadd.f32 %v4637, %v4638
        %4646 = vadd.xlane.f32.xlu0 %v4645
        %v4647 = vpop.xlane.xlu0 %4646
        %v4648 = vadd.f32 %v4639, %v4640
        %4649 = vadd.xlane.f32.xlu0 %v4648
        %v4650 = vpop.xlane.xlu0 %4649
        %v4651 = vadd.f32 %v4641, %v4642
        %4652 = vadd.xlane.f32.xlu0 %v4651
        %v4653 = vpop.xlane.xlu0 %4652
        %v4654 = vadd.f32 %v4643, %v4644
        %4655 = vadd.xlane.f32.xlu0 %v4654
        %v4656 = vpop.xlane.xlu0 %4655
        %v4657 = vmul.f32 %v4647, %v3646
        %v4658 = vmul.f32 %v4650, %v3646
        %v4659 = vmul.f32 %v4653, %v3646
        %v4660 = vmul.f32 %v4656, %v3646
        %v4661 = vsub.f32 %v4637, %v4657
        %v4662 = vsub.f32 %v4638, %v4657
        %v4663 = vsub.f32 %v4639, %v4658
        %v4664 = vsub.f32 %v4640, %v4658
        %v4665 = vsub.f32 %v4641, %v4659
        %v4666 = vsub.f32 %v4642, %v4659
        %v4667 = vsub.f32 %v4643, %v4660
        %v4668 = vsub.f32 %v4644, %v4660
        %v4669 = vmul.f32 %v4661, %v4661
        %v4670 = vmul.f32 %v4662, %v4662
        %v4671 = vmul.f32 %v4663, %v4663
        %v4672 = vmul.f32 %v4664, %v4664
        %v4673 = vmul.f32 %v4665, %v4665
        %v4674 = vmul.f32 %v4666, %v4666
        %v4675 = vmul.f32 %v4667, %v4667
        %v4676 = vmul.f32 %v4668, %v4668
        %v4677 = vadd.f32 %v4669, %v4670
        %4678 = vadd.xlane.f32.xlu0 %v4677
        %v4679 = vpop.xlane.xlu0 %4678
        %v4680 = vadd.f32 %v4671, %v4672
        %4681 = vadd.xlane.f32.xlu0 %v4680
        %v4682 = vpop.xlane.xlu0 %4681
        %v4683 = vadd.f32 %v4673, %v4674
        %4684 = vadd.xlane.f32.xlu0 %v4683
        %v4685 = vpop.xlane.xlu0 %4684
        %v4686 = vadd.f32 %v4675, %v4676
        %4687 = vadd.xlane.f32.xlu0 %v4686
        %v4688 = vpop.xlane.xlu0 %4687
        %v4689 = vmul.f32 %v4679, %v3646
        %v4690 = vmul.f32 %v4682, %v3646
        %v4691 = vmul.f32 %v4685, %v3646
        %v4692 = vmul.f32 %v4688, %v3646
        %v4693 = vadd.f32 %v4689, 1e-05
        %v4694 = vadd.f32 %v4690, 1e-05
        %v4695 = vadd.f32 %v4691, 1e-05
        %v4696 = vadd.f32 %v4692, 1e-05
        %v4697 = vrsqrt.pop %v4693
        %v4698 = vrsqrt.pop %v4694
        %v4699 = vrsqrt.pop %v4695
        %v4700 = vrsqrt.pop %v4696
        %v4701 = vmul.f32 %v4661, %v4697
        %v4702 = vmul.f32 %v4662, %v4697
        %v4703 = vmul.f32 %v4663, %v4698
        %v4704 = vmul.f32 %v4664, %v4698
        %v4705 = vmul.f32 %v4665, %v4699
        %v4706 = vmul.f32 %v4666, %v4699
        %v4707 = vmul.f32 %v4667, %v4700
        %v4708 = vmul.f32 %v4668, %v4700
        %s4709 = scalar_lea.vmem [#allocation7], 48
        %v4710 = vld [vmem:[%s4709] ss:$8 sm:$0x3]
        %v4712 = vlaneseq
        %v4713 = vshrl.u32 %v4712, 7
        %v4714 = vsub.s32 0, %v4713
        %v4715 = vrot.slane %v4710, %v4714
        %v4716 = vlaneseq
        %v4717 = vshrl.u32 %v4716, 7
        %v4718 = vsub.s32 1, %v4717
        %v4719 = vrot.slane %v4710, %v4718
        %v4722 = vmul.f32 %v4701, %v4715
        %v4723 = vmul.f32 %v4702, %v4719
        %v4724 = vmul.f32 %v4703, %v4715
        %v4725 = vmul.f32 %v4704, %v4719
        %v4726 = vmul.f32 %v4705, %v4715
        %v4727 = vmul.f32 %v4706, %v4719
        %v4728 = vmul.f32 %v4707, %v4715
        %v4729 = vmul.f32 %v4708, %v4719
        %s4730 = scalar_lea.vmem [#allocation7], 49
        %v4731 = vld [vmem:[%s4730] ss:$8 sm:$0x3]
        %v4733 = vlaneseq
        %v4734 = vshrl.u32 %v4733, 7
        %v4735 = vsub.s32 0, %v4734
        %v4736 = vrot.slane %v4731, %v4735
        %v4737 = vlaneseq
        %v4738 = vshrl.u32 %v4737, 7
        %v4739 = vsub.s32 1, %v4738
        %v4740 = vrot.slane %v4731, %v4739
        %v4743 = vadd.f32 %v4722, %v4736
        %v4744 = vadd.f32 %v4723, %v4740
        %v4745 = vadd.f32 %v4724, %v4736
        %v4746 = vadd.f32 %v4725, %v4740
        %v4747 = vadd.f32 %v4726, %v4736
        %v4748 = vadd.f32 %v4727, %v4740
        %v4749 = vadd.f32 %v4728, %v4736
        %v4750 = vadd.f32 %v4729, %v4740
        %v4751 = vmul.f32 %v4743, 0.5
        %v4752 = vmul.f32 %v4744, 0.5
        %v4753 = vmul.f32 %v4745, 0.5
        %v4754 = vmul.f32 %v4746, 0.5
        %v4755 = vmul.f32 %v4747, 0.5
        %v4756 = vmul.f32 %v4748, 0.5
        %v4757 = vmul.f32 %v4749, 0.5
        %v4758 = vmul.f32 %v4750, 0.5
        %v4759 = vmul.f32 %v4743, 0.044715
        %v4760 = vmul.f32 %v4744, 0.044715
        %v4761 = vmul.f32 %v4745, 0.044715
        %v4762 = vmul.f32 %v4746, 0.044715
        %v4763 = vmul.f32 %v4747, 0.044715
        %v4764 = vmul.f32 %v4748, 0.044715
        %v4765 = vmul.f32 %v4749, 0.044715
        %v4766 = vmul.f32 %v4750, 0.044715
        %v4767 = vmul.f32 %v4759, %v4743
        %v4768 = vmul.f32 %v4760, %v4744
        %v4769 = vmul.f32 %v4761, %v4745
        %v4770 = vmul.f32 %v4762, %v4746
        %v4771 = vmul.f32 %v4763, %v4747
        %v4772 = vmul.f32 %v4764, %v4748
        %v4773 = vmul.f32 %v4765, %v4749
        %v4774 = vmul.f32 %v4766, %v4750
        %v4775 = vmul.f32 %v4767, %v4743
        %v4776 = vmul.f32 %v4768, %v4744
        %v4777 = vmul.f32 %v4769, %v4745
        %v4778 = vmul.f32 %v4770, %v4746
        %v4779 = vmul.f32 %v4771, %v4747
        %v4780 = vmul.f32 %v4772, %v4748
        %v4781 = vmul.f32 %v4773, %v4749
        %v4782 = vmul.f32 %v4774, %v4750
        %v4783 = vadd.f32 %v4743, %v4775
        %v4784 = vadd.f32 %v4744, %v4776
        %v4785 = vadd.f32 %v4745, %v4777
        %v4786 = vadd.f32 %v4746, %v4778
        %v4787 = vadd.f32 %v4747, %v4779
        %v4788 = vadd.f32 %v4748, %v4780
        %v4789 = vadd.f32 %v4749, %v4781
        %v4790 = vadd.f32 %v4750, %v4782
        %v4791 = vmul.f32 %v4783, 0.7978846
        %v4792 = vmul.f32 %v4784, 0.7978846
        %v4793 = vmul.f32 %v4785, 0.7978846
        %v4794 = vmul.f32 %v4786, 0.7978846
        %v4795 = vmul.f32 %v4787, 0.7978846
        %v4796 = vmul.f32 %v4788, 0.7978846
        %v4797 = vmul.f32 %v4789, 0.7978846
        %v4798 = vmul.f32 %v4790, 0.7978846
        %v4799 = vtanh.pop %v4791
        %v4800 = vtanh.pop %v4792
        %v4801 = vtanh.pop %v4793
        %v4802 = vtanh.pop %v4794
        %v4803 = vtanh.pop %v4795
        %v4804 = vtanh.pop %v4796
        %v4805 = vtanh.pop %v4797
        %v4806 = vtanh.pop %v4798
        %v4807 = vadd.f32 %v4799, 1.0
        %v4808 = vadd.f32 %v4800, 1.0
        %v4809 = vadd.f32 %v4801, 1.0
        %v4810 = vadd.f32 %v4802, 1.0
        %v4811 = vadd.f32 %v4803, 1.0
        %v4812 = vadd.f32 %v4804, 1.0
        %v4813 = vadd.f32 %v4805, 1.0
        %v4814 = vadd.f32 %v4806, 1.0
        %v4815 = vmul.f32 %v4751, %v4807
        %v4816 = vmul.f32 %v4752, %v4808
        %v4817 = vmul.f32 %v4753, %v4809
        %v4818 = vmul.f32 %v4754, %v4810
        %v4819 = vmul.f32 %v4755, %v4811
        %v4820 = vmul.f32 %v4756, %v4812
        %v4821 = vmul.f32 %v4757, %v4813
        %v4822 = vmul.f32 %v4758, %v4814
        %v4823 = vpack.c.bf16 %v4817, %v4815
        %v4824 = vpack.c.bf16 %v4818, %v4816
        %v4825 = vpack.c.bf16 %v4821, %v4819
        %v4826 = vpack.c.bf16 %v4822, %v4820
        %v4827 = vld [vmem:[#allocation16] sm:$0xf]
        %v4828 = vld [vmem:[#allocation16 + $0x4] sm:$0xf]
        %v4829 = vld [vmem:[#allocation16 + $0x8] sm:$0xf]
        %v4830 = vld [vmem:[#allocation16 + $0xc] sm:$0xf]
        %v4831 = vld [vmem:[#allocation16 + $0x10] sm:$0xf]
        %v4832 = vld [vmem:[#allocation16 + $0x14] sm:$0xf]
        %v4833 = vld [vmem:[#allocation16 + $0x18] sm:$0xf]
        %v4834 = vld [vmem:[#allocation16 + $0x1c] sm:$0xf]
        %v4835 = vld [vmem:[#allocation16 + $0x20] sm:$0xf]
        %v4836 = vld [vmem:[#allocation16 + $0x24] sm:$0xf]
        %v4837 = vld [vmem:[#allocation16 + $0x28] sm:$0xf]
        %v4838 = vld [vmem:[#allocation16 + $0x2c] sm:$0xf]
        %v4839 = vld [vmem:[#allocation16 + $0x30] sm:$0xf]
        %v4840 = vld [vmem:[#allocation16 + $0x34] sm:$0xf]
        %v4841 = vld [vmem:[#allocation16 + $0x38] sm:$0xf]
        %v4842 = vld [vmem:[#allocation16 + $0x3c] sm:$0xf]
        %v4843 = vld [vmem:[#allocation16 + $0x40] sm:$0xf]
        %v4844 = vld [vmem:[#allocation16 + $0x44] sm:$0xf]
        %v4845 = vld [vmem:[#allocation16 + $0x48] sm:$0xf]
        %v4846 = vld [vmem:[#allocation16 + $0x4c] sm:$0xf]
        %v4847 = vld [vmem:[#allocation16 + $0x50] sm:$0xf]
        %v4848 = vld [vmem:[#allocation16 + $0x54] sm:$0xf]
        %v4849 = vld [vmem:[#allocation16 + $0x58] sm:$0xf]
        %v4850 = vld [vmem:[#allocation16 + $0x5c] sm:$0xf]
        %v4851 = vld [vmem:[#allocation16 + $0x60] sm:$0xf]
        %v4852 = vld [vmem:[#allocation16 + $0x64] sm:$0xf]
        %v4853 = vld [vmem:[#allocation16 + $0x68] sm:$0xf]
        %v4854 = vld [vmem:[#allocation16 + $0x6c] sm:$0xf]
        %v4855 = vld [vmem:[#allocation16 + $0x70] sm:$0xf]
        %v4856 = vld [vmem:[#allocation16 + $0x74] sm:$0xf]
        %v4857 = vld [vmem:[#allocation16 + $0x78] sm:$0xf]
        %v4858 = vld [vmem:[#allocation16 + $0x7c] sm:$0xf]
        %v4859 = vld [vmem:[#allocation7 + $0x32] ss:$0 sm:$0xff]
        %v4892 = vunpack.c.l.b16 %v4827
        %v4893 = vunpack.c.l.b16 %v4828
        %v4894 = vunpack.c.l.b16 %v4829
        %v4895 = vunpack.c.l.b16 %v4830
        %v4896 = vunpack.c.l.b16 %v4831
        %v4897 = vunpack.c.l.b16 %v4832
        %v4898 = vunpack.c.l.b16 %v4833
        %v4899 = vunpack.c.l.b16 %v4834
        %v4900 = vunpack.c.l.b16 %v4835
        %v4901 = vunpack.c.l.b16 %v4836
        %v4902 = vunpack.c.l.b16 %v4837
        %v4903 = vunpack.c.l.b16 %v4838
        %v4904 = vunpack.c.l.b16 %v4839
        %v4905 = vunpack.c.l.b16 %v4840
        %v4906 = vunpack.c.l.b16 %v4841
        %v4907 = vunpack.c.l.b16 %v4842
        %v4908 = vunpack.c.l.b16 %v4843
        %v4909 = vunpack.c.l.b16 %v4844
        %v4910 = vunpack.c.l.b16 %v4845
        %v4911 = vunpack.c.l.b16 %v4846
        %v4912 = vunpack.c.l.b16 %v4847
        %v4913 = vunpack.c.l.b16 %v4848
        %v4914 = vunpack.c.l.b16 %v4849
        %v4915 = vunpack.c.l.b16 %v4850
        %v4916 = vunpack.c.l.b16 %v4851
        %v4917 = vunpack.c.l.b16 %v4852
        %v4918 = vunpack.c.l.b16 %v4853
        %v4919 = vunpack.c.l.b16 %v4854
        %v4920 = vunpack.c.l.b16 %v4855
        %v4921 = vunpack.c.l.b16 %v4856
        %v4922 = vunpack.c.l.b16 %v4857
        %v4923 = vunpack.c.l.b16 %v4858
        %v4924 = vpack.c.b16 %v4893, %v4892
        %v4925 = vpack.c.b16 %v4895, %v4894
        %v4926 = vpack.c.b16 %v4897, %v4896
        %v4927 = vpack.c.b16 %v4899, %v4898
        %v4928 = vpack.c.b16 %v4901, %v4900
        %v4929 = vpack.c.b16 %v4903, %v4902
        %v4930 = vpack.c.b16 %v4905, %v4904
        %v4931 = vpack.c.b16 %v4907, %v4906
        %v4932 = vpack.c.b16 %v4909, %v4908
        %v4933 = vpack.c.b16 %v4911, %v4910
        %v4934 = vpack.c.b16 %v4913, %v4912
        %v4935 = vpack.c.b16 %v4915, %v4914
        %v4936 = vpack.c.b16 %v4917, %v4916
        %v4937 = vpack.c.b16 %v4919, %v4918
        %v4938 = vpack.c.b16 %v4921, %v4920
        %v4939 = vpack.c.b16 %v4923, %v4922
        %4956 = vmatprep.subr.bf16.mxu0 0
        %4957 = vmatpush1.bf16.msra.mxu0 %v4924
        %4958 = vmatprep.subr.bf16.mxu0 0
        %4959 = vmatpush1.bf16.msra.mxu0 %v4925
        %4960 = vmatprep.subr.bf16.mxu0 0
        %4961 = vmatpush1.bf16.msra.mxu0 %v4926
        %4962 = vmatprep.subr.bf16.mxu0 0
        %4963 = vmatpush1.bf16.msra.mxu0 %v4927
        %4964 = vmatprep.subr.bf16.mxu0 0
        %4965 = vmatpush1.bf16.msra.mxu0 %v4928
        %4966 = vmatprep.subr.bf16.mxu0 0
        %4967 = vmatpush1.bf16.msra.mxu0 %v4929
        %4968 = vmatprep.subr.bf16.mxu0 0
        %4969 = vmatpush1.bf16.msra.mxu0 %v4930
        %4970 = vmatprep.subr.bf16.mxu0 0
        %4971 = vmatpush1.bf16.msra.mxu0 %v4931
        %4972 = vmatprep.subr.bf16.mxu0 0
        %4973 = vmatpush1.bf16.msra.mxu0 %v4932
        %4974 = vmatprep.subr.bf16.mxu0 0
        %4975 = vmatpush1.bf16.msra.mxu0 %v4933
        %4976 = vmatprep.subr.bf16.mxu0 0
        %4977 = vmatpush1.bf16.msra.mxu0 %v4934
        %4978 = vmatprep.subr.bf16.mxu0 0
        %4979 = vmatpush1.bf16.msra.mxu0 %v4935
        %4980 = vmatprep.subr.bf16.mxu0 0
        %4981 = vmatpush1.bf16.msra.mxu0 %v4936
        %4982 = vmatprep.subr.bf16.mxu0 0
        %4983 = vmatpush1.bf16.msra.mxu0 %v4937
        %4984 = vmatprep.subr.bf16.mxu0 0
        %4985 = vmatpush1.bf16.msra.mxu0 %v4938
        %4986 = vmatprep.subr.bf16.mxu0 0
        %4987 = vmatpush1.bf16.msra.mxu0 %v4939
        %4988 = vmatprep.mubr.bf16.mxu0 %v4824
        %4989 = vmatmul.mubr.bf16.gmra.mrb[0].mxu0 %v4823
        %v4990 = vpop.f32.mrb[0].mxu0
        %v4991 = vadd.f32 %v4859, %v4990
        %v4992 = vpop.f32.mrb[0].mxu0
        %v4993 = vpop.f32.mrb[0].mxu0
        %v4994 = vadd.f32 %v4859, %v4993
        %v4995 = vpop.f32.mrb[0].mxu0
        %4996 = vmatprep.mubr.bf16.mxu0 %v4826
        %4997 = vmatmul.mubr.bf16.gmra.mrb[0].mxu0 %v4825
        %v4998 = vpop.f32.mrb[0].mxu0
        %v4999 = vadd.f32 %v4859, %v4998
        %v5000 = vpop.f32.mrb[0].mxu0
        %v5001 = vpop.f32.mrb[0].mxu0
        %v5002 = vadd.f32 %v4859, %v5001
        %v5003 = vpop.f32.mrb[0].mxu0
        %5004 = vdwg.mxu0
        %5005 = vadd.xlane.f32.xlu0 %v4991
        %v5006 = vpop.xlane.xlu0 %5005
        %5007 = vadd.xlane.f32.xlu0 %v4994
        %v5008 = vpop.xlane.xlu0 %5007
        %5009 = vadd.xlane.f32.xlu0 %v4999
        %v5010 = vpop.xlane.xlu0 %5009
        %5011 = vadd.xlane.f32.xlu0 %v5002
        %v5012 = vpop.xlane.xlu0 %5011
        %v5013 = vrcp.pop 128.0
        %v5014 = vmul.f32 %v5006, %v5013
        %v5015 = vmul.f32 %v5008, %v5013
        %v5016 = vmul.f32 %v5010, %v5013
        %v5017 = vmul.f32 %v5012, %v5013
        %v5018 = vsub.f32 %v4991, %v5014
        %v5019 = vsub.f32 %v4994, %v5015
        %v5020 = vsub.f32 %v4999, %v5016
        %v5021 = vsub.f32 %v5002, %v5017
        %v5022 = vmul.f32 %v5018, %v5018
        %v5023 = vmul.f32 %v5019, %v5019
        %v5024 = vmul.f32 %v5020, %v5020
        %v5025 = vmul.f32 %v5021, %v5021
        %5026 = vadd.xlane.f32.xlu0 %v5022
        %v5027 = vpop.xlane.xlu0 %5026
        %5028 = vadd.xlane.f32.xlu0 %v5023
        %v5029 = vpop.xlane.xlu0 %5028
        %5030 = vadd.xlane.f32.xlu0 %v5024
        %v5031 = vpop.xlane.xlu0 %5030
        %5032 = vadd.xlane.f32.xlu0 %v5025
        %v5033 = vpop.xlane.xlu0 %5032
        %v5034 = vmul.f32 %v5027, %v5013
        %v5035 = vmul.f32 %v5029, %v5013
        %v5036 = vmul.f32 %v5031, %v5013
        %v5037 = vmul.f32 %v5033, %v5013
        %v5038 = vadd.f32 %v5034, 1e-05
        %v5039 = vadd.f32 %v5035, 1e-05
        %v5040 = vadd.f32 %v5036, 1e-05
        %v5041 = vadd.f32 %v5037, 1e-05
        %v5042 = vrsqrt.pop %v5038
        %v5043 = vrsqrt.pop %v5039
        %v5044 = vrsqrt.pop %v5040
        %v5045 = vrsqrt.pop %v5041
        %v5046 = vmul.f32 %v5018, %v5042
        %v5047 = vmul.f32 %v5019, %v5043
        %v5048 = vmul.f32 %v5020, %v5044
        %v5049 = vmul.f32 %v5021, %v5045
        %v5050 = vld [vmem:[#allocation7 + $0x33] ss:$0 sm:$0xff]
        %v5051 = vmul.f32 %v5046, %v5050
        %v5052 = vmul.f32 %v5047, %v5050
        %v5053 = vmul.f32 %v5048, %v5050
        %v5054 = vmul.f32 %v5049, %v5050
        %v5055 = vld [vmem:[#allocation7 + $0x34] ss:$0 sm:$0xff]
        %v5056 = vadd.f32 %v5051, %v5055
        %v5057 = vadd.f32 %v5052, %v5055
        %v5058 = vadd.f32 %v5053, %v5055
        %v5059 = vadd.f32 %v5054, %v5055
        %v5060 = vmul.f32 %v5056, 0.5
        %v5061 = vmul.f32 %v5057, 0.5
        %v5062 = vmul.f32 %v5058, 0.5
        %v5063 = vmul.f32 %v5059, 0.5
        %v5064 = vmul.f32 %v5056, 0.044715
        %v5065 = vmul.f32 %v5057, 0.044715
        %v5066 = vmul.f32 %v5058, 0.044715
        %v5067 = vmul.f32 %v5059, 0.044715
        %v5068 = vmul.f32 %v5064, %v5056
        %v5069 = vmul.f32 %v5065, %v5057
        %v5070 = vmul.f32 %v5066, %v5058
        %v5071 = vmul.f32 %v5067, %v5059
        %v5072 = vmul.f32 %v5068, %v5056
        %v5073 = vmul.f32 %v5069, %v5057
        %v5074 = vmul.f32 %v5070, %v5058
        %v5075 = vmul.f32 %v5071, %v5059
        %v5076 = vadd.f32 %v5056, %v5072
        %v5077 = vadd.f32 %v5057, %v5073
        %v5078 = vadd.f32 %v5058, %v5074
        %v5079 = vadd.f32 %v5059, %v5075
        %v5080 = vmul.f32 %v5076, 0.7978846
        %v5081 = vmul.f32 %v5077, 0.7978846
        %v5082 = vmul.f32 %v5078, 0.7978846
        %v5083 = vmul.f32 %v5079, 0.7978846
        %v5084 = vtanh.pop %v5080
        %v5085 = vtanh.pop %v5081
        %v5086 = vtanh.pop %v5082
        %v5087 = vtanh.pop %v5083
        %v5088 = vadd.f32 %v5084, 1.0
        %v5089 = vadd.f32 %v5085, 1.0
        %v5090 = vadd.f32 %v5086, 1.0
        %v5091 = vadd.f32 %v5087, 1.0
        %v5092 = vmul.f32 %v5060, %v5088
        %v5093 = vmul.f32 %v5061, %v5089
        %v5094 = vmul.f32 %v5062, %v5090
        %v5095 = vmul.f32 %v5063, %v5091
        %v5096 = vpack.c.bf16 %v5093, %v5092
        %v5097 = vpack.c.bf16 %v5095, %v5094
        %v5098 = vld [vmem:[#allocation17] sm:$0xf]
        %v5099 = vld [vmem:[#allocation17 + $0x4] sm:$0xf]
        %v5100 = vld [vmem:[#allocation17 + $0x8] sm:$0xf]
        %v5101 = vld [vmem:[#allocation17 + $0xc] sm:$0xf]
        %v5102 = vld [vmem:[#allocation17 + $0x10] sm:$0xf]
        %v5103 = vld [vmem:[#allocation17 + $0x14] sm:$0xf]
        %v5104 = vld [vmem:[#allocation17 + $0x18] sm:$0xf]
        %v5105 = vld [vmem:[#allocation17 + $0x1c] sm:$0xf]
        %v5106 = vld [vmem:[#allocation17 + $0x20] sm:$0xf]
        %v5107 = vld [vmem:[#allocation17 + $0x24] sm:$0xf]
        %v5108 = vld [vmem:[#allocation17 + $0x28] sm:$0xf]
        %v5109 = vld [vmem:[#allocation17 + $0x2c] sm:$0xf]
        %v5110 = vld [vmem:[#allocation17 + $0x30] sm:$0xf]
        %v5111 = vld [vmem:[#allocation17 + $0x34] sm:$0xf]
        %v5112 = vld [vmem:[#allocation17 + $0x38] sm:$0xf]
        %v5113 = vld [vmem:[#allocation17 + $0x3c] sm:$0xf]
        %v5114 = vld [vmem:[#allocation7 + $0x35] ss:$0 sm:$0xff]
        %v5131 = vunpack.c.l.b16 %v5098
        %v5132 = vunpack.c.l.b16 %v5099
        %v5133 = vunpack.c.l.b16 %v5100
        %v5134 = vunpack.c.l.b16 %v5101
        %v5135 = vunpack.c.l.b16 %v5102
        %v5136 = vunpack.c.l.b16 %v5103
        %v5137 = vunpack.c.l.b16 %v5104
        %v5138 = vunpack.c.l.b16 %v5105
        %v5139 = vunpack.c.l.b16 %v5106
        %v5140 = vunpack.c.l.b16 %v5107
        %v5141 = vunpack.c.l.b16 %v5108
        %v5142 = vunpack.c.l.b16 %v5109
        %v5143 = vunpack.c.l.b16 %v5110
        %v5144 = vunpack.c.l.b16 %v5111
        %v5145 = vunpack.c.l.b16 %v5112
        %v5146 = vunpack.c.l.b16 %v5113
        %v5147 = vpack.c.b16 %v5132, %v5131
        %v5148 = vpack.c.b16 %v5134, %v5133
        %v5149 = vpack.c.b16 %v5136, %v5135
        %v5150 = vpack.c.b16 %v5138, %v5137
        %v5151 = vpack.c.b16 %v5140, %v5139
        %v5152 = vpack.c.b16 %v5142, %v5141
        %v5153 = vpack.c.b16 %v5144, %v5143
        %v5154 = vpack.c.b16 %v5146, %v5145
        %5163 = vmatprep.subr.bf16.mxu0 0
        %5164 = vmatpush1.bf16.msra.mxu0 %v5147
        %5165 = vmatprep.subr.bf16.mxu0 0
        %5166 = vmatpush1.bf16.msra.mxu0 %v5148
        %5167 = vmatprep.subr.bf16.mxu0 0
        %5168 = vmatpush1.bf16.msra.mxu0 %v5149
        %5169 = vmatprep.subr.bf16.mxu0 0
        %5170 = vmatpush1.bf16.msra.mxu0 %v5150
        %5171 = vmatprep.subr.bf16.mxu0 0
        %5172 = vmatpush1.bf16.msra.mxu0 %v5151
        %5173 = vmatprep.subr.bf16.mxu0 0
        %5174 = vmatpush1.bf16.msra.mxu0 %v5152
        %5175 = vmatprep.subr.bf16.mxu0 0
        %5176 = vmatpush1.bf16.msra.mxu0 %v5153
        %5177 = vmatprep.subr.bf16.mxu0 0
        %5178 = vmatpush1.bf16.msra.mxu0 %v5154
        %5179 = vmatprep.subr.bf16.mxu0 0
        %5180 = vmatpush1.bf16.msra.mxu0 0
        %5181 = vmatprep.subr.bf16.mxu0 0
        %5182 = vmatpush1.bf16.msra.mxu0 0
        %5183 = vmatprep.subr.bf16.mxu0 0
        %5184 = vmatpush1.bf16.msra.mxu0 0
        %5185 = vmatprep.subr.bf16.mxu0 0
        %5186 = vmatpush1.bf16.msra.mxu0 0
        %5187 = vmatprep.subr.bf16.mxu0 0
        %5188 = vmatpush1.bf16.msra.mxu0 0
        %5189 = vmatprep.subr.bf16.mxu0 0
        %5190 = vmatpush1.bf16.msra.mxu0 0
        %5191 = vmatprep.subr.bf16.mxu0 0
        %5192 = vmatpush1.bf16.msra.mxu0 0
        %5193 = vmatprep.subr.bf16.mxu0 0
        %5194 = vmatpush1.bf16.msra.mxu0 0
        %5195 = vmatprep.mubr.bf16.mxu0 0
        %5196 = vmatmul.mubr.bf16.gmra.mrb[0].mxu0 %v5096
        %v5197 = vpop.f32.mrb[0].mxu0
        %v5198 = vadd.f32 %v5114, %v5197
        %v5199 = vpop.f32.mrb[0].mxu0
        %v5200 = vpop.f32.mrb[0].mxu0
        %v5201 = vadd.f32 %v5114, %v5200
        %v5202 = vpop.f32.mrb[0].mxu0
        %5203 = vmatprep.mubr.bf16.mxu0 0
        %5204 = vmatmul.mubr.bf16.gmra.mrb[0].mxu0 %v5097
        %v5205 = vpop.f32.mrb[0].mxu0
        %v5206 = vadd.f32 %v5114, %v5205
        %v5207 = vpop.f32.mrb[0].mxu0
        %v5208 = vpop.f32.mrb[0].mxu0
        %v5209 = vadd.f32 %v5114, %v5208
        %v5210 = vpop.f32.mrb[0].mxu0
        %5211 = vdwg.mxu0
        %v5212 = vpack.c.bf16 %v5201, %v5198
        %v5213 = vpack.c.bf16 %v5209, %v5206
        %v5216 = vunpack.c.l.b16 %v5212
        %v5217 = vunpack.c.h.b16 %v5212
        %v5218 = vunpack.c.l.b16 %v5213
        %v5219 = vunpack.c.h.b16 %v5213
        %v5220 = vpack.c.b16 %v5216, %v5216
        %v5221 = vpack.c.b16 %v5217, %v5217
        %v5222 = vpack.c.b16 %v5218, %v5218
        %v5223 = vpack.c.b16 %v5219, %v5219
        %5228 = vst [vmem:[%s534] sm:$0xf] %v5220
        %5229 = vst [vmem:[%s534 + $0x4] sm:$0xf] %v5221
        %5230 = vst [vmem:[%s534 + $0x8] sm:$0xf] %v5222
        %5231 = vst [vmem:[%s534 + $0xc] sm:$0xf] %v5223
        %s5232 = sand.u32 %s262, 1
        %s5233 = scalar_lea.sflag [#allocation4], %s5232
        %s5234 = sand.u32 %s262, 1
        %s5235 = smul.addr %s5234, 16
        %s5236 = scalar_lea.vmem [#allocation19], %s5235
        // Predicated region
        $region101: #{tpu_custom_call.1} parent=59 // pred_check
          %p5237 = pneg %p272
        $region102: #{tpu_custom_call.1} parent=59 // pred_check_branch
          %5239 = sbr.rel (%p5237) target = $region104
        $region103: #{tpu_custom_call.1} parent=59 // pred_region
          %s5240 = smul.u32 4, %s34
          %s5242 = ssub.s32 256, 256
          %5243 = vsyncadd %s5233, %s5242
          %s5244 = smul.addr %s5240, 64
          %s5245 = scalar_lea.hbm %s10, %s5244
          %s5246 = sshll.u32 %s5236, 4
          %s5247 = int_to_ptr.vmem [resolvable:$true] %s5246
          %5252 = dma.vmem_to_hbm [thread:$0]  %s5247, 256, %s5245, %s5233, 64, 64, 4
        $region104: #{tpu_custom_call.1} parent=59 // pred_fallthru
          _
      $region60: #{tpu_custom_call.1} parent=5 // pred_fallthru
        _
      %p5253 = scmp.le.s32.totalorder 2, %s29
      // Predicated region
      $region105: #{tpu_custom_call.1} parent=5 // pred_check
        %p5254 = pneg %p5253
      $region106: #{tpu_custom_call.1} parent=5 // pred_check_branch
        %5256 = sbr.rel (%p5254) target = $region108
      $region107: #{tpu_custom_call.1} parent=5 // pred_region
        %s5257 = ssub.s32 %s29, 2
        // Predicated region
        $region109: #{tpu_custom_call.1} parent=107 // pred_check
          %p5258 = pneg %p278
        $region110: #{tpu_custom_call.1} parent=107 // pred_check_branch
          %5260 = sbr.rel (%p5258) target = $region112
        $region111: #{tpu_custom_call.1} parent=107 // pred_region
          %s5261 = sand.u32 %s263, 1
          %s5262 = scalar_lea.sflag [#allocation4], %s5261
          %s5263 = sand.u32 %s263, 1
          %s5264 = smul.addr %s5263, 16
          %s5265 = scalar_lea.vmem [#allocation19], %s5264
          %5266 = dma.done %s5262, 256
        $region112: #{tpu_custom_call.1} parent=107 // pred_fallthru
          _
      $region108: #{tpu_custom_call.1} parent=5 // pred_fallthru
        _
    $region6: #{tpu_custom_call.1} parent=1 // loop_footer
      %s33 = sadd.s32 1, %s29
    $region7: #{tpu_custom_call.1} parent=1 // loop_footer_branch
      %28 = sbr.rel target = $region3
    $region8: #{tpu_custom_call.1} parent=1 // loop_exit
      _
    %5267 = vsyncpa [#allocation3], 1
    %s5268 = scalar_lea.sflag [#allocation3], 1
    %5269 = vsyncpa %s5268, 1
    %5270 = vsyncpa [#allocation6], 1
    %s5271 = scalar_lea.sflag [#allocation6], 1
    %5272 = vsyncpa %s5271, 1
    %5273 = vsyncpa [#allocation9], 1
    %5274 = vsyncpa [#allocation12], 1
    %5275 = vsyncpa [#allocation15], 1
    %5276 = vsyncpa [#allocation18], 1
    %5277 = vsyncpa [#allocation4], 1
    %s5278 = scalar_lea.sflag [#allocation4], 1
    %5279 = vsyncpa %s5278, 1

</llo_original>
